<compile_context>
chip_gen: v7x
topology: tpu7x:2x2x1
jax: 0.10.0
libtpu: 0.0.40
codegen_flags: <defaults>
</compile_context>

<pallas_src>
import math

import jax
import jax.numpy as jnp
from jax.experimental import pallas as pl
from jax.experimental.pallas import tpu as pltpu


# ----------------------------- hardware policy --------------------------------
def _tpu_kind():
    try:
        dev = jax.devices()[0]
        return dev.device_kind.lower() if dev.platform == "tpu" else ""
    except Exception:
        return ""


def _hw_policy(kind):
    """Returns (num_tensorcores, matmul dtype, default max_tn, vmem limit)."""
    is_v7 = "7" in kind               # v7x: 2 TCs/chip, 64 MiB VMEM per TC
    is_v5 = "v5" in kind              # v5e: f32-only VPU/EUP -> keep f32 path
    num_tc = 2 if is_v7 else 1
    mm_dtype = jnp.float32 if (is_v5 or not kind) else jnp.bfloat16
    max_tn = 8192 if is_v7 else 16384
    vmem_limit = (48 << 20) if is_v7 else (80 << 20)
    return num_tc, mm_dtype, max_tn, vmem_limit


def _const_index_map(ndim):
    zeros = (0,) * ndim
    return lambda i: zeros


# --------------------------------- kernel -------------------------------------
def _build_kernel(n_hidden, hdim, mm_dtype, act_dtype):
    """Fused ModifiedMLP kernel, channels-first: every tensor is (C, TN)."""
    has_wh = n_hidden > 1

    def kernel(*refs):
        x_ref, gw_ref, gb_ref, w0_ref = refs[:4]
        i = 4
        wh_ref = None
        if has_wh:
            wh_ref = refs[i]
            i += 1
        bh_ref, wl_ref, bl_ref, o_ref = refs[i], refs[i + 1], refs[i + 2], refs[i + 3]

        # TODO(synk): `activation` is a constructor argument of the PyTorch
        # module; tanh (what the 2DRD PINN script uses) is hard-coded here.
        xm = x_ref[...].astype(mm_dtype)

        # Fused gates: one matmul + one tanh over the dense (2*hdim, TN) tile.
        z = (jnp.dot(gw_ref[...].astype(mm_dtype), xm,
                     preferred_element_type=jnp.float32) + gb_ref[...])
        g = jnp.tanh(z.astype(act_dtype))
        V = g[hdim:]
        UmV = g[:hdim] - V            # gate rewrite: h*U + (1-h)*V == V + h*(U-V)

        # First hidden layer (consumes x).
        z = (jnp.dot(w0_ref[...].astype(mm_dtype), xm,
                     preferred_element_type=jnp.float32) + bh_ref[0])
        h = jnp.tanh(z.astype(act_dtype))
        h = V + h * UmV

        # Remaining hidden layers (hdim -> hdim), weights statically indexed
        # out of the stacked constant tensor.
        for li in range(1, n_hidden):
            z = (jnp.dot(wh_ref[li - 1].astype(mm_dtype), h.astype(mm_dtype),
                         preferred_element_type=jnp.float32) + bh_ref[li])
            h = jnp.tanh(z.astype(act_dtype))
            h = V + h * UmV

        # Final linear (no activation, no gate).
        o_ref[...] = (jnp.dot(wl_ref[...].astype(mm_dtype), h.astype(mm_dtype),
                              preferred_element_type=jnp.float32)
                      + bl_ref[...]).astype(o_ref.dtype)

    return kernel


# -------------------------------- wrapper --------------------------------------
def modified_mlp_forward(params, x, *, max_tn=None, mm_dtype=None,
                         act_dtype=jnp.float32):
    """ModifiedMLP forward.  x: (N, d_in) -> (N, d_out)."""
    n, d_in = x.shape
    hdim = params["U1"].shape[1]
    ws, bs = params["W"], params["b"]
    n_hidden = len(ws) - 1
    d_out = ws[-1].shape[0]

    if n_hidden == 0:                  # degenerate: single linear, gates unused
        return x.astype(jnp.float32) @ ws[0].T + bs[0]

    # The module's gating (x * U) forces every hidden width to equal hdim.
    assert ws[0].shape == (hdim, d_in)
    assert all(w.shape == (hdim, hdim) for w in ws[1:-1])
    assert ws[-1].shape == (d_out, hdim)

    kind = _tpu_kind()
    num_tc, auto_mm, auto_tn, vmem_limit = _hw_policy(kind)
    if mm_dtype is None:
        mm_dtype = auto_mm
    if max_tn is None:
        max_tn = auto_tn

    # Grid: at least one block per TensorCore; on multi-TC chips round the
    # block count up to a multiple of num_tc so the cores get equal work.
    grid_n = max(pl.cdiv(n, max_tn), num_tc)
    if grid_n > num_tc:
        grid_n = pl.cdiv(grid_n, num_tc) * num_tc
    n_pad = pl.cdiv(n, grid_n * 128) * (grid_n * 128)   # lane-dense 128-multiple
    tn = n_pad // grid_n

    # Channels-first: points on lanes, features on sublanes.
    x_cf = jnp.pad(x.astype(jnp.float32).T, ((0, 0), (0, n_pad - n)))

    gate_w = jnp.concatenate([params["U1"].T, params["U2"].T], axis=0)   # (2h, d_in)
    gate_b = jnp.concatenate([params["b1"], params["b2"]]).reshape(2 * hdim, 1)
    bh = jnp.stack([b.reshape(hdim, 1) for b in bs[:-1]], axis=0)        # (nh, h, 1)

    args = [x_cf, gate_w, gate_b, ws[0]]
    if n_hidden > 1:
        args.append(jnp.stack(list(ws[1:-1]), axis=0))                   # (nh-1, h, h)
    args += [bh, ws[-1], bs[-1].reshape(d_out, 1)]

    in_specs = [pl.BlockSpec((d_in, tn), lambda i: (0, i))]
    for a in args[1:]:   # constant weights: whole array resident, fixed block idx
        in_specs.append(pl.BlockSpec(a.shape, _const_index_map(a.ndim)))

    out_cf = pl.pallas_call(
        _build_kernel(n_hidden, hdim, mm_dtype, act_dtype),
        out_shape=jax.ShapeDtypeStruct((d_out, n_pad), jnp.float32),
        grid=(grid_n,),
        in_specs=in_specs,
        out_specs=pl.BlockSpec((d_out, tn), lambda i: (0, i)),
        compiler_params=pltpu.CompilerParams(
            dimension_semantics=("parallel",),
            vmem_limit_bytes=vmem_limit),
    )(*args)
    return out_cf[:, :n].T


# ----------------------------- pure-JAX reference ------------------------------
def modified_mlp_reference(params, x):
    act = jnp.tanh
    U = act(x @ params["U1"] + params["b1"])
    V = act(x @ params["U2"] + params["b2"])
    h = x
    for w, b in zip(params["W"][:-1], params["b"][:-1]):
        h = act(h @ w.T + b)
        h = h * U + (1.0 - h) * V
    return h @ params["W"][-1].T + params["b"][-1]


# ------------------------------- parameter init --------------------------------
def init_params(key, layers):
    d_in, hdim = layers[0], layers[1]
    n_lin = len(layers) - 1
    ks = jax.random.split(key, 2 + n_lin)

    def xavier_normal(k, fan_in, fan_out, shape):
        std = math.sqrt(2.0 / (fan_in + fan_out))
        return std * jax.random.normal(k, shape, jnp.float32)

    p = {
        "U1": xavier_normal(ks[0], d_in, hdim, (d_in, hdim)),
        "b1": jnp.zeros((hdim,), jnp.float32),
        "U2": xavier_normal(ks[1], d_in, hdim, (d_in, hdim)),
        "b2": jnp.zeros((hdim,), jnp.float32),
        "W": [],
        "b": [],
    }
    for i in range(n_lin):
        cin, cout = layers[i], layers[i + 1]
        p["W"].append(xavier_normal(ks[2 + i], cin, cout, (cout, cin)))
        p["b"].append(jnp.zeros((cout,), jnp.float32))
    return p


# ----------------------------------- main ---------------------------------------
if __name__ == "__main__":
    key = jax.random.PRNGKey(0)
    kp, kx = jax.random.split(key)

    layers = (3, 64, 64, 64, 2)            # [in, hidden, hidden, hidden, out]
    params = init_params(kp, layers)
    x = jax.random.normal(kx, (1000, layers[0]), jnp.float32)

    run = jax.jit(modified_mlp_forward)
    out = run(params, x)
    jax.block_until_ready(out)

    ref = modified_mlp_reference(params, x)
    _, mm_dtype, _, _ = _hw_policy(_tpu_kind())
    tol = 2e-3 if mm_dtype == jnp.float32 else 1e-2   # bf16 MXU operands on v6e/v7x
    assert out.shape == (x.shape[0], layers[-1]), out.shape
    err = float(jnp.max(jnp.abs(out - ref)))
    assert bool(jnp.allclose(out, ref, atol=tol, rtol=tol)), err
    print("KERNEL_OK")
</pallas_src>

<mosaic_0001>
module attributes {stable_mosaic.version = 11 : i64} {
  func.func @kernel(%arg0: i32, %arg1: memref<3x1024xf32, #tpu.memory_space<vmem>>, %arg2: memref<128x3xf32, #tpu.memory_space<vmem>>, %arg3: memref<128x1xf32, #tpu.memory_space<vmem>>, %arg4: memref<64x3xf32, #tpu.memory_space<vmem>>, %arg5: memref<2x64x64xf32, #tpu.memory_space<vmem>>, %arg6: memref<3x64x1xf32, #tpu.memory_space<vmem>>, %arg7: memref<2x64xf32, #tpu.memory_space<vmem>>, %arg8: memref<2x1xf32, #tpu.memory_space<vmem>>, %arg9: memref<2x1024xf32, #tpu.memory_space<vmem>>) attributes {dimension_semantics = [#tpu.dimension_semantics<parallel>], iteration_bounds = array<i64: 1>, scalar_prefetch = 0 : i64, scratch_operands = 0 : i64, tpu.core_type = #tpu.core_type<tc>, window_params = [{transform_indices = @transform_0, window_bounds = array<i64: 3, 1024>}, {pipeline_mode = #tpu.pipeline_mode<synchronous>, transform_indices = @transform_1, window_bounds = array<i64: 128, 3>}, {pipeline_mode = #tpu.pipeline_mode<synchronous>, transform_indices = @transform_2, window_bounds = array<i64: 128, 1>}, {pipeline_mode = #tpu.pipeline_mode<synchronous>, transform_indices = @transform_3, window_bounds = array<i64: 64, 3>}, {pipeline_mode = #tpu.pipeline_mode<synchronous>, transform_indices = @transform_4, window_bounds = array<i64: 2, 64, 64>}, {pipeline_mode = #tpu.pipeline_mode<synchronous>, transform_indices = @transform_5, window_bounds = array<i64: 3, 64, 1>}, {pipeline_mode = #tpu.pipeline_mode<synchronous>, transform_indices = @transform_6, window_bounds = array<i64: 2, 64>}, {pipeline_mode = #tpu.pipeline_mode<synchronous>, transform_indices = @transform_7, window_bounds = array<i64: 2, 1>}, {transform_indices = @transform_8, window_bounds = array<i64: 2, 1024>}]} {
    %c0 = arith.constant 0 : index
    %c0_0 = arith.constant 0 : index
    %0 = vector.load %arg1[%c0, %c0_0] : memref<3x1024xf32, #tpu.memory_space<vmem>>, vector<3x1024xf32>
    %c0_1 = arith.constant 0 : index
    %c0_2 = arith.constant 0 : index
    %1 = vector.load %arg2[%c0_1, %c0_2] : memref<128x3xf32, #tpu.memory_space<vmem>>, vector<128x3xf32>
    %cst = arith.constant dense<0.000000e+00> : vector<128x1024xf32>
    %2 = tpu.matmul %1, %0, %cst {dimension_numbers = #tpu.dot_dimension_numbers<[1], [0], [0], [1], [0, 0, 1, 1], [], []>} : vector<128x3xf32>, vector<3x1024xf32>, vector<128x1024xf32> -> vector<128x1024xf32>
    %c0_3 = arith.constant 0 : index
    %c0_4 = arith.constant 0 : index
    %3 = vector.load %arg3[%c0_3, %c0_4] : memref<128x1xf32, #tpu.memory_space<vmem>>, vector<128x1xf32>
    %4 = vector.broadcast %3 : vector<128x1xf32> to vector<128x1024xf32>
    %5 = arith.addf %2, %4 : vector<128x1024xf32>
    %6 = math.tanh %5 : vector<128x1024xf32>
    %7 = vector.extract_strided_slice %6 {offsets = [64, 0], sizes = [64, 1024], strides = [1, 1]} : vector<128x1024xf32> to vector<64x1024xf32>
    %8 = vector.extract_strided_slice %6 {offsets = [0, 0], sizes = [64, 1024], strides = [1, 1]} : vector<128x1024xf32> to vector<64x1024xf32>
    %9 = arith.subf %8, %7 : vector<64x1024xf32>
    %c0_5 = arith.constant 0 : index
    %c0_6 = arith.constant 0 : index
    %10 = vector.load %arg4[%c0_5, %c0_6] : memref<64x3xf32, #tpu.memory_space<vmem>>, vector<64x3xf32>
    %cst_7 = arith.constant dense<0.000000e+00> : vector<64x1024xf32>
    %11 = tpu.matmul %10, %0, %cst_7 {dimension_numbers = #tpu.dot_dimension_numbers<[1], [0], [0], [1], [0, 0, 1, 1], [], []>} : vector<64x3xf32>, vector<3x1024xf32>, vector<64x1024xf32> -> vector<64x1024xf32>
    %c0_8 = arith.constant 0 : index
    %c0_9 = arith.constant 0 : index
    %c0_10 = arith.constant 0 : index
    %12 = vector.load %arg6[%c0_8, %c0_9, %c0_10] : memref<3x64x1xf32, #tpu.memory_space<vmem>>, vector<1x64x1xf32>
    %13 = vector.shape_cast %12 : vector<1x64x1xf32> to vector<64x1xf32>
    %14 = vector.broadcast %13 : vector<64x1xf32> to vector<64x1024xf32>
    %15 = arith.addf %11, %14 : vector<64x1024xf32>
    %16 = math.tanh %15 : vector<64x1024xf32>
    %17 = arith.mulf %16, %9 : vector<64x1024xf32>
    %18 = arith.addf %7, %17 : vector<64x1024xf32>
    %c0_11 = arith.constant 0 : index
    %c0_12 = arith.constant 0 : index
    %c0_13 = arith.constant 0 : index
    %19 = vector.load %arg5[%c0_11, %c0_12, %c0_13] : memref<2x64x64xf32, #tpu.memory_space<vmem>>, vector<1x64x64xf32>
    %20 = vector.shape_cast %19 : vector<1x64x64xf32> to vector<64x64xf32>
    %cst_14 = arith.constant dense<0.000000e+00> : vector<64x1024xf32>
    %21 = tpu.matmul %20, %18, %cst_14 {dimension_numbers = #tpu.dot_dimension_numbers<[1], [0], [0], [1], [0, 0, 1, 1], [], []>} : vector<64x64xf32>, vector<64x1024xf32>, vector<64x1024xf32> -> vector<64x1024xf32>
    %c1 = arith.constant 1 : index
    %c0_15 = arith.constant 0 : index
    %c0_16 = arith.constant 0 : index
    %22 = vector.load %arg6[%c1, %c0_15, %c0_16] : memref<3x64x1xf32, #tpu.memory_space<vmem>>, vector<1x64x1xf32>
    %23 = vector.shape_cast %22 : vector<1x64x1xf32> to vector<64x1xf32>
    %24 = vector.broadcast %23 : vector<64x1xf32> to vector<64x1024xf32>
    %25 = arith.addf %21, %24 : vector<64x1024xf32>
    %26 = math.tanh %25 : vector<64x1024xf32>
    %27 = arith.mulf %26, %9 : vector<64x1024xf32>
    %28 = arith.addf %7, %27 : vector<64x1024xf32>
    %c1_17 = arith.constant 1 : index
    %c0_18 = arith.constant 0 : index
    %c0_19 = arith.constant 0 : index
    %29 = vector.load %arg5[%c1_17, %c0_18, %c0_19] : memref<2x64x64xf32, #tpu.memory_space<vmem>>, vector<1x64x64xf32>
    %30 = vector.shape_cast %29 : vector<1x64x64xf32> to vector<64x64xf32>
    %cst_20 = arith.constant dense<0.000000e+00> : vector<64x1024xf32>
    %31 = tpu.matmul %30, %28, %cst_20 {dimension_numbers = #tpu.dot_dimension_numbers<[1], [0], [0], [1], [0, 0, 1, 1], [], []>} : vector<64x64xf32>, vector<64x1024xf32>, vector<64x1024xf32> -> vector<64x1024xf32>
    %c2 = arith.constant 2 : index
    %c0_21 = arith.constant 0 : index
    %c0_22 = arith.constant 0 : index
    %32 = vector.load %arg6[%c2, %c0_21, %c0_22] : memref<3x64x1xf32, #tpu.memory_space<vmem>>, vector<1x64x1xf32>
    %33 = vector.shape_cast %32 : vector<1x64x1xf32> to vector<64x1xf32>
    %34 = vector.broadcast %33 : vector<64x1xf32> to vector<64x1024xf32>
    %35 = arith.addf %31, %34 : vector<64x1024xf32>
    %36 = math.tanh %35 : vector<64x1024xf32>
    %37 = arith.mulf %36, %9 : vector<64x1024xf32>
    %38 = arith.addf %7, %37 : vector<64x1024xf32>
    %c0_23 = arith.constant 0 : index
    %c0_24 = arith.constant 0 : index
    %39 = vector.load %arg7[%c0_23, %c0_24] : memref<2x64xf32, #tpu.memory_space<vmem>>, vector<2x64xf32>
    %cst_25 = arith.constant dense<0.000000e+00> : vector<2x1024xf32>
    %40 = tpu.matmul %39, %38, %cst_25 {dimension_numbers = #tpu.dot_dimension_numbers<[1], [0], [0], [1], [0, 0, 1, 1], [], []>} : vector<2x64xf32>, vector<64x1024xf32>, vector<2x1024xf32> -> vector<2x1024xf32>
    %c0_26 = arith.constant 0 : index
    %c0_27 = arith.constant 0 : index
    %41 = vector.load %arg8[%c0_26, %c0_27] : memref<2x1xf32, #tpu.memory_space<vmem>>, vector<2x1xf32>
    %42 = vector.broadcast %41 : vector<2x1xf32> to vector<2x1024xf32>
    %43 = arith.addf %40, %42 : vector<2x1024xf32>
    %c0_28 = arith.constant 0 : index
    %c0_29 = arith.constant 0 : index
    %44 = vector.load %arg9[%c0_28, %c0_29] : memref<2x1024xf32, #tpu.memory_space<vmem>>, vector<2x1024xf32>
    tpu.vector_store %arg9[%c0_28, %c0_29], %43 {strides = array<i32>} : memref<2x1024xf32, #tpu.memory_space<vmem>>, vector<2x1024xf32>,
    return
  }
  func.func @transform_0(%arg0: i32) -> (i32, i32) {
    %c0_i32 = arith.constant 0 : i32
    %c0_i32_0 = arith.constant 0 : i32
    return %c0_i32, %arg0 : i32, i32
  }
  func.func @transform_1(%arg0: i32) -> (i32, i32) {
    %c0_i32 = arith.constant 0 : i32
    %c0_i32_0 = arith.constant 0 : i32
    %c0_i32_1 = arith.constant 0 : i32
    return %c0_i32, %c0_i32_0 : i32, i32
  }
  func.func @transform_2(%arg0: i32) -> (i32, i32) {
    %c0_i32 = arith.constant 0 : i32
    %c0_i32_0 = arith.constant 0 : i32
    %c0_i32_1 = arith.constant 0 : i32
    return %c0_i32, %c0_i32_0 : i32, i32
  }
  func.func @transform_3(%arg0: i32) -> (i32, i32) {
    %c0_i32 = arith.constant 0 : i32
    %c0_i32_0 = arith.constant 0 : i32
    %c0_i32_1 = arith.constant 0 : i32
    return %c0_i32, %c0_i32_0 : i32, i32
  }
  func.func @transform_4(%arg0: i32) -> (i32, i32, i32) {
    %c0_i32 = arith.constant 0 : i32
    %c0_i32_0 = arith.constant 0 : i32
    %c0_i32_1 = arith.constant 0 : i32
    %c0_i32_2 = arith.constant 0 : i32
    return %c0_i32, %c0_i32_0, %c0_i32_1 : i32, i32, i32
  }
  func.func @transform_5(%arg0: i32) -> (i32, i32, i32) {
    %c0_i32 = arith.constant 0 : i32
    %c0_i32_0 = arith.constant 0 : i32
    %c0_i32_1 = arith.constant 0 : i32
    %c0_i32_2 = arith.constant 0 : i32
    return %c0_i32, %c0_i32_0, %c0_i32_1 : i32, i32, i32
  }
  func.func @transform_6(%arg0: i32) -> (i32, i32) {
    %c0_i32 = arith.constant 0 : i32
    %c0_i32_0 = arith.constant 0 : i32
    %c0_i32_1 = arith.constant 0 : i32
    return %c0_i32, %c0_i32_0 : i32, i32
  }
  func.func @transform_7(%arg0: i32) -> (i32, i32) {
    %c0_i32 = arith.constant 0 : i32
    %c0_i32_0 = arith.constant 0 : i32
    %c0_i32_1 = arith.constant 0 : i32
    return %c0_i32, %c0_i32_0 : i32, i32
  }
  func.func @transform_8(%arg0: i32) -> (i32, i32) {
    %c0_i32 = arith.constant 0 : i32
    %c0_i32_0 = arith.constant 0 : i32
    return %c0_i32, %arg0 : i32, i32
  }
}

</mosaic_0001>

<llo_original>
// kernel: modified_mlp_forward.1
$region0: #{modified_mlp_forward.1}
  #allocation0 [shape = 'u32[]', space=smem, size = 0x4, offset = 0x4, fixed_abs, tag = 'smem constant byte address 0x4 - core index']
  #allocation1 [shape = 'u32[144,128]{1,0:T(1,128)}', space=vmem, size = 0x12000, scoped, tag = 'internal scratch']
  %s0 = inlined_call_operand.hbm [shape: f32[3,1024], index: 0, kind: input, shape index: {}]
  %s1 = inlined_call_operand.hbm [shape: f32[128,3], index: 1, kind: input, shape index: {}]
  %s2 = inlined_call_operand.hbm [shape: f32[128,1], index: 2, kind: input, shape index: {}]
  %s3 = inlined_call_operand.hbm [shape: f32[64,3], index: 3, kind: input, shape index: {}]
  %s4 = inlined_call_operand.hbm [shape: f32[2,64,64], index: 4, kind: input, shape index: {}]
  %s5 = inlined_call_operand.hbm [shape: f32[3,64,1], index: 5, kind: input, shape index: {}]
  %s6 = inlined_call_operand.hbm [shape: f32[2,64], index: 6, kind: input, shape index: {}]
  %s7 = inlined_call_operand.hbm [shape: f32[2,1], index: 7, kind: input, shape index: {}]
  %s8 = inlined_call_operand.hbm [shape: f32[2,1024], index: 8, kind: output, shape index: {}]
  %s9 = sld [smem:[#allocation0]]
  $region74: #{modified_mlp_forward.1} parent=0
    _
  %s11 = ssub.s32 1, %s9
  %s12 = scalar_select 0, %s11, %s9
  $region1: #{modified_mlp_forward.1} parent=0
    #allocation2 [shape = 'u8[16384]{0}', space=vmem, size = 0x4000, scoped, tag = 'input window, operand 0, single buffered']
    #allocation3 [shape = 's32[1]{0}', space=sflag, size = 0x4, scoped, tag = 'scoped memory for modified_mlp_forward.1']
    #allocation4 [shape = 's32[1]{0}', space=sflag, size = 0x4, scoped, tag = 'scoped memory for modified_mlp_forward.1']
    #allocation5 [shape = 'u8[65536]{0}', space=vmem, size = 0x10000, scoped, tag = 'input window, operand 1, single buffered']
    #allocation6 [shape = 's32[1]{0}', space=sflag, size = 0x4, scoped, tag = 'scoped memory for modified_mlp_forward.1']
    #allocation7 [shape = 'u8[65536]{0}', space=vmem, size = 0x10000, scoped, tag = 'input window, operand 2, single buffered']
    #allocation8 [shape = 'u8[32768]{0}', space=vmem, size = 0x8000, scoped, tag = 'input window, operand 3, single buffered']
    #allocation9 [shape = 's32[1]{0}', space=sflag, size = 0x4, scoped, tag = 'scoped memory for modified_mlp_forward.1']
    #allocation10 [shape = 'u8[65536]{0}', space=vmem, size = 0x10000, scoped, tag = 'input window, operand 4, single buffered']
    #allocation11 [shape = 'u8[98304]{0}', space=vmem, size = 0x18000, scoped, tag = 'input window, operand 5, single buffered']
    #allocation12 [shape = 's32[1]{0}', space=sflag, size = 0x4, scoped, tag = 'scoped memory for modified_mlp_forward.1']
    #allocation13 [shape = 'u8[1024]{0}', space=vmem, size = 0x400, scoped, tag = 'input window, operand 6, single buffered']
    #allocation14 [shape = 'u8[1024]{0}', space=vmem, size = 0x400, scoped, tag = 'input window, operand 7, single buffered']
    #allocation15 [shape = 's32[1]{0}', space=sflag, size = 0x4, scoped, tag = 'scoped memory for modified_mlp_forward.1']
    #allocation16 [shape = 'u8[8192]{0}', space=vmem, size = 0x2000, scoped, tag = 'output window, operand 0, single buffered']
    %13 = vsyncpa [#allocation3], 0
    %14 = vsyncpa [#allocation6], 0
    %15 = vsyncpa [#allocation9], 0
    %16 = vsyncpa [#allocation12], 0
    %17 = vsyncpa [#allocation15], 0
    %18 = vsyncpa [#allocation4], 0
    // Predicated region
    $region2: #{modified_mlp_forward.1} parent=1 // pred_check
      _
    $region3: #{modified_mlp_forward.1} parent=1 // pred_check_branch
      %20 = sbr.rel (0) target = $region5
    $region4: #{modified_mlp_forward.1} parent=1 // pred_region
      %s22 = ssub.s32 512, 512
      %23 = vsyncadd [#allocation3], %s22
      %s25 = sshll.u32 [#allocation2], 4
      %s26 = int_to_ptr.vmem [resolvable:$true] %s25
      %28 = dma.hbm_to_vmem [thread:$0]  %s0, 512, %s26, [#allocation3]
    $region5: #{modified_mlp_forward.1} parent=1 // pred_fallthru
      _
    // Predicated region
    $region6: #{modified_mlp_forward.1} parent=1 // pred_check
      _
    $region7: #{modified_mlp_forward.1} parent=1 // pred_check_branch
      %30 = sbr.rel (0) target = $region9
    $region8: #{modified_mlp_forward.1} parent=1 // pred_region
      %s32 = ssub.s32 2048, 2048
      %33 = vsyncadd [#allocation6], %s32
      %s34 = sshll.u32 [#allocation5], 4
      %s35 = int_to_ptr.vmem [resolvable:$true] %s34
      %40 = dma.hbm_to_vmem [thread:$0]  %s1, 2048, %s35, [#allocation6], 128, 128, 8
    $region9: #{modified_mlp_forward.1} parent=1 // pred_fallthru
      _
    // Predicated region
    $region10: #{modified_mlp_forward.1} parent=1 // pred_check
      _
    $region11: #{modified_mlp_forward.1} parent=1 // pred_check_branch
      %42 = sbr.rel (0) target = $region13
    $region12: #{modified_mlp_forward.1} parent=1 // pred_region
      %s44 = ssub.s32 2048, 2048
      %45 = vsyncadd [#allocation6], %s44
      %s46 = sshll.u32 [#allocation7], 4
      %s47 = int_to_ptr.vmem [resolvable:$true] %s46
      %52 = dma.hbm_to_vmem [thread:$0]  %s2, 2048, %s47, [#allocation6], 128, 128, 8
    $region13: #{modified_mlp_forward.1} parent=1 // pred_fallthru
      _
    // Predicated region
    $region14: #{modified_mlp_forward.1} parent=1 // pred_check
      _
    $region15: #{modified_mlp_forward.1} parent=1 // pred_check_branch
      %54 = sbr.rel (0) target = $region17
    $region16: #{modified_mlp_forward.1} parent=1 // pred_region
      %s56 = ssub.s32 1024, 1024
      %57 = vsyncadd [#allocation9], %s56
      %s58 = sshll.u32 [#allocation8], 4
      %s59 = int_to_ptr.vmem [resolvable:$true] %s58
      %64 = dma.hbm_to_vmem [thread:$0]  %s3, 1024, %s59, [#allocation9], 128, 128, 8
    $region17: #{modified_mlp_forward.1} parent=1 // pred_fallthru
      _
    // Predicated region
    $region18: #{modified_mlp_forward.1} parent=1 // pred_check
      _
    $region19: #{modified_mlp_forward.1} parent=1 // pred_check_branch
      %66 = sbr.rel (0) target = $region21
    $region20: #{modified_mlp_forward.1} parent=1 // pred_region
      %s68 = ssub.s32 2048, 2048
      %69 = vsyncadd [#allocation9], %s68
      %s70 = sshll.u32 [#allocation10], 4
      %s71 = int_to_ptr.vmem [resolvable:$true] %s70
      %76 = dma.hbm_to_vmem [thread:$0]  %s4, 2048, %s71, [#allocation9], 128, 128, 8
    $region21: #{modified_mlp_forward.1} parent=1 // pred_fallthru
      _
    // Predicated region
    $region22: #{modified_mlp_forward.1} parent=1 // pred_check
      _
    $region23: #{modified_mlp_forward.1} parent=1 // pred_check_branch
      %78 = sbr.rel (0) target = $region25
    $region24: #{modified_mlp_forward.1} parent=1 // pred_region
      %s80 = ssub.s32 3072, 3072
      %81 = vsyncadd [#allocation12], %s80
      %s82 = sshll.u32 [#allocation11], 4
      %s83 = int_to_ptr.vmem [resolvable:$true] %s82
      %88 = dma.hbm_to_vmem [thread:$0]  %s5, 3072, %s83, [#allocation12], 128, 128, 8
    $region25: #{modified_mlp_forward.1} parent=1 // pred_fallthru
      _
    // Predicated region
    $region26: #{modified_mlp_forward.1} parent=1 // pred_check
      _
    $region27: #{modified_mlp_forward.1} parent=1 // pred_check_branch
      %90 = sbr.rel (0) target = $region29
    $region28: #{modified_mlp_forward.1} parent=1 // pred_region
      %s92 = ssub.s32 32, 32
      %93 = vsyncadd [#allocation12], %s92
      %s95 = sshll.u32 [#allocation13], 4
      %s96 = int_to_ptr.vmem [resolvable:$true] %s95
      %98 = dma.hbm_to_vmem [thread:$0]  %s6, 32, %s96, [#allocation12]
    $region29: #{modified_mlp_forward.1} parent=1 // pred_fallthru
      _
    // Predicated region
    $region30: #{modified_mlp_forward.1} parent=1 // pred_check
      _
    $region31: #{modified_mlp_forward.1} parent=1 // pred_check_branch
      %100 = sbr.rel (0) target = $region33
    $region32: #{modified_mlp_forward.1} parent=1 // pred_region
      %s102 = ssub.s32 32, 32
      %103 = vsyncadd [#allocation15], %s102
      %s105 = sshll.u32 [#allocation14], 4
      %s106 = int_to_ptr.vmem [resolvable:$true] %s105
      %108 = dma.hbm_to_vmem [thread:$0]  %s7, 32, %s106, [#allocation15]
    $region33: #{modified_mlp_forward.1} parent=1 // pred_fallthru
      _
    // Predicated region
    $region34: #{modified_mlp_forward.1} parent=1 // pred_check
      _
    $region35: #{modified_mlp_forward.1} parent=1 // pred_check_branch
      %110 = sbr.rel (0) target = $region37
    $region36: #{modified_mlp_forward.1} parent=1 // pred_region
      %111 = dma.done [#allocation3], 512
    $region37: #{modified_mlp_forward.1} parent=1 // pred_fallthru
      _
    // Predicated region
    $region38: #{modified_mlp_forward.1} parent=1 // pred_check
      _
    $region39: #{modified_mlp_forward.1} parent=1 // pred_check_branch
      %113 = sbr.rel (0) target = $region41
    $region40: #{modified_mlp_forward.1} parent=1 // pred_region
      %114 = dma.done [#allocation6], 2048
    $region41: #{modified_mlp_forward.1} parent=1 // pred_fallthru
      _
    // Predicated region
    $region42: #{modified_mlp_forward.1} parent=1 // pred_check
      _
    $region43: #{modified_mlp_forward.1} parent=1 // pred_check_branch
      %116 = sbr.rel (0) target = $region45
    $region44: #{modified_mlp_forward.1} parent=1 // pred_region
      %117 = dma.done [#allocation6], 2048
    $region45: #{modified_mlp_forward.1} parent=1 // pred_fallthru
      _
    // Predicated region
    $region46: #{modified_mlp_forward.1} parent=1 // pred_check
      _
    $region47: #{modified_mlp_forward.1} parent=1 // pred_check_branch
      %119 = sbr.rel (0) target = $region49
    $region48: #{modified_mlp_forward.1} parent=1 // pred_region
      %120 = dma.done [#allocation9], 1024
    $region49: #{modified_mlp_forward.1} parent=1 // pred_fallthru
      _
    // Predicated region
    $region50: #{modified_mlp_forward.1} parent=1 // pred_check
      _
    $region51: #{modified_mlp_forward.1} parent=1 // pred_check_branch
      %122 = sbr.rel (0) target = $region53
    $region52: #{modified_mlp_forward.1} parent=1 // pred_region
      %123 = dma.done [#allocation9], 2048
    $region53: #{modified_mlp_forward.1} parent=1 // pred_fallthru
      _
    // Predicated region
    $region54: #{modified_mlp_forward.1} parent=1 // pred_check
      _
    $region55: #{modified_mlp_forward.1} parent=1 // pred_check_branch
      %125 = sbr.rel (0) target = $region57
    $region56: #{modified_mlp_forward.1} parent=1 // pred_region
      %126 = dma.done [#allocation12], 3072
    $region57: #{modified_mlp_forward.1} parent=1 // pred_fallthru
      _
    // Predicated region
    $region58: #{modified_mlp_forward.1} parent=1 // pred_check
      _
    $region59: #{modified_mlp_forward.1} parent=1 // pred_check_branch
      %128 = sbr.rel (0) target = $region61
    $region60: #{modified_mlp_forward.1} parent=1 // pred_region
      %129 = dma.done [#allocation12], 32
    $region61: #{modified_mlp_forward.1} parent=1 // pred_fallthru
      _
    // Predicated region
    $region62: #{modified_mlp_forward.1} parent=1 // pred_check
      _
    $region63: #{modified_mlp_forward.1} parent=1 // pred_check_branch
      %131 = sbr.rel (0) target = $region65
    $region64: #{modified_mlp_forward.1} parent=1 // pred_region
      %132 = dma.done [#allocation15], 32
    $region65: #{modified_mlp_forward.1} parent=1 // pred_fallthru
      _
    %v133 = vld [vmem:[#allocation2] sm:$0x77]
    %v134 = vld [vmem:[#allocation2 + $0x8] sm:$0x77]
    %v135 = vld [vmem:[#allocation2 + $0x10] sm:$0x77]
    %v136 = vld [vmem:[#allocation2 + $0x18] sm:$0x77]
    %v137 = vld [vmem:[#allocation5] sm:$0xff]
    %v138 = vld [vmem:[#allocation5 + $0x8] sm:$0xff]
    %v139 = vld [vmem:[#allocation5 + $0x10] sm:$0xff]
    %v140 = vld [vmem:[#allocation5 + $0x18] sm:$0xff]
    %v141 = vld [vmem:[#allocation5 + $0x20] sm:$0xff]
    %v142 = vld [vmem:[#allocation5 + $0x28] sm:$0xff]
    %v143 = vld [vmem:[#allocation5 + $0x30] sm:$0xff]
    %v144 = vld [vmem:[#allocation5 + $0x38] sm:$0xff]
    %v145 = vld [vmem:[#allocation5 + $0x40] sm:$0xff]
    %v146 = vld [vmem:[#allocation5 + $0x48] sm:$0xff]
    %v147 = vld [vmem:[#allocation5 + $0x50] sm:$0xff]
    %v148 = vld [vmem:[#allocation5 + $0x58] sm:$0xff]
    %v149 = vld [vmem:[#allocation5 + $0x60] sm:$0xff]
    %v150 = vld [vmem:[#allocation5 + $0x68] sm:$0xff]
    %v151 = vld [vmem:[#allocation5 + $0x70] sm:$0xff]
    %v152 = vld [vmem:[#allocation5 + $0x78] sm:$0xff]
    %v153 = vld [vmem:[#allocation7] sm:$0xff]
    %v154 = vld [vmem:[#allocation7 + $0x8] sm:$0xff]
    %v155 = vld [vmem:[#allocation7 + $0x10] sm:$0xff]
    %v156 = vld [vmem:[#allocation7 + $0x18] sm:$0xff]
    %v157 = vld [vmem:[#allocation7 + $0x20] sm:$0xff]
    %v158 = vld [vmem:[#allocation7 + $0x28] sm:$0xff]
    %v159 = vld [vmem:[#allocation7 + $0x30] sm:$0xff]
    %v160 = vld [vmem:[#allocation7 + $0x38] sm:$0xff]
    %v161 = vld [vmem:[#allocation7 + $0x40] sm:$0xff]
    %v162 = vld [vmem:[#allocation7 + $0x48] sm:$0xff]
    %v163 = vld [vmem:[#allocation7 + $0x50] sm:$0xff]
    %v164 = vld [vmem:[#allocation7 + $0x58] sm:$0xff]
    %v165 = vld [vmem:[#allocation7 + $0x60] sm:$0xff]
    %v166 = vld [vmem:[#allocation7 + $0x68] sm:$0xff]
    %v167 = vld [vmem:[#allocation7 + $0x70] sm:$0xff]
    %v168 = vld [vmem:[#allocation7 + $0x78] sm:$0xff]
    %170 = vset.pattern.permute.xlu0 0
    %171 = vperm.xlu0 %170, %v153
    %v172 = vpop.permute.xlu0 %171
    %175 = vset.pattern.permute.xlu0 0
    %176 = vperm.xlu0 %175, %v154
    %v177 = vpop.permute.xlu0 %176
    %180 = vset.pattern.permute.xlu0 0
    %181 = vperm.xlu0 %180, %v155
    %v182 = vpop.permute.xlu0 %181
    %185 = vset.pattern.permute.xlu0 0
    %186 = vperm.xlu0 %185, %v156
    %v187 = vpop.permute.xlu0 %186
    %190 = vset.pattern.permute.xlu0 0
    %191 = vperm.xlu0 %190, %v157
    %v192 = vpop.permute.xlu0 %191
    %195 = vset.pattern.permute.xlu0 0
    %196 = vperm.xlu0 %195, %v158
    %v197 = vpop.permute.xlu0 %196
    %200 = vset.pattern.permute.xlu0 0
    %201 = vperm.xlu0 %200, %v159
    %v202 = vpop.permute.xlu0 %201
    %205 = vset.pattern.permute.xlu0 0
    %206 = vperm.xlu0 %205, %v160
    %v207 = vpop.permute.xlu0 %206
    %210 = vset.pattern.permute.xlu0 0
    %211 = vperm.xlu0 %210, %v161
    %v212 = vpop.permute.xlu0 %211
    %215 = vset.pattern.permute.xlu0 0
    %216 = vperm.xlu0 %215, %v162
    %v217 = vpop.permute.xlu0 %216
    %220 = vset.pattern.permute.xlu0 0
    %221 = vperm.xlu0 %220, %v163
    %v222 = vpop.permute.xlu0 %221
    %225 = vset.pattern.permute.xlu0 0
    %226 = vperm.xlu0 %225, %v164
    %v227 = vpop.permute.xlu0 %226
    %230 = vset.pattern.permute.xlu0 0
    %231 = vperm.xlu0 %230, %v165
    %v232 = vpop.permute.xlu0 %231
    %235 = vset.pattern.permute.xlu0 0
    %236 = vperm.xlu0 %235, %v166
    %v237 = vpop.permute.xlu0 %236
    %240 = vset.pattern.permute.xlu0 0
    %241 = vperm.xlu0 %240, %v167
    %v242 = vpop.permute.xlu0 %241
    %245 = vset.pattern.permute.xlu0 0
    %246 = vperm.xlu0 %245, %v168
    %v247 = vpop.permute.xlu0 %246
    %v253 = vcombine.high %v133, %v133
    %v254 = vcombine.high %v134, %v134
    %v255 = vcombine.high %v135, %v135
    %v256 = vcombine.high %v136, %v136
    %vm257 = vcmask 23552
    %v259 = vsel %vm257, %v137, 0
    %v262 = vsel %vm257, %v138, 0
    %v265 = vsel %vm257, %v139, 0
    %v268 = vsel %vm257, %v140, 0
    %v271 = vsel %vm257, %v141, 0
    %v274 = vsel %vm257, %v142, 0
    %v277 = vsel %vm257, %v143, 0
    %v280 = vsel %vm257, %v144, 0
    %v283 = vsel %vm257, %v145, 0
    %v286 = vsel %vm257, %v146, 0
    %v289 = vsel %vm257, %v147, 0
    %v292 = vsel %vm257, %v148, 0
    %v295 = vsel %vm257, %v149, 0
    %v298 = vsel %vm257, %v150, 0
    %v301 = vsel %vm257, %v151, 0
    %v304 = vsel %vm257, %v152, 0
    %vm306 = vcmask 1042432
    %v307 = vsel %vm306, %v133, 0
    %v309 = vsel %vm306, %v253, 0
    %v311 = vsel %vm306, %v134, 0
    %v313 = vsel %vm306, %v254, 0
    %v315 = vsel %vm306, %v135, 0
    %v317 = vsel %vm306, %v255, 0
    %v319 = vsel %vm306, %v136, 0
    %v321 = vsel %vm306, %v256, 0
    %323 = vmatprep.subr.mxu0 %v309
    %324 = vmatpush1.msra.mxu0 %v307
    %325 = vmatprep.subr.mxu0 0.0
    %326 = vmatpush1.msra.mxu0 0.0
    %327 = vmatprep.subr.mxu0 0.0
    %328 = vmatpush1.msra.mxu0 0.0
    %329 = vmatprep.subr.mxu0 0.0
    %330 = vmatpush1.msra.mxu0 0.0
    %331 = vmatprep.subr.mxu0 0.0
    %332 = vmatpush1.msra.mxu0 0.0
    %333 = vmatprep.subr.mxu0 0.0
    %334 = vmatpush1.msra.mxu0 0.0
    %335 = vmatprep.subr.mxu0 0.0
    %336 = vmatpush1.msra.mxu0 0.0
    %337 = vmatprep.subr.mxu0 0.0
    %338 = vmatpush1.msra.mxu0 0.0
    %339 = vmatprep.subr.mxu0 0.0
    %340 = vmatpush1.msra.mxu0 0.0
    %341 = vmatprep.subr.mxu0 0.0
    %342 = vmatpush1.msra.mxu0 0.0
    %343 = vmatprep.subr.mxu0 0.0
    %344 = vmatpush1.msra.mxu0 0.0
    %345 = vmatprep.subr.mxu0 0.0
    %346 = vmatpush1.msra.mxu0 0.0
    %347 = vmatprep.subr.mxu0 0.0
    %348 = vmatpush1.msra.mxu0 0.0
    %349 = vmatprep.subr.mxu0 0.0
    %350 = vmatpush1.msra.mxu0 0.0
    %351 = vmatprep.subr.mxu0 0.0
    %352 = vmatpush1.msra.mxu0 0.0
    %353 = vmatprep.subr.mxu0 0.0
    %354 = vmatpush1.msra.mxu0 0.0
    %355 = vmatprep.subr.mxu0 0.0
    %356 = vmatpush1.msra.mxu0 0.0
    %357 = vmatprep.subr.mxu0 0.0
    %358 = vmatpush1.msra.mxu0 0.0
    %359 = vmatprep.subr.mxu0 0.0
    %360 = vmatpush1.msra.mxu0 0.0
    %361 = vmatprep.subr.mxu0 0.0
    %362 = vmatpush1.msra.mxu0 0.0
    %363 = vmatprep.subr.mxu0 0.0
    %364 = vmatpush1.msra.mxu0 0.0
    %365 = vmatprep.subr.mxu0 0.0
    %366 = vmatpush1.msra.mxu0 0.0
    %367 = vmatprep.subr.mxu0 0.0
    %368 = vmatpush1.msra.mxu0 0.0
    %369 = vmatprep.subr.mxu0 0.0
    %370 = vmatpush1.msra.mxu0 0.0
    %371 = vmatprep.subr.mxu0 0.0
    %372 = vmatpush1.msra.mxu0 0.0
    %373 = vmatprep.subr.mxu0 0.0
    %374 = vmatpush1.msra.mxu0 0.0
    %375 = vmatprep.subr.mxu0 0.0
    %376 = vmatpush1.msra.mxu0 0.0
    %377 = vmatprep.subr.mxu0 0.0
    %378 = vmatpush1.msra.mxu0 0.0
    %379 = vmatprep.subr.mxu0 0.0
    %380 = vmatpush1.msra.mxu0 0.0
    %381 = vmatprep.subr.mxu0 0.0
    %382 = vmatpush1.msra.mxu0 0.0
    %383 = vmatprep.subr.mxu0 0.0
    %384 = vmatpush1.msra.mxu0 0.0
    %385 = vmatprep.subr.mxu0 0.0
    %386 = vmatpush1.msra.mxu0 0.0
    %387 = vmatprep.mubr.f32.mxu0 0.0
    %388 = vmatmul.mubr.f32.gmra.mrb[0].mxu0 %v259
    %v389 = vpop.f32.mrb[0].mxu0
    %v390 = vadd.f32 %v172, %v389
    %v391 = vpop.f32.mrb[0].mxu0
    %v392 = vadd.f32 %v172, %v391
    %393 = vmatprep.mubr.f32.mxu0 0.0
    %394 = vmatmul.mubr.f32.gmra.mrb[0].mxu0 %v262
    %v395 = vpop.f32.mrb[0].mxu0
    %v396 = vadd.f32 %v177, %v395
    %v397 = vpop.f32.mrb[0].mxu0
    %v398 = vadd.f32 %v177, %v397
    %399 = vmatprep.mubr.f32.mxu0 0.0
    %400 = vmatmul.mubr.f32.gmra.mrb[0].mxu0 %v265
    %v401 = vpop.f32.mrb[0].mxu0
    %v402 = vadd.f32 %v182, %v401
    %v403 = vpop.f32.mrb[0].mxu0
    %v404 = vadd.f32 %v182, %v403
    %405 = vmatprep.mubr.f32.mxu0 0.0
    %406 = vmatmul.mubr.f32.gmra.mrb[0].mxu0 %v268
    %v407 = vpop.f32.mrb[0].mxu0
    %v408 = vadd.f32 %v187, %v407
    %v409 = vpop.f32.mrb[0].mxu0
    %v410 = vadd.f32 %v187, %v409
    %411 = vmatprep.mubr.f32.mxu0 0.0
    %412 = vmatmul.mubr.f32.gmra.mrb[0].mxu0 %v271
    %v413 = vpop.f32.mrb[0].mxu0
    %v414 = vadd.f32 %v192, %v413
    %v415 = vpop.f32.mrb[0].mxu0
    %v416 = vadd.f32 %v192, %v415
    %417 = vmatprep.mubr.f32.mxu0 0.0
    %418 = vmatmul.mubr.f32.gmra.mrb[0].mxu0 %v274
    %v419 = vpop.f32.mrb[0].mxu0
    %v420 = vadd.f32 %v197, %v419
    %v421 = vpop.f32.mrb[0].mxu0
    %v422 = vadd.f32 %v197, %v421
    %423 = vmatprep.mubr.f32.mxu0 0.0
    %424 = vmatmul.mubr.f32.gmra.mrb[0].mxu0 %v277
    %v425 = vpop.f32.mrb[0].mxu0
    %v426 = vadd.f32 %v202, %v425
    %v427 = vpop.f32.mrb[0].mxu0
    %v428 = vadd.f32 %v202, %v427
    %429 = vmatprep.mubr.f32.mxu0 0.0
    %430 = vmatmul.mubr.f32.gmra.mrb[0].mxu0 %v280
    %v431 = vpop.f32.mrb[0].mxu0
    %v432 = vadd.f32 %v207, %v431
    %v433 = vpop.f32.mrb[0].mxu0
    %v434 = vadd.f32 %v207, %v433
    %435 = vmatprep.mubr.f32.mxu0 0.0
    %436 = vmatmul.mubr.f32.gmra.mrb[0].mxu0 %v283
    %v437 = vpop.f32.mrb[0].mxu0
    %v438 = vadd.f32 %v212, %v437
    %v439 = vpop.f32.mrb[0].mxu0
    %v440 = vadd.f32 %v212, %v439
    %441 = vmatprep.mubr.f32.mxu0 0.0
    %442 = vmatmul.mubr.f32.gmra.mrb[0].mxu0 %v286
    %v443 = vpop.f32.mrb[0].mxu0
    %v444 = vadd.f32 %v217, %v443
    %v445 = vpop.f32.mrb[0].mxu0
    %v446 = vadd.f32 %v217, %v445
    %447 = vmatprep.mubr.f32.mxu0 0.0
    %448 = vmatmul.mubr.f32.gmra.mrb[0].mxu0 %v289
    %v449 = vpop.f32.mrb[0].mxu0
    %v450 = vadd.f32 %v222, %v449
    %v451 = vpop.f32.mrb[0].mxu0
    %v452 = vadd.f32 %v222, %v451
    %453 = vmatprep.mubr.f32.mxu0 0.0
    %454 = vmatmul.mubr.f32.gmra.mrb[0].mxu0 %v292
    %v455 = vpop.f32.mrb[0].mxu0
    %v456 = vadd.f32 %v227, %v455
    %v457 = vpop.f32.mrb[0].mxu0
    %v458 = vadd.f32 %v227, %v457
    %459 = vmatprep.mubr.f32.mxu0 0.0
    %460 = vmatmul.mubr.f32.gmra.mrb[0].mxu0 %v295
    %v461 = vpop.f32.mrb[0].mxu0
    %v462 = vadd.f32 %v232, %v461
    %v463 = vpop.f32.mrb[0].mxu0
    %v464 = vadd.f32 %v232, %v463
    %465 = vmatprep.mubr.f32.mxu0 0.0
    %466 = vmatmul.mubr.f32.gmra.mrb[0].mxu0 %v298
    %v467 = vpop.f32.mrb[0].mxu0
    %v468 = vadd.f32 %v237, %v467
    %v469 = vpop.f32.mrb[0].mxu0
    %v470 = vadd.f32 %v237, %v469
    %471 = vmatprep.mubr.f32.mxu0 0.0
    %472 = vmatmul.mubr.f32.gmra.mrb[0].mxu0 %v301
    %v473 = vpop.f32.mrb[0].mxu0
    %v474 = vadd.f32 %v242, %v473
    %v475 = vpop.f32.mrb[0].mxu0
    %v476 = vadd.f32 %v242, %v475
    %477 = vmatprep.mubr.f32.mxu0 0.0
    %478 = vmatmul.mubr.f32.gmra.mrb[0].mxu0 %v304
    %v479 = vpop.f32.mrb[0].mxu0
    %v480 = vadd.f32 %v247, %v479
    %v481 = vpop.f32.mrb[0].mxu0
    %v482 = vadd.f32 %v247, %v481
    %483 = vdwg.mxu0
    %484 = vmatprep.subr.mxu0 %v313
    %485 = vmatpush1.msra.mxu0 %v311
    %486 = vmatprep.subr.mxu0 0.0
    %487 = vmatpush1.msra.mxu0 0.0
    %488 = vmatprep.subr.mxu0 0.0
    %489 = vmatpush1.msra.mxu0 0.0
    %490 = vmatprep.subr.mxu0 0.0
    %491 = vmatpush1.msra.mxu0 0.0
    %492 = vmatprep.subr.mxu0 0.0
    %493 = vmatpush1.msra.mxu0 0.0
    %494 = vmatprep.subr.mxu0 0.0
    %495 = vmatpush1.msra.mxu0 0.0
    %496 = vmatprep.subr.mxu0 0.0
    %497 = vmatpush1.msra.mxu0 0.0
    %498 = vmatprep.subr.mxu0 0.0
    %499 = vmatpush1.msra.mxu0 0.0
    %500 = vmatprep.subr.mxu0 0.0
    %501 = vmatpush1.msra.mxu0 0.0
    %502 = vmatprep.subr.mxu0 0.0
    %503 = vmatpush1.msra.mxu0 0.0
    %504 = vmatprep.subr.mxu0 0.0
    %505 = vmatpush1.msra.mxu0 0.0
    %506 = vmatprep.subr.mxu0 0.0
    %507 = vmatpush1.msra.mxu0 0.0
    %508 = vmatprep.subr.mxu0 0.0
    %509 = vmatpush1.msra.mxu0 0.0
    %510 = vmatprep.subr.mxu0 0.0
    %511 = vmatpush1.msra.mxu0 0.0
    %512 = vmatprep.subr.mxu0 0.0
    %513 = vmatpush1.msra.mxu0 0.0
    %514 = vmatprep.subr.mxu0 0.0
    %515 = vmatpush1.msra.mxu0 0.0
    %516 = vmatprep.subr.mxu0 0.0
    %517 = vmatpush1.msra.mxu0 0.0
    %518 = vmatprep.subr.mxu0 0.0
    %519 = vmatpush1.msra.mxu0 0.0
    %520 = vmatprep.subr.mxu0 0.0
    %521 = vmatpush1.msra.mxu0 0.0
    %522 = vmatprep.subr.mxu0 0.0
    %523 = vmatpush1.msra.mxu0 0.0
    %524 = vmatprep.subr.mxu0 0.0
    %525 = vmatpush1.msra.mxu0 0.0
    %526 = vmatprep.subr.mxu0 0.0
    %527 = vmatpush1.msra.mxu0 0.0
    %528 = vmatprep.subr.mxu0 0.0
    %529 = vmatpush1.msra.mxu0 0.0
    %530 = vmatprep.subr.mxu0 0.0
    %531 = vmatpush1.msra.mxu0 0.0
    %532 = vmatprep.subr.mxu0 0.0
    %533 = vmatpush1.msra.mxu0 0.0
    %534 = vmatprep.subr.mxu0 0.0
    %535 = vmatpush1.msra.mxu0 0.0
    %536 = vmatprep.subr.mxu0 0.0
    %537 = vmatpush1.msra.mxu0 0.0
    %538 = vmatprep.subr.mxu0 0.0
    %539 = vmatpush1.msra.mxu0 0.0
    %540 = vmatprep.subr.mxu0 0.0
    %541 = vmatpush1.msra.mxu0 0.0
    %542 = vmatprep.subr.mxu0 0.0
    %543 = vmatpush1.msra.mxu0 0.0
    %544 = vmatprep.subr.mxu0 0.0
    %545 = vmatpush1.msra.mxu0 0.0
    %546 = vmatprep.subr.mxu0 0.0
    %547 = vmatpush1.msra.mxu0 0.0
    %548 = vmatprep.mubr.f32.mxu0 0.0
    %549 = vmatmul.mubr.f32.gmra.mrb[0].mxu0 %v259
    %v550 = vpop.f32.mrb[0].mxu0
    %v551 = vadd.f32 %v172, %v550
    %v552 = vpop.f32.mrb[0].mxu0
    %v553 = vadd.f32 %v172, %v552
    %554 = vmatprep.mubr.f32.mxu0 0.0
    %555 = vmatmul.mubr.f32.gmra.mrb[0].mxu0 %v262
    %v556 = vpop.f32.mrb[0].mxu0
    %v557 = vadd.f32 %v177, %v556
    %v558 = vpop.f32.mrb[0].mxu0
    %v559 = vadd.f32 %v177, %v558
    %560 = vmatprep.mubr.f32.mxu0 0.0
    %561 = vmatmul.mubr.f32.gmra.mrb[0].mxu0 %v265
    %v562 = vpop.f32.mrb[0].mxu0
    %v563 = vadd.f32 %v182, %v562
    %v564 = vpop.f32.mrb[0].mxu0
    %v565 = vadd.f32 %v182, %v564
    %566 = vmatprep.mubr.f32.mxu0 0.0
    %567 = vmatmul.mubr.f32.gmra.mrb[0].mxu0 %v268
    %v568 = vpop.f32.mrb[0].mxu0
    %v569 = vadd.f32 %v187, %v568
    %v570 = vpop.f32.mrb[0].mxu0
    %v571 = vadd.f32 %v187, %v570
    %572 = vmatprep.mubr.f32.mxu0 0.0
    %573 = vmatmul.mubr.f32.gmra.mrb[0].mxu0 %v271
    %v574 = vpop.f32.mrb[0].mxu0
    %v575 = vadd.f32 %v192, %v574
    %v576 = vpop.f32.mrb[0].mxu0
    %v577 = vadd.f32 %v192, %v576
    %578 = vmatprep.mubr.f32.mxu0 0.0
    %579 = vmatmul.mubr.f32.gmra.mrb[0].mxu0 %v274
    %v580 = vpop.f32.mrb[0].mxu0
    %v581 = vadd.f32 %v197, %v580
    %v582 = vpop.f32.mrb[0].mxu0
    %v583 = vadd.f32 %v197, %v582
    %584 = vmatprep.mubr.f32.mxu0 0.0
    %585 = vmatmul.mubr.f32.gmra.mrb[0].mxu0 %v277
    %v586 = vpop.f32.mrb[0].mxu0
    %v587 = vadd.f32 %v202, %v586
    %v588 = vpop.f32.mrb[0].mxu0
    %v589 = vadd.f32 %v202, %v588
    %590 = vmatprep.mubr.f32.mxu0 0.0
    %591 = vmatmul.mubr.f32.gmra.mrb[0].mxu0 %v280
    %v592 = vpop.f32.mrb[0].mxu0
    %v593 = vadd.f32 %v207, %v592
    %v594 = vpop.f32.mrb[0].mxu0
    %v595 = vadd.f32 %v207, %v594
    %596 = vmatprep.mubr.f32.mxu0 0.0
    %597 = vmatmul.mubr.f32.gmra.mrb[0].mxu0 %v283
    %v598 = vpop.f32.mrb[0].mxu0
    %v599 = vadd.f32 %v212, %v598
    %v600 = vpop.f32.mrb[0].mxu0
    %v601 = vadd.f32 %v212, %v600
    %602 = vmatprep.mubr.f32.mxu0 0.0
    %603 = vmatmul.mubr.f32.gmra.mrb[0].mxu0 %v286
    %v604 = vpop.f32.mrb[0].mxu0
    %v605 = vadd.f32 %v217, %v604
    %v606 = vpop.f32.mrb[0].mxu0
    %v607 = vadd.f32 %v217, %v606
    %608 = vmatprep.mubr.f32.mxu0 0.0
    %609 = vmatmul.mubr.f32.gmra.mrb[0].mxu0 %v289
    %v610 = vpop.f32.mrb[0].mxu0
    %v611 = vadd.f32 %v222, %v610
    %v612 = vpop.f32.mrb[0].mxu0
    %v613 = vadd.f32 %v222, %v612
    %614 = vmatprep.mubr.f32.mxu0 0.0
    %615 = vmatmul.mubr.f32.gmra.mrb[0].mxu0 %v292
    %v616 = vpop.f32.mrb[0].mxu0
    %v617 = vadd.f32 %v227, %v616
    %v618 = vpop.f32.mrb[0].mxu0
    %v619 = vadd.f32 %v227, %v618
    %620 = vmatprep.mubr.f32.mxu0 0.0
    %621 = vmatmul.mubr.f32.gmra.mrb[0].mxu0 %v295
    %v622 = vpop.f32.mrb[0].mxu0
    %v623 = vadd.f32 %v232, %v622
    %v624 = vpop.f32.mrb[0].mxu0
    %v625 = vadd.f32 %v232, %v624
    %626 = vmatprep.mubr.f32.mxu0 0.0
    %627 = vmatmul.mubr.f32.gmra.mrb[0].mxu0 %v298
    %v628 = vpop.f32.mrb[0].mxu0
    %v629 = vadd.f32 %v237, %v628
    %v630 = vpop.f32.mrb[0].mxu0
    %v631 = vadd.f32 %v237, %v630
    %632 = vmatprep.mubr.f32.mxu0 0.0
    %633 = vmatmul.mubr.f32.gmra.mrb[0].mxu0 %v301
    %v634 = vpop.f32.mrb[0].mxu0
    %v635 = vadd.f32 %v242, %v634
    %v636 = vpop.f32.mrb[0].mxu0
    %v637 = vadd.f32 %v242, %v636
    %638 = vmatprep.mubr.f32.mxu0 0.0
    %639 = vmatmul.mubr.f32.gmra.mrb[0].mxu0 %v304
    %v640 = vpop.f32.mrb[0].mxu0
    %v641 = vadd.f32 %v247, %v640
    %v642 = vpop.f32.mrb[0].mxu0
    %v643 = vadd.f32 %v247, %v642
    %644 = vdwg.mxu0
    %645 = vmatprep.subr.mxu0 %v317
    %646 = vmatpush1.msra.mxu0 %v315
    %647 = vmatprep.subr.mxu0 0.0
    %648 = vmatpush1.msra.mxu0 0.0
    %649 = vmatprep.subr.mxu0 0.0
    %650 = vmatpush1.msra.mxu0 0.0
    %651 = vmatprep.subr.mxu0 0.0
    %652 = vmatpush1.msra.mxu0 0.0
    %653 = vmatprep.subr.mxu0 0.0
    %654 = vmatpush1.msra.mxu0 0.0
    %655 = vmatprep.subr.mxu0 0.0
    %656 = vmatpush1.msra.mxu0 0.0
    %657 = vmatprep.subr.mxu0 0.0
    %658 = vmatpush1.msra.mxu0 0.0
    %659 = vmatprep.subr.mxu0 0.0
    %660 = vmatpush1.msra.mxu0 0.0
    %661 = vmatprep.subr.mxu0 0.0
    %662 = vmatpush1.msra.mxu0 0.0
    %663 = vmatprep.subr.mxu0 0.0
    %664 = vmatpush1.msra.mxu0 0.0
    %665 = vmatprep.subr.mxu0 0.0
    %666 = vmatpush1.msra.mxu0 0.0
    %667 = vmatprep.subr.mxu0 0.0
    %668 = vmatpush1.msra.mxu0 0.0
    %669 = vmatprep.subr.mxu0 0.0
    %670 = vmatpush1.msra.mxu0 0.0
    %671 = vmatprep.subr.mxu0 0.0
    %672 = vmatpush1.msra.mxu0 0.0
    %673 = vmatprep.subr.mxu0 0.0
    %674 = vmatpush1.msra.mxu0 0.0
    %675 = vmatprep.subr.mxu0 0.0
    %676 = vmatpush1.msra.mxu0 0.0
    %677 = vmatprep.subr.mxu0 0.0
    %678 = vmatpush1.msra.mxu0 0.0
    %679 = vmatprep.subr.mxu0 0.0
    %680 = vmatpush1.msra.mxu0 0.0
    %681 = vmatprep.subr.mxu0 0.0
    %682 = vmatpush1.msra.mxu0 0.0
    %683 = vmatprep.subr.mxu0 0.0
    %684 = vmatpush1.msra.mxu0 0.0
    %685 = vmatprep.subr.mxu0 0.0
    %686 = vmatpush1.msra.mxu0 0.0
    %687 = vmatprep.subr.mxu0 0.0
    %688 = vmatpush1.msra.mxu0 0.0
    %689 = vmatprep.subr.mxu0 0.0
    %690 = vmatpush1.msra.mxu0 0.0
    %691 = vmatprep.subr.mxu0 0.0
    %692 = vmatpush1.msra.mxu0 0.0
    %693 = vmatprep.subr.mxu0 0.0
    %694 = vmatpush1.msra.mxu0 0.0
    %695 = vmatprep.subr.mxu0 0.0
    %696 = vmatpush1.msra.mxu0 0.0
    %697 = vmatprep.subr.mxu0 0.0
    %698 = vmatpush1.msra.mxu0 0.0
    %699 = vmatprep.subr.mxu0 0.0
    %700 = vmatpush1.msra.mxu0 0.0
    %701 = vmatprep.subr.mxu0 0.0
    %702 = vmatpush1.msra.mxu0 0.0
    %703 = vmatprep.subr.mxu0 0.0
    %704 = vmatpush1.msra.mxu0 0.0
    %705 = vmatprep.subr.mxu0 0.0
    %706 = vmatpush1.msra.mxu0 0.0
    %707 = vmatprep.subr.mxu0 0.0
    %708 = vmatpush1.msra.mxu0 0.0
    %709 = vmatprep.mubr.f32.mxu0 0.0
    %710 = vmatmul.mubr.f32.gmra.mrb[0].mxu0 %v259
    %v711 = vpop.f32.mrb[0].mxu0
    %v712 = vadd.f32 %v172, %v711
    %v713 = vpop.f32.mrb[0].mxu0
    %v714 = vadd.f32 %v172, %v713
    %715 = vmatprep.mubr.f32.mxu0 0.0
    %716 = vmatmul.mubr.f32.gmra.mrb[0].mxu0 %v262
    %v717 = vpop.f32.mrb[0].mxu0
    %v718 = vadd.f32 %v177, %v717
    %v719 = vpop.f32.mrb[0].mxu0
    %v720 = vadd.f32 %v177, %v719
    %721 = vmatprep.mubr.f32.mxu0 0.0
    %722 = vmatmul.mubr.f32.gmra.mrb[0].mxu0 %v265
    %v723 = vpop.f32.mrb[0].mxu0
    %v724 = vadd.f32 %v182, %v723
    %v725 = vpop.f32.mrb[0].mxu0
    %v726 = vadd.f32 %v182, %v725
    %727 = vmatprep.mubr.f32.mxu0 0.0
    %728 = vmatmul.mubr.f32.gmra.mrb[0].mxu0 %v268
    %v729 = vpop.f32.mrb[0].mxu0
    %v730 = vadd.f32 %v187, %v729
    %v731 = vpop.f32.mrb[0].mxu0
    %v732 = vadd.f32 %v187, %v731
    %733 = vmatprep.mubr.f32.mxu0 0.0
    %734 = vmatmul.mubr.f32.gmra.mrb[0].mxu0 %v271
    %v735 = vpop.f32.mrb[0].mxu0
    %v736 = vadd.f32 %v192, %v735
    %v737 = vpop.f32.mrb[0].mxu0
    %v738 = vadd.f32 %v192, %v737
    %739 = vmatprep.mubr.f32.mxu0 0.0
    %740 = vmatmul.mubr.f32.gmra.mrb[0].mxu0 %v274
    %v741 = vpop.f32.mrb[0].mxu0
    %v742 = vadd.f32 %v197, %v741
    %v743 = vpop.f32.mrb[0].mxu0
    %v744 = vadd.f32 %v197, %v743
    %745 = vmatprep.mubr.f32.mxu0 0.0
    %746 = vmatmul.mubr.f32.gmra.mrb[0].mxu0 %v277
    %v747 = vpop.f32.mrb[0].mxu0
    %v748 = vadd.f32 %v202, %v747
    %v749 = vpop.f32.mrb[0].mxu0
    %v750 = vadd.f32 %v202, %v749
    %751 = vmatprep.mubr.f32.mxu0 0.0
    %752 = vmatmul.mubr.f32.gmra.mrb[0].mxu0 %v280
    %v753 = vpop.f32.mrb[0].mxu0
    %v754 = vadd.f32 %v207, %v753
    %v755 = vpop.f32.mrb[0].mxu0
    %v756 = vadd.f32 %v207, %v755
    %757 = vmatprep.mubr.f32.mxu0 0.0
    %758 = vmatmul.mubr.f32.gmra.mrb[0].mxu0 %v283
    %v759 = vpop.f32.mrb[0].mxu0
    %v760 = vadd.f32 %v212, %v759
    %v761 = vpop.f32.mrb[0].mxu0
    %v762 = vadd.f32 %v212, %v761
    %763 = vmatprep.mubr.f32.mxu0 0.0
    %764 = vmatmul.mubr.f32.gmra.mrb[0].mxu0 %v286
    %v765 = vpop.f32.mrb[0].mxu0
    %v766 = vadd.f32 %v217, %v765
    %v767 = vpop.f32.mrb[0].mxu0
    %v768 = vadd.f32 %v217, %v767
    %769 = vmatprep.mubr.f32.mxu0 0.0
    %770 = vmatmul.mubr.f32.gmra.mrb[0].mxu0 %v289
    %v771 = vpop.f32.mrb[0].mxu0
    %v772 = vadd.f32 %v222, %v771
    %v773 = vpop.f32.mrb[0].mxu0
    %v774 = vadd.f32 %v222, %v773
    %775 = vmatprep.mubr.f32.mxu0 0.0
    %776 = vmatmul.mubr.f32.gmra.mrb[0].mxu0 %v292
    %v777 = vpop.f32.mrb[0].mxu0
    %v778 = vadd.f32 %v227, %v777
    %v779 = vpop.f32.mrb[0].mxu0
    %v780 = vadd.f32 %v227, %v779
    %781 = vmatprep.mubr.f32.mxu0 0.0
    %782 = vmatmul.mubr.f32.gmra.mrb[0].mxu0 %v295
    %v783 = vpop.f32.mrb[0].mxu0
    %v784 = vadd.f32 %v232, %v783
    %v785 = vpop.f32.mrb[0].mxu0
    %v786 = vadd.f32 %v232, %v785
    %787 = vmatprep.mubr.f32.mxu0 0.0
    %788 = vmatmul.mubr.f32.gmra.mrb[0].mxu0 %v298
    %v789 = vpop.f32.mrb[0].mxu0
    %v790 = vadd.f32 %v237, %v789
    %v791 = vpop.f32.mrb[0].mxu0
    %v792 = vadd.f32 %v237, %v791
    %793 = vmatprep.mubr.f32.mxu0 0.0
    %794 = vmatmul.mubr.f32.gmra.mrb[0].mxu0 %v301
    %v795 = vpop.f32.mrb[0].mxu0
    %v796 = vadd.f32 %v242, %v795
    %v797 = vpop.f32.mrb[0].mxu0
    %v798 = vadd.f32 %v242, %v797
    %799 = vmatprep.mubr.f32.mxu0 0.0
    %800 = vmatmul.mubr.f32.gmra.mrb[0].mxu0 %v304
    %v801 = vpop.f32.mrb[0].mxu0
    %v802 = vadd.f32 %v247, %v801
    %v803 = vpop.f32.mrb[0].mxu0
    %v804 = vadd.f32 %v247, %v803
    %805 = vdwg.mxu0
    %806 = vmatprep.subr.mxu0 %v321
    %807 = vmatpush1.msra.mxu0 %v319
    %808 = vmatprep.subr.mxu0 0.0
    %809 = vmatpush1.msra.mxu0 0.0
    %810 = vmatprep.subr.mxu0 0.0
    %811 = vmatpush1.msra.mxu0 0.0
    %812 = vmatprep.subr.mxu0 0.0
    %813 = vmatpush1.msra.mxu0 0.0
    %814 = vmatprep.subr.mxu0 0.0
    %815 = vmatpush1.msra.mxu0 0.0
    %816 = vmatprep.subr.mxu0 0.0
    %817 = vmatpush1.msra.mxu0 0.0
    %818 = vmatprep.subr.mxu0 0.0
    %819 = vmatpush1.msra.mxu0 0.0
    %820 = vmatprep.subr.mxu0 0.0
    %821 = vmatpush1.msra.mxu0 0.0
    %822 = vmatprep.subr.mxu0 0.0
    %823 = vmatpush1.msra.mxu0 0.0
    %824 = vmatprep.subr.mxu0 0.0
    %825 = vmatpush1.msra.mxu0 0.0
    %826 = vmatprep.subr.mxu0 0.0
    %827 = vmatpush1.msra.mxu0 0.0
    %828 = vmatprep.subr.mxu0 0.0
    %829 = vmatpush1.msra.mxu0 0.0
    %830 = vmatprep.subr.mxu0 0.0
    %831 = vmatpush1.msra.mxu0 0.0
    %832 = vmatprep.subr.mxu0 0.0
    %833 = vmatpush1.msra.mxu0 0.0
    %834 = vmatprep.subr.mxu0 0.0
    %835 = vmatpush1.msra.mxu0 0.0
    %836 = vmatprep.subr.mxu0 0.0
    %837 = vmatpush1.msra.mxu0 0.0
    %838 = vmatprep.subr.mxu0 0.0
    %839 = vmatpush1.msra.mxu0 0.0
    %840 = vmatprep.subr.mxu0 0.0
    %841 = vmatpush1.msra.mxu0 0.0
    %842 = vmatprep.subr.mxu0 0.0
    %843 = vmatpush1.msra.mxu0 0.0
    %844 = vmatprep.subr.mxu0 0.0
    %845 = vmatpush1.msra.mxu0 0.0
    %846 = vmatprep.subr.mxu0 0.0
    %847 = vmatpush1.msra.mxu0 0.0
    %848 = vmatprep.subr.mxu0 0.0
    %849 = vmatpush1.msra.mxu0 0.0
    %850 = vmatprep.subr.mxu0 0.0
    %851 = vmatpush1.msra.mxu0 0.0
    %852 = vmatprep.subr.mxu0 0.0
    %853 = vmatpush1.msra.mxu0 0.0
    %854 = vmatprep.subr.mxu0 0.0
    %855 = vmatpush1.msra.mxu0 0.0
    %856 = vmatprep.subr.mxu0 0.0
    %857 = vmatpush1.msra.mxu0 0.0
    %858 = vmatprep.subr.mxu0 0.0
    %859 = vmatpush1.msra.mxu0 0.0
    %860 = vmatprep.subr.mxu0 0.0
    %861 = vmatpush1.msra.mxu0 0.0
    %862 = vmatprep.subr.mxu0 0.0
    %863 = vmatpush1.msra.mxu0 0.0
    %864 = vmatprep.subr.mxu0 0.0
    %865 = vmatpush1.msra.mxu0 0.0
    %866 = vmatprep.subr.mxu0 0.0
    %867 = vmatpush1.msra.mxu0 0.0
    %868 = vmatprep.subr.mxu0 0.0
    %869 = vmatpush1.msra.mxu0 0.0
    %870 = vmatprep.mubr.f32.mxu0 0.0
    %871 = vmatmul.mubr.f32.gmra.mrb[0].mxu0 %v259
    %v872 = vpop.f32.mrb[0].mxu0
    %v873 = vadd.f32 %v172, %v872
    %v874 = vpop.f32.mrb[0].mxu0
    %v875 = vadd.f32 %v172, %v874
    %876 = vmatprep.mubr.f32.mxu0 0.0
    %877 = vmatmul.mubr.f32.gmra.mrb[0].mxu0 %v262
    %v878 = vpop.f32.mrb[0].mxu0
    %v879 = vadd.f32 %v177, %v878
    %v880 = vpop.f32.mrb[0].mxu0
    %v881 = vadd.f32 %v177, %v880
    %882 = vmatprep.mubr.f32.mxu0 0.0
    %883 = vmatmul.mubr.f32.gmra.mrb[0].mxu0 %v265
    %v884 = vpop.f32.mrb[0].mxu0
    %v885 = vadd.f32 %v182, %v884
    %v886 = vpop.f32.mrb[0].mxu0
    %v887 = vadd.f32 %v182, %v886
    %888 = vmatprep.mubr.f32.mxu0 0.0
    %889 = vmatmul.mubr.f32.gmra.mrb[0].mxu0 %v268
    %v890 = vpop.f32.mrb[0].mxu0
    %v891 = vadd.f32 %v187, %v890
    %v892 = vpop.f32.mrb[0].mxu0
    %v893 = vadd.f32 %v187, %v892
    %894 = vmatprep.mubr.f32.mxu0 0.0
    %895 = vmatmul.mubr.f32.gmra.mrb[0].mxu0 %v271
    %v896 = vpop.f32.mrb[0].mxu0
    %v897 = vadd.f32 %v192, %v896
    %v898 = vpop.f32.mrb[0].mxu0
    %v899 = vadd.f32 %v192, %v898
    %900 = vmatprep.mubr.f32.mxu0 0.0
    %901 = vmatmul.mubr.f32.gmra.mrb[0].mxu0 %v274
    %v902 = vpop.f32.mrb[0].mxu0
    %v903 = vadd.f32 %v197, %v902
    %v904 = vpop.f32.mrb[0].mxu0
    %v905 = vadd.f32 %v197, %v904
    %906 = vmatprep.mubr.f32.mxu0 0.0
    %907 = vmatmul.mubr.f32.gmra.mrb[0].mxu0 %v277
    %v908 = vpop.f32.mrb[0].mxu0
    %v909 = vadd.f32 %v202, %v908
    %v910 = vpop.f32.mrb[0].mxu0
    %v911 = vadd.f32 %v202, %v910
    %912 = vmatprep.mubr.f32.mxu0 0.0
    %913 = vmatmul.mubr.f32.gmra.mrb[0].mxu0 %v280
    %v914 = vpop.f32.mrb[0].mxu0
    %v915 = vadd.f32 %v207, %v914
    %v916 = vpop.f32.mrb[0].mxu0
    %v917 = vadd.f32 %v207, %v916
    %918 = vmatprep.mubr.f32.mxu0 0.0
    %919 = vmatmul.mubr.f32.gmra.mrb[0].mxu0 %v283
    %v920 = vpop.f32.mrb[0].mxu0
    %v921 = vadd.f32 %v212, %v920
    %v922 = vpop.f32.mrb[0].mxu0
    %v923 = vadd.f32 %v212, %v922
    %924 = vmatprep.mubr.f32.mxu0 0.0
    %925 = vmatmul.mubr.f32.gmra.mrb[0].mxu0 %v286
    %v926 = vpop.f32.mrb[0].mxu0
    %v927 = vadd.f32 %v217, %v926
    %v928 = vpop.f32.mrb[0].mxu0
    %v929 = vadd.f32 %v217, %v928
    %930 = vmatprep.mubr.f32.mxu0 0.0
    %931 = vmatmul.mubr.f32.gmra.mrb[0].mxu0 %v289
    %v932 = vpop.f32.mrb[0].mxu0
    %v933 = vadd.f32 %v222, %v932
    %v934 = vpop.f32.mrb[0].mxu0
    %v935 = vadd.f32 %v222, %v934
    %936 = vmatprep.mubr.f32.mxu0 0.0
    %937 = vmatmul.mubr.f32.gmra.mrb[0].mxu0 %v292
    %v938 = vpop.f32.mrb[0].mxu0
    %v939 = vadd.f32 %v227, %v938
    %v940 = vpop.f32.mrb[0].mxu0
    %v941 = vadd.f32 %v227, %v940
    %942 = vmatprep.mubr.f32.mxu0 0.0
    %943 = vmatmul.mubr.f32.gmra.mrb[0].mxu0 %v295
    %v944 = vpop.f32.mrb[0].mxu0
    %v945 = vadd.f32 %v232, %v944
    %v946 = vpop.f32.mrb[0].mxu0
    %v947 = vadd.f32 %v232, %v946
    %948 = vmatprep.mubr.f32.mxu0 0.0
    %949 = vmatmul.mubr.f32.gmra.mrb[0].mxu0 %v298
    %v950 = vpop.f32.mrb[0].mxu0
    %v951 = vadd.f32 %v237, %v950
    %v952 = vpop.f32.mrb[0].mxu0
    %v953 = vadd.f32 %v237, %v952
    %954 = vmatprep.mubr.f32.mxu0 0.0
    %955 = vmatmul.mubr.f32.gmra.mrb[0].mxu0 %v301
    %v956 = vpop.f32.mrb[0].mxu0
    %v957 = vadd.f32 %v242, %v956
    %v958 = vpop.f32.mrb[0].mxu0
    %v959 = vadd.f32 %v242, %v958
    %960 = vmatprep.mubr.f32.mxu0 0.0
    %961 = vmatmul.mubr.f32.gmra.mrb[0].mxu0 %v304
    %v962 = vpop.f32.mrb[0].mxu0
    %v963 = vadd.f32 %v247, %v962
    %v964 = vpop.f32.mrb[0].mxu0
    %v965 = vadd.f32 %v247, %v964
    %966 = vdwg.mxu0
    %v967 = vtanh.pop %v390
    %v968 = vtanh.pop %v392
    %v969 = vtanh.pop %v551
    %v970 = vtanh.pop %v553
    %v971 = vtanh.pop %v712
    %v972 = vtanh.pop %v714
    %v973 = vtanh.pop %v873
    %v974 = vtanh.pop %v875
    %v975 = vtanh.pop %v396
    %v976 = vtanh.pop %v398
    %v977 = vtanh.pop %v557
    %v978 = vtanh.pop %v559
    %v979 = vtanh.pop %v718
    %v980 = vtanh.pop %v720
    %v981 = vtanh.pop %v879
    %v982 = vtanh.pop %v881
    %v983 = vtanh.pop %v402
    %v984 = vtanh.pop %v404
    %v985 = vtanh.pop %v563
    %v986 = vtanh.pop %v565
    %v987 = vtanh.pop %v724
    %v988 = vtanh.pop %v726
    %v989 = vtanh.pop %v885
    %v990 = vtanh.pop %v887
    %v991 = vtanh.pop %v408
    %v992 = vtanh.pop %v410
    %v993 = vtanh.pop %v569
    %v994 = vtanh.pop %v571
    %v995 = vtanh.pop %v730
    %v996 = vtanh.pop %v732
    %v997 = vtanh.pop %v891
    %v998 = vtanh.pop %v893
    %v999 = vtanh.pop %v414
    %v1000 = vtanh.pop %v416
    %v1001 = vtanh.pop %v575
    %v1002 = vtanh.pop %v577
    %v1003 = vtanh.pop %v736
    %v1004 = vtanh.pop %v738
    %v1005 = vtanh.pop %v897
    %v1006 = vtanh.pop %v899
    %v1007 = vtanh.pop %v420
    %v1008 = vtanh.pop %v422
    %v1009 = vtanh.pop %v581
    %v1010 = vtanh.pop %v583
    %v1011 = vtanh.pop %v742
    %v1012 = vtanh.pop %v744
    %v1013 = vtanh.pop %v903
    %v1014 = vtanh.pop %v905
    %v1015 = vtanh.pop %v426
    %v1016 = vtanh.pop %v428
    %v1017 = vtanh.pop %v587
    %v1018 = vtanh.pop %v589
    %v1019 = vtanh.pop %v748
    %v1020 = vtanh.pop %v750
    %v1021 = vtanh.pop %v909
    %v1022 = vtanh.pop %v911
    %v1023 = vtanh.pop %v432
    %v1024 = vtanh.pop %v434
    %v1025 = vtanh.pop %v593
    %v1026 = vtanh.pop %v595
    %v1027 = vtanh.pop %v754
    %v1028 = vtanh.pop %v756
    %v1029 = vtanh.pop %v915
    %v1030 = vtanh.pop %v917
    %v1031 = vtanh.pop %v438
    %v1032 = vtanh.pop %v440
    %v1033 = vtanh.pop %v599
    %v1034 = vtanh.pop %v601
    %v1035 = vtanh.pop %v760
    %v1036 = vtanh.pop %v762
    %v1037 = vtanh.pop %v921
    %v1038 = vtanh.pop %v923
    %v1039 = vtanh.pop %v444
    %v1040 = vtanh.pop %v446
    %v1041 = vtanh.pop %v605
    %v1042 = vtanh.pop %v607
    %v1043 = vtanh.pop %v766
    %v1044 = vtanh.pop %v768
    %v1045 = vtanh.pop %v927
    %v1046 = vtanh.pop %v929
    %v1047 = vtanh.pop %v450
    %v1048 = vtanh.pop %v452
    %v1049 = vtanh.pop %v611
    %v1050 = vtanh.pop %v613
    %v1051 = vtanh.pop %v772
    %v1052 = vtanh.pop %v774
    %v1053 = vtanh.pop %v933
    %v1054 = vtanh.pop %v935
    %v1055 = vtanh.pop %v456
    %v1056 = vtanh.pop %v458
    %v1057 = vtanh.pop %v617
    %v1058 = vtanh.pop %v619
    %v1059 = vtanh.pop %v778
    %v1060 = vtanh.pop %v780
    %v1061 = vtanh.pop %v939
    %v1062 = vtanh.pop %v941
    %v1063 = vtanh.pop %v462
    %v1064 = vtanh.pop %v464
    %v1065 = vtanh.pop %v623
    %v1066 = vtanh.pop %v625
    %v1067 = vtanh.pop %v784
    %v1068 = vtanh.pop %v786
    %v1069 = vtanh.pop %v945
    %v1070 = vtanh.pop %v947
    %v1071 = vtanh.pop %v468
    %v1072 = vtanh.pop %v470
    %v1073 = vtanh.pop %v629
    %v1074 = vtanh.pop %v631
    %v1075 = vtanh.pop %v790
    %v1076 = vtanh.pop %v792
    %v1077 = vtanh.pop %v951
    %v1078 = vtanh.pop %v953
    %v1079 = vtanh.pop %v474
    %v1080 = vtanh.pop %v476
    %v1081 = vtanh.pop %v635
    %v1082 = vtanh.pop %v637
    %v1083 = vtanh.pop %v796
    %v1084 = vtanh.pop %v798
    %v1085 = vtanh.pop %v957
    %v1086 = vtanh.pop %v959
    %v1087 = vtanh.pop %v480
    %v1088 = vtanh.pop %v482
    %v1089 = vtanh.pop %v641
    %v1090 = vtanh.pop %v643
    %v1091 = vtanh.pop %v802
    %v1092 = vtanh.pop %v804
    %v1093 = vtanh.pop %v963
    %v1094 = vtanh.pop %v965
    %v1095 = vsub.f32 %v967, %v1031
    %v1096 = vsub.f32 %v968, %v1032
    %v1097 = vsub.f32 %v969, %v1033
    %v1098 = vsub.f32 %v970, %v1034
    %v1099 = vsub.f32 %v971, %v1035
    %v1100 = vsub.f32 %v972, %v1036
    %v1101 = vsub.f32 %v973, %v1037
    %v1102 = vsub.f32 %v974, %v1038
    %v1103 = vsub.f32 %v975, %v1039
    %v1104 = vsub.f32 %v976, %v1040
    %v1105 = vsub.f32 %v977, %v1041
    %v1106 = vsub.f32 %v978, %v1042
    %v1107 = vsub.f32 %v979, %v1043
    %v1108 = vsub.f32 %v980, %v1044
    %v1109 = vsub.f32 %v981, %v1045
    %v1110 = vsub.f32 %v982, %v1046
    %v1111 = vsub.f32 %v983, %v1047
    %v1112 = vsub.f32 %v984, %v1048
    %v1113 = vsub.f32 %v985, %v1049
    %v1114 = vsub.f32 %v986, %v1050
    %v1115 = vsub.f32 %v987, %v1051
    %v1116 = vsub.f32 %v988, %v1052
    %v1117 = vsub.f32 %v989, %v1053
    %v1118 = vsub.f32 %v990, %v1054
    %v1119 = vsub.f32 %v991, %v1055
    %v1120 = vsub.f32 %v992, %v1056
    %v1121 = vsub.f32 %v993, %v1057
    %v1122 = vsub.f32 %v994, %v1058
    %v1123 = vsub.f32 %v995, %v1059
    %v1124 = vsub.f32 %v996, %v1060
    %v1125 = vsub.f32 %v997, %v1061
    %v1126 = vsub.f32 %v998, %v1062
    %v1127 = vsub.f32 %v999, %v1063
    %v1128 = vsub.f32 %v1000, %v1064
    %v1129 = vsub.f32 %v1001, %v1065
    %v1130 = vsub.f32 %v1002, %v1066
    %v1131 = vsub.f32 %v1003, %v1067
    %v1132 = vsub.f32 %v1004, %v1068
    %v1133 = vsub.f32 %v1005, %v1069
    %v1134 = vsub.f32 %v1006, %v1070
    %v1135 = vsub.f32 %v1007, %v1071
    %v1136 = vsub.f32 %v1008, %v1072
    %v1137 = vsub.f32 %v1009, %v1073
    %v1138 = vsub.f32 %v1010, %v1074
    %v1139 = vsub.f32 %v1011, %v1075
    %v1140 = vsub.f32 %v1012, %v1076
    %v1141 = vsub.f32 %v1013, %v1077
    %v1142 = vsub.f32 %v1014, %v1078
    %v1143 = vsub.f32 %v1015, %v1079
    %v1144 = vsub.f32 %v1016, %v1080
    %v1145 = vsub.f32 %v1017, %v1081
    %v1146 = vsub.f32 %v1018, %v1082
    %v1147 = vsub.f32 %v1019, %v1083
    %v1148 = vsub.f32 %v1020, %v1084
    %v1149 = vsub.f32 %v1021, %v1085
    %v1150 = vsub.f32 %v1022, %v1086
    %v1151 = vsub.f32 %v1023, %v1087
    %v1152 = vsub.f32 %v1024, %v1088
    %v1153 = vsub.f32 %v1025, %v1089
    %v1154 = vsub.f32 %v1026, %v1090
    %v1155 = vsub.f32 %v1027, %v1091
    %v1156 = vsub.f32 %v1028, %v1092
    %v1157 = vsub.f32 %v1029, %v1093
    %v1158 = vsub.f32 %v1030, %v1094
    %v1159 = vld [vmem:[#allocation8] sm:$0xff]
    %v1160 = vld [vmem:[#allocation8 + $0x8] sm:$0xff]
    %v1161 = vld [vmem:[#allocation8 + $0x10] sm:$0xff]
    %v1162 = vld [vmem:[#allocation8 + $0x18] sm:$0xff]
    %v1163 = vld [vmem:[#allocation8 + $0x20] sm:$0xff]
    %v1164 = vld [vmem:[#allocation8 + $0x28] sm:$0xff]
    %v1165 = vld [vmem:[#allocation8 + $0x30] sm:$0xff]
    %v1166 = vld [vmem:[#allocation8 + $0x38] sm:$0xff]
    %v1167 = vld [vmem:[#allocation11] sm:$0xff]
    %v1168 = vld [vmem:[#allocation11 + $0x8] sm:$0xff]
    %v1169 = vld [vmem:[#allocation11 + $0x10] sm:$0xff]
    %v1170 = vld [vmem:[#allocation11 + $0x18] sm:$0xff]
    %v1171 = vld [vmem:[#allocation11 + $0x20] sm:$0xff]
    %v1172 = vld [vmem:[#allocation11 + $0x28] sm:$0xff]
    %v1173 = vld [vmem:[#allocation11 + $0x30] sm:$0xff]
    %v1174 = vld [vmem:[#allocation11 + $0x38] sm:$0xff]
    %1176 = vset.pattern.permute.xlu0 0
    %1177 = vperm.xlu0 %1176, %v1167
    %v1178 = vpop.permute.xlu0 %1177
    %1181 = vset.pattern.permute.xlu0 0
    %1182 = vperm.xlu0 %1181, %v1168
    %v1183 = vpop.permute.xlu0 %1182
    %1186 = vset.pattern.permute.xlu0 0
    %1187 = vperm.xlu0 %1186, %v1169
    %v1188 = vpop.permute.xlu0 %1187
    %1191 = vset.pattern.permute.xlu0 0
    %1192 = vperm.xlu0 %1191, %v1170
    %v1193 = vpop.permute.xlu0 %1192
    %1196 = vset.pattern.permute.xlu0 0
    %1197 = vperm.xlu0 %1196, %v1171
    %v1198 = vpop.permute.xlu0 %1197
    %1201 = vset.pattern.permute.xlu0 0
    %1202 = vperm.xlu0 %1201, %v1172
    %v1203 = vpop.permute.xlu0 %1202
    %1206 = vset.pattern.permute.xlu0 0
    %1207 = vperm.xlu0 %1206, %v1173
    %v1208 = vpop.permute.xlu0 %1207
    %1211 = vset.pattern.permute.xlu0 0
    %1212 = vperm.xlu0 %1211, %v1174
    %v1213 = vpop.permute.xlu0 %1212
    %v1216 = vsel %vm257, %v1159, 0
    %v1219 = vsel %vm257, %v1160, 0
    %v1222 = vsel %vm257, %v1161, 0
    %v1225 = vsel %vm257, %v1162, 0
    %v1228 = vsel %vm257, %v1163, 0
    %v1231 = vsel %vm257, %v1164, 0
    %v1234 = vsel %vm257, %v1165, 0
    %v1237 = vsel %vm257, %v1166, 0
    %1239 = vmatprep.subr.mxu0 %v309
    %1240 = vmatpush1.msra.mxu0 %v307
    %1241 = vmatprep.subr.mxu0 0.0
    %1242 = vmatpush1.msra.mxu0 0.0
    %1243 = vmatprep.subr.mxu0 0.0
    %1244 = vmatpush1.msra.mxu0 0.0
    %1245 = vmatprep.subr.mxu0 0.0
    %1246 = vmatpush1.msra.mxu0 0.0
    %1247 = vmatprep.subr.mxu0 0.0
    %1248 = vmatpush1.msra.mxu0 0.0
    %1249 = vmatprep.subr.mxu0 0.0
    %1250 = vmatpush1.msra.mxu0 0.0
    %1251 = vmatprep.subr.mxu0 0.0
    %1252 = vmatpush1.msra.mxu0 0.0
    %1253 = vmatprep.subr.mxu0 0.0
    %1254 = vmatpush1.msra.mxu0 0.0
    %1255 = vmatprep.subr.mxu0 0.0
    %1256 = vmatpush1.msra.mxu0 0.0
    %1257 = vmatprep.subr.mxu0 0.0
    %1258 = vmatpush1.msra.mxu0 0.0
    %1259 = vmatprep.subr.mxu0 0.0
    %1260 = vmatpush1.msra.mxu0 0.0
    %1261 = vmatprep.subr.mxu0 0.0
    %1262 = vmatpush1.msra.mxu0 0.0
    %1263 = vmatprep.subr.mxu0 0.0
    %1264 = vmatpush1.msra.mxu0 0.0
    %1265 = vmatprep.subr.mxu0 0.0
    %1266 = vmatpush1.msra.mxu0 0.0
    %1267 = vmatprep.subr.mxu0 0.0
    %1268 = vmatpush1.msra.mxu0 0.0
    %1269 = vmatprep.subr.mxu0 0.0
    %1270 = vmatpush1.msra.mxu0 0.0
    %1271 = vmatprep.subr.mxu0 0.0
    %1272 = vmatpush1.msra.mxu0 0.0
    %1273 = vmatprep.subr.mxu0 0.0
    %1274 = vmatpush1.msra.mxu0 0.0
    %1275 = vmatprep.subr.mxu0 0.0
    %1276 = vmatpush1.msra.mxu0 0.0
    %1277 = vmatprep.subr.mxu0 0.0
    %1278 = vmatpush1.msra.mxu0 0.0
    %1279 = vmatprep.subr.mxu0 0.0
    %1280 = vmatpush1.msra.mxu0 0.0
    %1281 = vmatprep.subr.mxu0 0.0
    %1282 = vmatpush1.msra.mxu0 0.0
    %1283 = vmatprep.subr.mxu0 0.0
    %1284 = vmatpush1.msra.mxu0 0.0
    %1285 = vmatprep.subr.mxu0 0.0
    %1286 = vmatpush1.msra.mxu0 0.0
    %1287 = vmatprep.subr.mxu0 0.0
    %1288 = vmatpush1.msra.mxu0 0.0
    %1289 = vmatprep.subr.mxu0 0.0
    %1290 = vmatpush1.msra.mxu0 0.0
    %1291 = vmatprep.subr.mxu0 0.0
    %1292 = vmatpush1.msra.mxu0 0.0
    %1293 = vmatprep.subr.mxu0 0.0
    %1294 = vmatpush1.msra.mxu0 0.0
    %1295 = vmatprep.subr.mxu0 0.0
    %1296 = vmatpush1.msra.mxu0 0.0
    %1297 = vmatprep.subr.mxu0 0.0
    %1298 = vmatpush1.msra.mxu0 0.0
    %1299 = vmatprep.subr.mxu0 0.0
    %1300 = vmatpush1.msra.mxu0 0.0
    %1301 = vmatprep.subr.mxu0 0.0
    %1302 = vmatpush1.msra.mxu0 0.0
    %1303 = vmatprep.mubr.f32.mxu0 0.0
    %1304 = vmatmul.mubr.f32.gmra.mrb[0].mxu0 %v1216
    %v1305 = vpop.f32.mrb[0].mxu0
    %v1306 = vadd.f32 %v1178, %v1305
    %v1307 = vpop.f32.mrb[0].mxu0
    %v1308 = vadd.f32 %v1178, %v1307
    %1309 = vmatprep.mubr.f32.mxu0 0.0
    %1310 = vmatmul.mubr.f32.gmra.mrb[0].mxu0 %v1219
    %v1311 = vpop.f32.mrb[0].mxu0
    %v1312 = vadd.f32 %v1183, %v1311
    %v1313 = vpop.f32.mrb[0].mxu0
    %v1314 = vadd.f32 %v1183, %v1313
    %1315 = vmatprep.mubr.f32.mxu0 0.0
    %1316 = vmatmul.mubr.f32.gmra.mrb[0].mxu0 %v1222
    %v1317 = vpop.f32.mrb[0].mxu0
    %v1318 = vadd.f32 %v1188, %v1317
    %v1319 = vpop.f32.mrb[0].mxu0
    %v1320 = vadd.f32 %v1188, %v1319
    %1321 = vmatprep.mubr.f32.mxu0 0.0
    %1322 = vmatmul.mubr.f32.gmra.mrb[0].mxu0 %v1225
    %v1323 = vpop.f32.mrb[0].mxu0
    %v1324 = vadd.f32 %v1193, %v1323
    %v1325 = vpop.f32.mrb[0].mxu0
    %v1326 = vadd.f32 %v1193, %v1325
    %1327 = vmatprep.mubr.f32.mxu0 0.0
    %1328 = vmatmul.mubr.f32.gmra.mrb[0].mxu0 %v1228
    %v1329 = vpop.f32.mrb[0].mxu0
    %v1330 = vadd.f32 %v1198, %v1329
    %v1331 = vpop.f32.mrb[0].mxu0
    %v1332 = vadd.f32 %v1198, %v1331
    %1333 = vmatprep.mubr.f32.mxu0 0.0
    %1334 = vmatmul.mubr.f32.gmra.mrb[0].mxu0 %v1231
    %v1335 = vpop.f32.mrb[0].mxu0
    %v1336 = vadd.f32 %v1203, %v1335
    %v1337 = vpop.f32.mrb[0].mxu0
    %v1338 = vadd.f32 %v1203, %v1337
    %1339 = vmatprep.mubr.f32.mxu0 0.0
    %1340 = vmatmul.mubr.f32.gmra.mrb[0].mxu0 %v1234
    %v1341 = vpop.f32.mrb[0].mxu0
    %v1342 = vadd.f32 %v1208, %v1341
    %v1343 = vpop.f32.mrb[0].mxu0
    %v1344 = vadd.f32 %v1208, %v1343
    %1345 = vmatprep.mubr.f32.mxu0 0.0
    %1346 = vmatmul.mubr.f32.gmra.mrb[0].mxu0 %v1237
    %v1347 = vpop.f32.mrb[0].mxu0
    %v1348 = vadd.f32 %v1213, %v1347
    %v1349 = vpop.f32.mrb[0].mxu0
    %v1350 = vadd.f32 %v1213, %v1349
    %1351 = vdwg.mxu0
    %1352 = vmatprep.subr.mxu0 %v313
    %1353 = vmatpush1.msra.mxu0 %v311
    %1354 = vmatprep.subr.mxu0 0.0
    %1355 = vmatpush1.msra.mxu0 0.0
    %1356 = vmatprep.subr.mxu0 0.0
    %1357 = vmatpush1.msra.mxu0 0.0
    %1358 = vmatprep.subr.mxu0 0.0
    %1359 = vmatpush1.msra.mxu0 0.0
    %1360 = vmatprep.subr.mxu0 0.0
    %1361 = vmatpush1.msra.mxu0 0.0
    %1362 = vmatprep.subr.mxu0 0.0
    %1363 = vmatpush1.msra.mxu0 0.0
    %1364 = vmatprep.subr.mxu0 0.0
    %1365 = vmatpush1.msra.mxu0 0.0
    %1366 = vmatprep.subr.mxu0 0.0
    %1367 = vmatpush1.msra.mxu0 0.0
    %1368 = vmatprep.subr.mxu0 0.0
    %1369 = vmatpush1.msra.mxu0 0.0
    %1370 = vmatprep.subr.mxu0 0.0
    %1371 = vmatpush1.msra.mxu0 0.0
    %1372 = vmatprep.subr.mxu0 0.0
    %1373 = vmatpush1.msra.mxu0 0.0
    %1374 = vmatprep.subr.mxu0 0.0
    %1375 = vmatpush1.msra.mxu0 0.0
    %1376 = vmatprep.subr.mxu0 0.0
    %1377 = vmatpush1.msra.mxu0 0.0
    %1378 = vmatprep.subr.mxu0 0.0
    %1379 = vmatpush1.msra.mxu0 0.0
    %1380 = vmatprep.subr.mxu0 0.0
    %1381 = vmatpush1.msra.mxu0 0.0
    %1382 = vmatprep.subr.mxu0 0.0
    %1383 = vmatpush1.msra.mxu0 0.0
    %1384 = vmatprep.subr.mxu0 0.0
    %1385 = vmatpush1.msra.mxu0 0.0
    %1386 = vmatprep.subr.mxu0 0.0
    %1387 = vmatpush1.msra.mxu0 0.0
    %1388 = vmatprep.subr.mxu0 0.0
    %1389 = vmatpush1.msra.mxu0 0.0
    %1390 = vmatprep.subr.mxu0 0.0
    %1391 = vmatpush1.msra.mxu0 0.0
    %1392 = vmatprep.subr.mxu0 0.0
    %1393 = vmatpush1.msra.mxu0 0.0
    %1394 = vmatprep.subr.mxu0 0.0
    %1395 = vmatpush1.msra.mxu0 0.0
    %1396 = vmatprep.subr.mxu0 0.0
    %1397 = vmatpush1.msra.mxu0 0.0
    %1398 = vmatprep.subr.mxu0 0.0
    %1399 = vmatpush1.msra.mxu0 0.0
    %1400 = vmatprep.subr.mxu0 0.0
    %1401 = vmatpush1.msra.mxu0 0.0
    %1402 = vmatprep.subr.mxu0 0.0
    %1403 = vmatpush1.msra.mxu0 0.0
    %1404 = vmatprep.subr.mxu0 0.0
    %1405 = vmatpush1.msra.mxu0 0.0
    %1406 = vmatprep.subr.mxu0 0.0
    %1407 = vmatpush1.msra.mxu0 0.0
    %1408 = vmatprep.subr.mxu0 0.0
    %1409 = vmatpush1.msra.mxu0 0.0
    %1410 = vmatprep.subr.mxu0 0.0
    %1411 = vmatpush1.msra.mxu0 0.0
    %1412 = vmatprep.subr.mxu0 0.0
    %1413 = vmatpush1.msra.mxu0 0.0
    %1414 = vmatprep.subr.mxu0 0.0
    %1415 = vmatpush1.msra.mxu0 0.0
    %1416 = vmatprep.mubr.f32.mxu0 0.0
    %1417 = vmatmul.mubr.f32.gmra.mrb[0].mxu0 %v1216
    %v1418 = vpop.f32.mrb[0].mxu0
    %v1419 = vadd.f32 %v1178, %v1418
    %v1420 = vpop.f32.mrb[0].mxu0
    %v1421 = vadd.f32 %v1178, %v1420
    %1422 = vmatprep.mubr.f32.mxu0 0.0
    %1423 = vmatmul.mubr.f32.gmra.mrb[0].mxu0 %v1219
    %v1424 = vpop.f32.mrb[0].mxu0
    %v1425 = vadd.f32 %v1183, %v1424
    %v1426 = vpop.f32.mrb[0].mxu0
    %v1427 = vadd.f32 %v1183, %v1426
    %1428 = vmatprep.mubr.f32.mxu0 0.0
    %1429 = vmatmul.mubr.f32.gmra.mrb[0].mxu0 %v1222
    %v1430 = vpop.f32.mrb[0].mxu0
    %v1431 = vadd.f32 %v1188, %v1430
    %v1432 = vpop.f32.mrb[0].mxu0
    %v1433 = vadd.f32 %v1188, %v1432
    %1434 = vmatprep.mubr.f32.mxu0 0.0
    %1435 = vmatmul.mubr.f32.gmra.mrb[0].mxu0 %v1225
    %v1436 = vpop.f32.mrb[0].mxu0
    %v1437 = vadd.f32 %v1193, %v1436
    %v1438 = vpop.f32.mrb[0].mxu0
    %v1439 = vadd.f32 %v1193, %v1438
    %1440 = vmatprep.mubr.f32.mxu0 0.0
    %1441 = vmatmul.mubr.f32.gmra.mrb[0].mxu0 %v1228
    %v1442 = vpop.f32.mrb[0].mxu0
    %v1443 = vadd.f32 %v1198, %v1442
    %v1444 = vpop.f32.mrb[0].mxu0
    %v1445 = vadd.f32 %v1198, %v1444
    %1446 = vmatprep.mubr.f32.mxu0 0.0
    %1447 = vmatmul.mubr.f32.gmra.mrb[0].mxu0 %v1231
    %v1448 = vpop.f32.mrb[0].mxu0
    %v1449 = vadd.f32 %v1203, %v1448
    %v1450 = vpop.f32.mrb[0].mxu0
    %v1451 = vadd.f32 %v1203, %v1450
    %1452 = vmatprep.mubr.f32.mxu0 0.0
    %1453 = vmatmul.mubr.f32.gmra.mrb[0].mxu0 %v1234
    %v1454 = vpop.f32.mrb[0].mxu0
    %v1455 = vadd.f32 %v1208, %v1454
    %v1456 = vpop.f32.mrb[0].mxu0
    %v1457 = vadd.f32 %v1208, %v1456
    %1458 = vmatprep.mubr.f32.mxu0 0.0
    %1459 = vmatmul.mubr.f32.gmra.mrb[0].mxu0 %v1237
    %v1460 = vpop.f32.mrb[0].mxu0
    %v1461 = vadd.f32 %v1213, %v1460
    %v1462 = vpop.f32.mrb[0].mxu0
    %v1463 = vadd.f32 %v1213, %v1462
    %1464 = vdwg.mxu0
    %1465 = vmatprep.subr.mxu0 %v317
    %1466 = vmatpush1.msra.mxu0 %v315
    %1467 = vmatprep.subr.mxu0 0.0
    %1468 = vmatpush1.msra.mxu0 0.0
    %1469 = vmatprep.subr.mxu0 0.0
    %1470 = vmatpush1.msra.mxu0 0.0
    %1471 = vmatprep.subr.mxu0 0.0
    %1472 = vmatpush1.msra.mxu0 0.0
    %1473 = vmatprep.subr.mxu0 0.0
    %1474 = vmatpush1.msra.mxu0 0.0
    %1475 = vmatprep.subr.mxu0 0.0
    %1476 = vmatpush1.msra.mxu0 0.0
    %1477 = vmatprep.subr.mxu0 0.0
    %1478 = vmatpush1.msra.mxu0 0.0
    %1479 = vmatprep.subr.mxu0 0.0
    %1480 = vmatpush1.msra.mxu0 0.0
    %1481 = vmatprep.subr.mxu0 0.0
    %1482 = vmatpush1.msra.mxu0 0.0
    %1483 = vmatprep.subr.mxu0 0.0
    %1484 = vmatpush1.msra.mxu0 0.0
    %1485 = vmatprep.subr.mxu0 0.0
    %1486 = vmatpush1.msra.mxu0 0.0
    %1487 = vmatprep.subr.mxu0 0.0
    %1488 = vmatpush1.msra.mxu0 0.0
    %1489 = vmatprep.subr.mxu0 0.0
    %1490 = vmatpush1.msra.mxu0 0.0
    %1491 = vmatprep.subr.mxu0 0.0
    %1492 = vmatpush1.msra.mxu0 0.0
    %1493 = vmatprep.subr.mxu0 0.0
    %1494 = vmatpush1.msra.mxu0 0.0
    %1495 = vmatprep.subr.mxu0 0.0
    %1496 = vmatpush1.msra.mxu0 0.0
    %1497 = vmatprep.subr.mxu0 0.0
    %1498 = vmatpush1.msra.mxu0 0.0
    %1499 = vmatprep.subr.mxu0 0.0
    %1500 = vmatpush1.msra.mxu0 0.0
    %1501 = vmatprep.subr.mxu0 0.0
    %1502 = vmatpush1.msra.mxu0 0.0
    %1503 = vmatprep.subr.mxu0 0.0
    %1504 = vmatpush1.msra.mxu0 0.0
    %1505 = vmatprep.subr.mxu0 0.0
    %1506 = vmatpush1.msra.mxu0 0.0
    %1507 = vmatprep.subr.mxu0 0.0
    %1508 = vmatpush1.msra.mxu0 0.0
    %1509 = vmatprep.subr.mxu0 0.0
    %1510 = vmatpush1.msra.mxu0 0.0
    %1511 = vmatprep.subr.mxu0 0.0
    %1512 = vmatpush1.msra.mxu0 0.0
    %1513 = vmatprep.subr.mxu0 0.0
    %1514 = vmatpush1.msra.mxu0 0.0
    %1515 = vmatprep.subr.mxu0 0.0
    %1516 = vmatpush1.msra.mxu0 0.0
    %1517 = vmatprep.subr.mxu0 0.0
    %1518 = vmatpush1.msra.mxu0 0.0
    %1519 = vmatprep.subr.mxu0 0.0
    %1520 = vmatpush1.msra.mxu0 0.0
    %1521 = vmatprep.subr.mxu0 0.0
    %1522 = vmatpush1.msra.mxu0 0.0
    %1523 = vmatprep.subr.mxu0 0.0
    %1524 = vmatpush1.msra.mxu0 0.0
    %1525 = vmatprep.subr.mxu0 0.0
    %1526 = vmatpush1.msra.mxu0 0.0
    %1527 = vmatprep.subr.mxu0 0.0
    %1528 = vmatpush1.msra.mxu0 0.0
    %1529 = vmatprep.mubr.f32.mxu0 0.0
    %1530 = vmatmul.mubr.f32.gmra.mrb[0].mxu0 %v1216
    %v1531 = vpop.f32.mrb[0].mxu0
    %v1532 = vadd.f32 %v1178, %v1531
    %v1533 = vpop.f32.mrb[0].mxu0
    %v1534 = vadd.f32 %v1178, %v1533
    %1535 = vmatprep.mubr.f32.mxu0 0.0
    %1536 = vmatmul.mubr.f32.gmra.mrb[0].mxu0 %v1219
    %v1537 = vpop.f32.mrb[0].mxu0
    %v1538 = vadd.f32 %v1183, %v1537
    %v1539 = vpop.f32.mrb[0].mxu0
    %v1540 = vadd.f32 %v1183, %v1539
    %1541 = vmatprep.mubr.f32.mxu0 0.0
    %1542 = vmatmul.mubr.f32.gmra.mrb[0].mxu0 %v1222
    %v1543 = vpop.f32.mrb[0].mxu0
    %v1544 = vadd.f32 %v1188, %v1543
    %v1545 = vpop.f32.mrb[0].mxu0
    %v1546 = vadd.f32 %v1188, %v1545
    %1547 = vmatprep.mubr.f32.mxu0 0.0
    %1548 = vmatmul.mubr.f32.gmra.mrb[0].mxu0 %v1225
    %v1549 = vpop.f32.mrb[0].mxu0
    %v1550 = vadd.f32 %v1193, %v1549
    %v1551 = vpop.f32.mrb[0].mxu0
    %v1552 = vadd.f32 %v1193, %v1551
    %1553 = vmatprep.mubr.f32.mxu0 0.0
    %1554 = vmatmul.mubr.f32.gmra.mrb[0].mxu0 %v1228
    %v1555 = vpop.f32.mrb[0].mxu0
    %v1556 = vadd.f32 %v1198, %v1555
    %v1557 = vpop.f32.mrb[0].mxu0
    %v1558 = vadd.f32 %v1198, %v1557
    %1559 = vmatprep.mubr.f32.mxu0 0.0
    %1560 = vmatmul.mubr.f32.gmra.mrb[0].mxu0 %v1231
    %v1561 = vpop.f32.mrb[0].mxu0
    %v1562 = vadd.f32 %v1203, %v1561
    %v1563 = vpop.f32.mrb[0].mxu0
    %v1564 = vadd.f32 %v1203, %v1563
    %1565 = vmatprep.mubr.f32.mxu0 0.0
    %1566 = vmatmul.mubr.f32.gmra.mrb[0].mxu0 %v1234
    %v1567 = vpop.f32.mrb[0].mxu0
    %v1568 = vadd.f32 %v1208, %v1567
    %v1569 = vpop.f32.mrb[0].mxu0
    %v1570 = vadd.f32 %v1208, %v1569
    %1571 = vmatprep.mubr.f32.mxu0 0.0
    %1572 = vmatmul.mubr.f32.gmra.mrb[0].mxu0 %v1237
    %v1573 = vpop.f32.mrb[0].mxu0
    %v1574 = vadd.f32 %v1213, %v1573
    %v1575 = vpop.f32.mrb[0].mxu0
    %v1576 = vadd.f32 %v1213, %v1575
    %1577 = vdwg.mxu0
    %1578 = vmatprep.subr.mxu0 %v321
    %1579 = vmatpush1.msra.mxu0 %v319
    %1580 = vmatprep.subr.mxu0 0.0
    %1581 = vmatpush1.msra.mxu0 0.0
    %1582 = vmatprep.subr.mxu0 0.0
    %1583 = vmatpush1.msra.mxu0 0.0
    %1584 = vmatprep.subr.mxu0 0.0
    %1585 = vmatpush1.msra.mxu0 0.0
    %1586 = vmatprep.subr.mxu0 0.0
    %1587 = vmatpush1.msra.mxu0 0.0
    %1588 = vmatprep.subr.mxu0 0.0
    %1589 = vmatpush1.msra.mxu0 0.0
    %1590 = vmatprep.subr.mxu0 0.0
    %1591 = vmatpush1.msra.mxu0 0.0
    %1592 = vmatprep.subr.mxu0 0.0
    %1593 = vmatpush1.msra.mxu0 0.0
    %1594 = vmatprep.subr.mxu0 0.0
    %1595 = vmatpush1.msra.mxu0 0.0
    %1596 = vmatprep.subr.mxu0 0.0
    %1597 = vmatpush1.msra.mxu0 0.0
    %1598 = vmatprep.subr.mxu0 0.0
    %1599 = vmatpush1.msra.mxu0 0.0
    %1600 = vmatprep.subr.mxu0 0.0
    %1601 = vmatpush1.msra.mxu0 0.0
    %1602 = vmatprep.subr.mxu0 0.0
    %1603 = vmatpush1.msra.mxu0 0.0
    %1604 = vmatprep.subr.mxu0 0.0
    %1605 = vmatpush1.msra.mxu0 0.0
    %1606 = vmatprep.subr.mxu0 0.0
    %1607 = vmatpush1.msra.mxu0 0.0
    %1608 = vmatprep.subr.mxu0 0.0
    %1609 = vmatpush1.msra.mxu0 0.0
    %1610 = vmatprep.subr.mxu0 0.0
    %1611 = vmatpush1.msra.mxu0 0.0
    %1612 = vmatprep.subr.mxu0 0.0
    %1613 = vmatpush1.msra.mxu0 0.0
    %1614 = vmatprep.subr.mxu0 0.0
    %1615 = vmatpush1.msra.mxu0 0.0
    %1616 = vmatprep.subr.mxu0 0.0
    %1617 = vmatpush1.msra.mxu0 0.0
    %1618 = vmatprep.subr.mxu0 0.0
    %1619 = vmatpush1.msra.mxu0 0.0
    %1620 = vmatprep.subr.mxu0 0.0
    %1621 = vmatpush1.msra.mxu0 0.0
    %1622 = vmatprep.subr.mxu0 0.0
    %1623 = vmatpush1.msra.mxu0 0.0
    %1624 = vmatprep.subr.mxu0 0.0
    %1625 = vmatpush1.msra.mxu0 0.0
    %1626 = vmatprep.subr.mxu0 0.0
    %1627 = vmatpush1.msra.mxu0 0.0
    %1628 = vmatprep.subr.mxu0 0.0
    %1629 = vmatpush1.msra.mxu0 0.0
    %1630 = vmatprep.subr.mxu0 0.0
    %1631 = vmatpush1.msra.mxu0 0.0
    %1632 = vmatprep.subr.mxu0 0.0
    %1633 = vmatpush1.msra.mxu0 0.0
    %1634 = vmatprep.subr.mxu0 0.0
    %1635 = vmatpush1.msra.mxu0 0.0
    %1636 = vmatprep.subr.mxu0 0.0
    %1637 = vmatpush1.msra.mxu0 0.0
    %1638 = vmatprep.subr.mxu0 0.0
    %1639 = vmatpush1.msra.mxu0 0.0
    %1640 = vmatprep.subr.mxu0 0.0
    %1641 = vmatpush1.msra.mxu0 0.0
    %1642 = vmatprep.mubr.f32.mxu0 0.0
    %1643 = vmatmul.mubr.f32.gmra.mrb[0].mxu0 %v1216
    %v1644 = vpop.f32.mrb[0].mxu0
    %v1645 = vadd.f32 %v1178, %v1644
    %v1646 = vpop.f32.mrb[0].mxu0
    %v1647 = vadd.f32 %v1178, %v1646
    %1648 = vmatprep.mubr.f32.mxu0 0.0
    %1649 = vmatmul.mubr.f32.gmra.mrb[0].mxu0 %v1219
    %v1650 = vpop.f32.mrb[0].mxu0
    %v1651 = vadd.f32 %v1183, %v1650
    %v1652 = vpop.f32.mrb[0].mxu0
    %v1653 = vadd.f32 %v1183, %v1652
    %1654 = vmatprep.mubr.f32.mxu0 0.0
    %1655 = vmatmul.mubr.f32.gmra.mrb[0].mxu0 %v1222
    %v1656 = vpop.f32.mrb[0].mxu0
    %v1657 = vadd.f32 %v1188, %v1656
    %v1658 = vpop.f32.mrb[0].mxu0
    %v1659 = vadd.f32 %v1188, %v1658
    %1660 = vmatprep.mubr.f32.mxu0 0.0
    %1661 = vmatmul.mubr.f32.gmra.mrb[0].mxu0 %v1225
    %v1662 = vpop.f32.mrb[0].mxu0
    %v1663 = vadd.f32 %v1193, %v1662
    %v1664 = vpop.f32.mrb[0].mxu0
    %v1665 = vadd.f32 %v1193, %v1664
    %1666 = vmatprep.mubr.f32.mxu0 0.0
    %1667 = vmatmul.mubr.f32.gmra.mrb[0].mxu0 %v1228
    %v1668 = vpop.f32.mrb[0].mxu0
    %v1669 = vadd.f32 %v1198, %v1668
    %v1670 = vpop.f32.mrb[0].mxu0
    %v1671 = vadd.f32 %v1198, %v1670
    %1672 = vmatprep.mubr.f32.mxu0 0.0
    %1673 = vmatmul.mubr.f32.gmra.mrb[0].mxu0 %v1231
    %v1674 = vpop.f32.mrb[0].mxu0
    %v1675 = vadd.f32 %v1203, %v1674
    %v1676 = vpop.f32.mrb[0].mxu0
    %v1677 = vadd.f32 %v1203, %v1676
    %1678 = vmatprep.mubr.f32.mxu0 0.0
    %1679 = vmatmul.mubr.f32.gmra.mrb[0].mxu0 %v1234
    %v1680 = vpop.f32.mrb[0].mxu0
    %v1681 = vadd.f32 %v1208, %v1680
    %v1682 = vpop.f32.mrb[0].mxu0
    %v1683 = vadd.f32 %v1208, %v1682
    %1684 = vmatprep.mubr.f32.mxu0 0.0
    %1685 = vmatmul.mubr.f32.gmra.mrb[0].mxu0 %v1237
    %v1686 = vpop.f32.mrb[0].mxu0
    %v1687 = vadd.f32 %v1213, %v1686
    %v1688 = vpop.f32.mrb[0].mxu0
    %v1689 = vadd.f32 %v1213, %v1688
    %1690 = vdwg.mxu0
    %v1691 = vtanh.pop %v1306
    %v1692 = vtanh.pop %v1308
    %v1693 = vtanh.pop %v1419
    %v1694 = vtanh.pop %v1421
    %v1695 = vtanh.pop %v1532
    %v1696 = vtanh.pop %v1534
    %v1697 = vtanh.pop %v1645
    %v1698 = vtanh.pop %v1647
    %v1699 = vtanh.pop %v1312
    %v1700 = vtanh.pop %v1314
    %v1701 = vtanh.pop %v1425
    %v1702 = vtanh.pop %v1427
    %v1703 = vtanh.pop %v1538
    %v1704 = vtanh.pop %v1540
    %v1705 = vtanh.pop %v1651
    %v1706 = vtanh.pop %v1653
    %v1707 = vtanh.pop %v1318
    %v1708 = vtanh.pop %v1320
    %v1709 = vtanh.pop %v1431
    %v1710 = vtanh.pop %v1433
    %v1711 = vtanh.pop %v1544
    %v1712 = vtanh.pop %v1546
    %v1713 = vtanh.pop %v1657
    %v1714 = vtanh.pop %v1659
    %v1715 = vtanh.pop %v1324
    %v1716 = vtanh.pop %v1326
    %v1717 = vtanh.pop %v1437
    %v1718 = vtanh.pop %v1439
    %v1719 = vtanh.pop %v1550
    %v1720 = vtanh.pop %v1552
    %v1721 = vtanh.pop %v1663
    %v1722 = vtanh.pop %v1665
    %v1723 = vtanh.pop %v1330
    %v1724 = vtanh.pop %v1332
    %v1725 = vtanh.pop %v1443
    %v1726 = vtanh.pop %v1445
    %v1727 = vtanh.pop %v1556
    %v1728 = vtanh.pop %v1558
    %v1729 = vtanh.pop %v1669
    %v1730 = vtanh.pop %v1671
    %v1731 = vtanh.pop %v1336
    %v1732 = vtanh.pop %v1338
    %v1733 = vtanh.pop %v1449
    %v1734 = vtanh.pop %v1451
    %v1735 = vtanh.pop %v1562
    %v1736 = vtanh.pop %v1564
    %v1737 = vtanh.pop %v1675
    %v1738 = vtanh.pop %v1677
    %v1739 = vtanh.pop %v1342
    %v1740 = vtanh.pop %v1344
    %v1741 = vtanh.pop %v1455
    %v1742 = vtanh.pop %v1457
    %v1743 = vtanh.pop %v1568
    %v1744 = vtanh.pop %v1570
    %v1745 = vtanh.pop %v1681
    %v1746 = vtanh.pop %v1683
    %v1747 = vtanh.pop %v1348
    %v1748 = vtanh.pop %v1350
    %v1749 = vtanh.pop %v1461
    %v1750 = vtanh.pop %v1463
    %v1751 = vtanh.pop %v1574
    %v1752 = vtanh.pop %v1576
    %v1753 = vtanh.pop %v1687
    %v1754 = vtanh.pop %v1689
    %v1755 = vmul.f32 %v1691, %v1095
    %v1756 = vmul.f32 %v1692, %v1096
    %v1757 = vmul.f32 %v1693, %v1097
    %v1758 = vmul.f32 %v1694, %v1098
    %v1759 = vmul.f32 %v1695, %v1099
    %v1760 = vmul.f32 %v1696, %v1100
    %v1761 = vmul.f32 %v1697, %v1101
    %v1762 = vmul.f32 %v1698, %v1102
    %v1763 = vmul.f32 %v1699, %v1103
    %v1764 = vmul.f32 %v1700, %v1104
    %v1765 = vmul.f32 %v1701, %v1105
    %v1766 = vmul.f32 %v1702, %v1106
    %v1767 = vmul.f32 %v1703, %v1107
    %v1768 = vmul.f32 %v1704, %v1108
    %v1769 = vmul.f32 %v1705, %v1109
    %v1770 = vmul.f32 %v1706, %v1110
    %v1771 = vmul.f32 %v1707, %v1111
    %v1772 = vmul.f32 %v1708, %v1112
    %v1773 = vmul.f32 %v1709, %v1113
    %v1774 = vmul.f32 %v1710, %v1114
    %v1775 = vmul.f32 %v1711, %v1115
    %v1776 = vmul.f32 %v1712, %v1116
    %v1777 = vmul.f32 %v1713, %v1117
    %v1778 = vmul.f32 %v1714, %v1118
    %v1779 = vmul.f32 %v1715, %v1119
    %v1780 = vmul.f32 %v1716, %v1120
    %v1781 = vmul.f32 %v1717, %v1121
    %v1782 = vmul.f32 %v1718, %v1122
    %v1783 = vmul.f32 %v1719, %v1123
    %v1784 = vmul.f32 %v1720, %v1124
    %v1785 = vmul.f32 %v1721, %v1125
    %v1786 = vmul.f32 %v1722, %v1126
    %v1787 = vmul.f32 %v1723, %v1127
    %v1788 = vmul.f32 %v1724, %v1128
    %v1789 = vmul.f32 %v1725, %v1129
    %v1790 = vmul.f32 %v1726, %v1130
    %v1791 = vmul.f32 %v1727, %v1131
    %v1792 = vmul.f32 %v1728, %v1132
    %v1793 = vmul.f32 %v1729, %v1133
    %v1794 = vmul.f32 %v1730, %v1134
    %v1795 = vmul.f32 %v1731, %v1135
    %v1796 = vmul.f32 %v1732, %v1136
    %v1797 = vmul.f32 %v1733, %v1137
    %v1798 = vmul.f32 %v1734, %v1138
    %v1799 = vmul.f32 %v1735, %v1139
    %v1800 = vmul.f32 %v1736, %v1140
    %v1801 = vmul.f32 %v1737, %v1141
    %v1802 = vmul.f32 %v1738, %v1142
    %v1803 = vmul.f32 %v1739, %v1143
    %v1804 = vmul.f32 %v1740, %v1144
    %v1805 = vmul.f32 %v1741, %v1145
    %v1806 = vmul.f32 %v1742, %v1146
    %v1807 = vmul.f32 %v1743, %v1147
    %v1808 = vmul.f32 %v1744, %v1148
    %v1809 = vmul.f32 %v1745, %v1149
    %v1810 = vmul.f32 %v1746, %v1150
    %v1811 = vmul.f32 %v1747, %v1151
    %v1812 = vmul.f32 %v1748, %v1152
    %v1813 = vmul.f32 %v1749, %v1153
    %v1814 = vmul.f32 %v1750, %v1154
    %v1815 = vmul.f32 %v1751, %v1155
    %v1816 = vmul.f32 %v1752, %v1156
    %v1817 = vmul.f32 %v1753, %v1157
    %v1818 = vmul.f32 %v1754, %v1158
    %v1819 = vadd.f32 %v1031, %v1755
    %v1820 = vadd.f32 %v1032, %v1756
    %v1821 = vadd.f32 %v1033, %v1757
    %v1822 = vadd.f32 %v1034, %v1758
    %v1823 = vadd.f32 %v1035, %v1759
    %v1824 = vadd.f32 %v1036, %v1760
    %v1825 = vadd.f32 %v1037, %v1761
    %v1826 = vadd.f32 %v1038, %v1762
    %v1827 = vadd.f32 %v1039, %v1763
    %v1828 = vadd.f32 %v1040, %v1764
    %v1829 = vadd.f32 %v1041, %v1765
    %v1830 = vadd.f32 %v1042, %v1766
    %v1831 = vadd.f32 %v1043, %v1767
    %v1832 = vadd.f32 %v1044, %v1768
    %v1833 = vadd.f32 %v1045, %v1769
    %v1834 = vadd.f32 %v1046, %v1770
    %v1835 = vadd.f32 %v1047, %v1771
    %v1836 = vadd.f32 %v1048, %v1772
    %v1837 = vadd.f32 %v1049, %v1773
    %v1838 = vadd.f32 %v1050, %v1774
    %v1839 = vadd.f32 %v1051, %v1775
    %v1840 = vadd.f32 %v1052, %v1776
    %v1841 = vadd.f32 %v1053, %v1777
    %v1842 = vadd.f32 %v1054, %v1778
    %v1843 = vadd.f32 %v1055, %v1779
    %v1844 = vadd.f32 %v1056, %v1780
    %v1845 = vadd.f32 %v1057, %v1781
    %v1846 = vadd.f32 %v1058, %v1782
    %v1847 = vadd.f32 %v1059, %v1783
    %v1848 = vadd.f32 %v1060, %v1784
    %v1849 = vadd.f32 %v1061, %v1785
    %v1850 = vadd.f32 %v1062, %v1786
    %v1851 = vadd.f32 %v1063, %v1787
    %v1852 = vadd.f32 %v1064, %v1788
    %v1853 = vadd.f32 %v1065, %v1789
    %v1854 = vadd.f32 %v1066, %v1790
    %v1855 = vadd.f32 %v1067, %v1791
    %v1856 = vadd.f32 %v1068, %v1792
    %v1857 = vadd.f32 %v1069, %v1793
    %v1858 = vadd.f32 %v1070, %v1794
    %v1859 = vadd.f32 %v1071, %v1795
    %v1860 = vadd.f32 %v1072, %v1796
    %v1861 = vadd.f32 %v1073, %v1797
    %v1862 = vadd.f32 %v1074, %v1798
    %v1863 = vadd.f32 %v1075, %v1799
    %v1864 = vadd.f32 %v1076, %v1800
    %v1865 = vadd.f32 %v1077, %v1801
    %v1866 = vadd.f32 %v1078, %v1802
    %v1867 = vadd.f32 %v1079, %v1803
    %v1868 = vadd.f32 %v1080, %v1804
    %v1869 = vadd.f32 %v1081, %v1805
    %v1870 = vadd.f32 %v1082, %v1806
    %v1871 = vadd.f32 %v1083, %v1807
    %v1872 = vadd.f32 %v1084, %v1808
    %v1873 = vadd.f32 %v1085, %v1809
    %v1874 = vadd.f32 %v1086, %v1810
    %v1875 = vadd.f32 %v1087, %v1811
    %v1876 = vadd.f32 %v1088, %v1812
    %v1877 = vadd.f32 %v1089, %v1813
    %v1878 = vadd.f32 %v1090, %v1814
    %v1879 = vadd.f32 %v1091, %v1815
    %v1880 = vadd.f32 %v1092, %v1816
    %v1881 = vadd.f32 %v1093, %v1817
    %v1882 = vadd.f32 %v1094, %v1818
    %v1883 = vld [vmem:[#allocation10] sm:$0xff]
    %v1884 = vld [vmem:[#allocation10 + $0x8] sm:$0xff]
    %v1885 = vld [vmem:[#allocation10 + $0x10] sm:$0xff]
    %v1886 = vld [vmem:[#allocation10 + $0x18] sm:$0xff]
    %v1887 = vld [vmem:[#allocation10 + $0x20] sm:$0xff]
    %v1888 = vld [vmem:[#allocation10 + $0x28] sm:$0xff]
    %v1889 = vld [vmem:[#allocation10 + $0x30] sm:$0xff]
    %v1890 = vld [vmem:[#allocation10 + $0x38] sm:$0xff]
    %s1891 = scalar_lea.vmem [#allocation11], 64
    %v1892 = vld [vmem:[%s1891] sm:$0xff]
    %v1893 = vld [vmem:[%s1891 + $0x8] sm:$0xff]
    %v1894 = vld [vmem:[%s1891 + $0x10] sm:$0xff]
    %v1895 = vld [vmem:[%s1891 + $0x18] sm:$0xff]
    %v1896 = vld [vmem:[%s1891 + $0x20] sm:$0xff]
    %v1897 = vld [vmem:[%s1891 + $0x28] sm:$0xff]
    %v1898 = vld [vmem:[%s1891 + $0x30] sm:$0xff]
    %v1899 = vld [vmem:[%s1891 + $0x38] sm:$0xff]
    %1901 = vset.pattern.permute.xlu0 0
    %1902 = vperm.xlu0 %1901, %v1892
    %v1903 = vpop.permute.xlu0 %1902
    %1906 = vset.pattern.permute.xlu0 0
    %1907 = vperm.xlu0 %1906, %v1893
    %v1908 = vpop.permute.xlu0 %1907
    %1911 = vset.pattern.permute.xlu0 0
    %1912 = vperm.xlu0 %1911, %v1894
    %v1913 = vpop.permute.xlu0 %1912
    %1916 = vset.pattern.permute.xlu0 0
    %1917 = vperm.xlu0 %1916, %v1895
    %v1918 = vpop.permute.xlu0 %1917
    %1921 = vset.pattern.permute.xlu0 0
    %1922 = vperm.xlu0 %1921, %v1896
    %v1923 = vpop.permute.xlu0 %1922
    %1926 = vset.pattern.permute.xlu0 0
    %1927 = vperm.xlu0 %1926, %v1897
    %v1928 = vpop.permute.xlu0 %1927
    %1931 = vset.pattern.permute.xlu0 0
    %1932 = vperm.xlu0 %1931, %v1898
    %v1933 = vpop.permute.xlu0 %1932
    %1936 = vset.pattern.permute.xlu0 0
    %1937 = vperm.xlu0 %1936, %v1899
    %v1938 = vpop.permute.xlu0 %1937
    %vm1940 = vcmask 523264
    %v1942 = vsel %vm1940, %v1883, 0
    %v1945 = vsel %vm1940, %v1884, 0
    %v1948 = vsel %vm1940, %v1885, 0
    %v1951 = vsel %vm1940, %v1886, 0
    %v1954 = vsel %vm1940, %v1887, 0
    %v1957 = vsel %vm1940, %v1888, 0
    %v1960 = vsel %vm1940, %v1889, 0
    %v1963 = vsel %vm1940, %v1890, 0
    %1965 = vmatprep.subr.mxu0 %v1820
    %1966 = vmatpush1.msra.mxu0 %v1819
    %1967 = vmatprep.subr.mxu0 %v1828
    %1968 = vmatpush1.msra.mxu0 %v1827
    %1969 = vmatprep.subr.mxu0 %v1836
    %1970 = vmatpush1.msra.mxu0 %v1835
    %1971 = vmatprep.subr.mxu0 %v1844
    %1972 = vmatpush1.msra.mxu0 %v1843
    %1973 = vmatprep.subr.mxu0 %v1852
    %1974 = vmatpush1.msra.mxu0 %v1851
    %1975 = vmatprep.subr.mxu0 %v1860
    %1976 = vmatpush1.msra.mxu0 %v1859
    %1977 = vmatprep.subr.mxu0 %v1868
    %1978 = vmatpush1.msra.mxu0 %v1867
    %1979 = vmatprep.subr.mxu0 %v1876
    %1980 = vmatpush1.msra.mxu0 %v1875
    %1981 = vmatprep.subr.mxu0 0.0
    %1982 = vmatpush1.msra.mxu0 0.0
    %1983 = vmatprep.subr.mxu0 0.0
    %1984 = vmatpush1.msra.mxu0 0.0
    %1985 = vmatprep.subr.mxu0 0.0
    %1986 = vmatpush1.msra.mxu0 0.0
    %1987 = vmatprep.subr.mxu0 0.0
    %1988 = vmatpush1.msra.mxu0 0.0
    %1989 = vmatprep.subr.mxu0 0.0
    %1990 = vmatpush1.msra.mxu0 0.0
    %1991 = vmatprep.subr.mxu0 0.0
    %1992 = vmatpush1.msra.mxu0 0.0
    %1993 = vmatprep.subr.mxu0 0.0
    %1994 = vmatpush1.msra.mxu0 0.0
    %1995 = vmatprep.subr.mxu0 0.0
    %1996 = vmatpush1.msra.mxu0 0.0
    %1997 = vmatprep.subr.mxu0 0.0
    %1998 = vmatpush1.msra.mxu0 0.0
    %1999 = vmatprep.subr.mxu0 0.0
    %2000 = vmatpush1.msra.mxu0 0.0
    %2001 = vmatprep.subr.mxu0 0.0
    %2002 = vmatpush1.msra.mxu0 0.0
    %2003 = vmatprep.subr.mxu0 0.0
    %2004 = vmatpush1.msra.mxu0 0.0
    %2005 = vmatprep.subr.mxu0 0.0
    %2006 = vmatpush1.msra.mxu0 0.0
    %2007 = vmatprep.subr.mxu0 0.0
    %2008 = vmatpush1.msra.mxu0 0.0
    %2009 = vmatprep.subr.mxu0 0.0
    %2010 = vmatpush1.msra.mxu0 0.0
    %2011 = vmatprep.subr.mxu0 0.0
    %2012 = vmatpush1.msra.mxu0 0.0
    %2013 = vmatprep.subr.mxu0 0.0
    %2014 = vmatpush1.msra.mxu0 0.0
    %2015 = vmatprep.subr.mxu0 0.0
    %2016 = vmatpush1.msra.mxu0 0.0
    %2017 = vmatprep.subr.mxu0 0.0
    %2018 = vmatpush1.msra.mxu0 0.0
    %2019 = vmatprep.subr.mxu0 0.0
    %2020 = vmatpush1.msra.mxu0 0.0
    %2021 = vmatprep.subr.mxu0 0.0
    %2022 = vmatpush1.msra.mxu0 0.0
    %2023 = vmatprep.subr.mxu0 0.0
    %2024 = vmatpush1.msra.mxu0 0.0
    %2025 = vmatprep.subr.mxu0 0.0
    %2026 = vmatpush1.msra.mxu0 0.0
    %2027 = vmatprep.subr.mxu0 0.0
    %2028 = vmatpush1.msra.mxu0 0.0
    %2029 = vmatprep.mubr.f32.mxu0 0.0
    %2030 = vmatmul.mubr.f32.gmra.mrb[0].mxu0 %v1942
    %v2031 = vpop.f32.mrb[0].mxu0
    %v2032 = vadd.f32 %v1903, %v2031
    %v2033 = vpop.f32.mrb[0].mxu0
    %v2034 = vadd.f32 %v1903, %v2033
    %2035 = vmatprep.mubr.f32.mxu0 0.0
    %2036 = vmatmul.mubr.f32.gmra.mrb[0].mxu0 %v1945
    %v2037 = vpop.f32.mrb[0].mxu0
    %v2038 = vadd.f32 %v1908, %v2037
    %v2039 = vpop.f32.mrb[0].mxu0
    %v2040 = vadd.f32 %v1908, %v2039
    %2041 = vmatprep.mubr.f32.mxu0 0.0
    %2042 = vmatmul.mubr.f32.gmra.mrb[0].mxu0 %v1948
    %v2043 = vpop.f32.mrb[0].mxu0
    %v2044 = vadd.f32 %v1913, %v2043
    %v2045 = vpop.f32.mrb[0].mxu0
    %v2046 = vadd.f32 %v1913, %v2045
    %2047 = vmatprep.mubr.f32.mxu0 0.0
    %2048 = vmatmul.mubr.f32.gmra.mrb[0].mxu0 %v1951
    %v2049 = vpop.f32.mrb[0].mxu0
    %v2050 = vadd.f32 %v1918, %v2049
    %v2051 = vpop.f32.mrb[0].mxu0
    %v2052 = vadd.f32 %v1918, %v2051
    %2053 = vmatprep.mubr.f32.mxu0 0.0
    %2054 = vmatmul.mubr.f32.gmra.mrb[0].mxu0 %v1954
    %v2055 = vpop.f32.mrb[0].mxu0
    %v2056 = vadd.f32 %v1923, %v2055
    %v2057 = vpop.f32.mrb[0].mxu0
    %v2058 = vadd.f32 %v1923, %v2057
    %2059 = vmatprep.mubr.f32.mxu0 0.0
    %2060 = vmatmul.mubr.f32.gmra.mrb[0].mxu0 %v1957
    %v2061 = vpop.f32.mrb[0].mxu0
    %v2062 = vadd.f32 %v1928, %v2061
    %v2063 = vpop.f32.mrb[0].mxu0
    %v2064 = vadd.f32 %v1928, %v2063
    %2065 = vmatprep.mubr.f32.mxu0 0.0
    %2066 = vmatmul.mubr.f32.gmra.mrb[0].mxu0 %v1960
    %v2067 = vpop.f32.mrb[0].mxu0
    %v2068 = vadd.f32 %v1933, %v2067
    %v2069 = vpop.f32.mrb[0].mxu0
    %v2070 = vadd.f32 %v1933, %v2069
    %2071 = vmatprep.mubr.f32.mxu0 0.0
    %2072 = vmatmul.mubr.f32.gmra.mrb[0].mxu0 %v1963
    %v2073 = vpop.f32.mrb[0].mxu0
    %v2074 = vadd.f32 %v1938, %v2073
    %v2075 = vpop.f32.mrb[0].mxu0
    %v2076 = vadd.f32 %v1938, %v2075
    %2077 = vdwg.mxu0
    %2078 = vmatprep.subr.mxu0 %v1822
    %2079 = vmatpush1.msra.mxu0 %v1821
    %2080 = vmatprep.subr.mxu0 %v1830
    %2081 = vmatpush1.msra.mxu0 %v1829
    %2082 = vmatprep.subr.mxu0 %v1838
    %2083 = vmatpush1.msra.mxu0 %v1837
    %2084 = vmatprep.subr.mxu0 %v1846
    %2085 = vmatpush1.msra.mxu0 %v1845
    %2086 = vmatprep.subr.mxu0 %v1854
    %2087 = vmatpush1.msra.mxu0 %v1853
    %2088 = vmatprep.subr.mxu0 %v1862
    %2089 = vmatpush1.msra.mxu0 %v1861
    %2090 = vmatprep.subr.mxu0 %v1870
    %2091 = vmatpush1.msra.mxu0 %v1869
    %2092 = vmatprep.subr.mxu0 %v1878
    %2093 = vmatpush1.msra.mxu0 %v1877
    %2094 = vmatprep.subr.mxu0 0.0
    %2095 = vmatpush1.msra.mxu0 0.0
    %2096 = vmatprep.subr.mxu0 0.0
    %2097 = vmatpush1.msra.mxu0 0.0
    %2098 = vmatprep.subr.mxu0 0.0
    %2099 = vmatpush1.msra.mxu0 0.0
    %2100 = vmatprep.subr.mxu0 0.0
    %2101 = vmatpush1.msra.mxu0 0.0
    %2102 = vmatprep.subr.mxu0 0.0
    %2103 = vmatpush1.msra.mxu0 0.0
    %2104 = vmatprep.subr.mxu0 0.0
    %2105 = vmatpush1.msra.mxu0 0.0
    %2106 = vmatprep.subr.mxu0 0.0
    %2107 = vmatpush1.msra.mxu0 0.0
    %2108 = vmatprep.subr.mxu0 0.0
    %2109 = vmatpush1.msra.mxu0 0.0
    %2110 = vmatprep.subr.mxu0 0.0
    %2111 = vmatpush1.msra.mxu0 0.0
    %2112 = vmatprep.subr.mxu0 0.0
    %2113 = vmatpush1.msra.mxu0 0.0
    %2114 = vmatprep.subr.mxu0 0.0
    %2115 = vmatpush1.msra.mxu0 0.0
    %2116 = vmatprep.subr.mxu0 0.0
    %2117 = vmatpush1.msra.mxu0 0.0
    %2118 = vmatprep.subr.mxu0 0.0
    %2119 = vmatpush1.msra.mxu0 0.0
    %2120 = vmatprep.subr.mxu0 0.0
    %2121 = vmatpush1.msra.mxu0 0.0
    %2122 = vmatprep.subr.mxu0 0.0
    %2123 = vmatpush1.msra.mxu0 0.0
    %2124 = vmatprep.subr.mxu0 0.0
    %2125 = vmatpush1.msra.mxu0 0.0
    %2126 = vmatprep.subr.mxu0 0.0
    %2127 = vmatpush1.msra.mxu0 0.0
    %2128 = vmatprep.subr.mxu0 0.0
    %2129 = vmatpush1.msra.mxu0 0.0
    %2130 = vmatprep.subr.mxu0 0.0
    %2131 = vmatpush1.msra.mxu0 0.0
    %2132 = vmatprep.subr.mxu0 0.0
    %2133 = vmatpush1.msra.mxu0 0.0
    %2134 = vmatprep.subr.mxu0 0.0
    %2135 = vmatpush1.msra.mxu0 0.0
    %2136 = vmatprep.subr.mxu0 0.0
    %2137 = vmatpush1.msra.mxu0 0.0
    %2138 = vmatprep.subr.mxu0 0.0
    %2139 = vmatpush1.msra.mxu0 0.0
    %2140 = vmatprep.subr.mxu0 0.0
    %2141 = vmatpush1.msra.mxu0 0.0
    %2142 = vmatprep.mubr.f32.mxu0 0.0
    %2143 = vmatmul.mubr.f32.gmra.mrb[0].mxu0 %v1942
    %v2144 = vpop.f32.mrb[0].mxu0
    %v2145 = vadd.f32 %v1903, %v2144
    %v2146 = vpop.f32.mrb[0].mxu0
    %v2147 = vadd.f32 %v1903, %v2146
    %2148 = vmatprep.mubr.f32.mxu0 0.0
    %2149 = vmatmul.mubr.f32.gmra.mrb[0].mxu0 %v1945
    %v2150 = vpop.f32.mrb[0].mxu0
    %v2151 = vadd.f32 %v1908, %v2150
    %v2152 = vpop.f32.mrb[0].mxu0
    %v2153 = vadd.f32 %v1908, %v2152
    %2154 = vmatprep.mubr.f32.mxu0 0.0
    %2155 = vmatmul.mubr.f32.gmra.mrb[0].mxu0 %v1948
    %v2156 = vpop.f32.mrb[0].mxu0
    %v2157 = vadd.f32 %v1913, %v2156
    %v2158 = vpop.f32.mrb[0].mxu0
    %v2159 = vadd.f32 %v1913, %v2158
    %2160 = vmatprep.mubr.f32.mxu0 0.0
    %2161 = vmatmul.mubr.f32.gmra.mrb[0].mxu0 %v1951
    %v2162 = vpop.f32.mrb[0].mxu0
    %v2163 = vadd.f32 %v1918, %v2162
    %v2164 = vpop.f32.mrb[0].mxu0
    %v2165 = vadd.f32 %v1918, %v2164
    %2166 = vmatprep.mubr.f32.mxu0 0.0
    %2167 = vmatmul.mubr.f32.gmra.mrb[0].mxu0 %v1954
    %v2168 = vpop.f32.mrb[0].mxu0
    %v2169 = vadd.f32 %v1923, %v2168
    %v2170 = vpop.f32.mrb[0].mxu0
    %v2171 = vadd.f32 %v1923, %v2170
    %2172 = vmatprep.mubr.f32.mxu0 0.0
    %2173 = vmatmul.mubr.f32.gmra.mrb[0].mxu0 %v1957
    %v2174 = vpop.f32.mrb[0].mxu0
    %v2175 = vadd.f32 %v1928, %v2174
    %v2176 = vpop.f32.mrb[0].mxu0
    %v2177 = vadd.f32 %v1928, %v2176
    %2178 = vmatprep.mubr.f32.mxu0 0.0
    %2179 = vmatmul.mubr.f32.gmra.mrb[0].mxu0 %v1960
    %v2180 = vpop.f32.mrb[0].mxu0
    %v2181 = vadd.f32 %v1933, %v2180
    %v2182 = vpop.f32.mrb[0].mxu0
    %v2183 = vadd.f32 %v1933, %v2182
    %2184 = vmatprep.mubr.f32.mxu0 0.0
    %2185 = vmatmul.mubr.f32.gmra.mrb[0].mxu0 %v1963
    %v2186 = vpop.f32.mrb[0].mxu0
    %v2187 = vadd.f32 %v1938, %v2186
    %v2188 = vpop.f32.mrb[0].mxu0
    %v2189 = vadd.f32 %v1938, %v2188
    %2190 = vdwg.mxu0
    %2191 = vmatprep.subr.mxu0 %v1824
    %2192 = vmatpush1.msra.mxu0 %v1823
    %2193 = vmatprep.subr.mxu0 %v1832
    %2194 = vmatpush1.msra.mxu0 %v1831
    %2195 = vmatprep.subr.mxu0 %v1840
    %2196 = vmatpush1.msra.mxu0 %v1839
    %2197 = vmatprep.subr.mxu0 %v1848
    %2198 = vmatpush1.msra.mxu0 %v1847
    %2199 = vmatprep.subr.mxu0 %v1856
    %2200 = vmatpush1.msra.mxu0 %v1855
    %2201 = vmatprep.subr.mxu0 %v1864
    %2202 = vmatpush1.msra.mxu0 %v1863
    %2203 = vmatprep.subr.mxu0 %v1872
    %2204 = vmatpush1.msra.mxu0 %v1871
    %2205 = vmatprep.subr.mxu0 %v1880
    %2206 = vmatpush1.msra.mxu0 %v1879
    %2207 = vmatprep.subr.mxu0 0.0
    %2208 = vmatpush1.msra.mxu0 0.0
    %2209 = vmatprep.subr.mxu0 0.0
    %2210 = vmatpush1.msra.mxu0 0.0
    %2211 = vmatprep.subr.mxu0 0.0
    %2212 = vmatpush1.msra.mxu0 0.0
    %2213 = vmatprep.subr.mxu0 0.0
    %2214 = vmatpush1.msra.mxu0 0.0
    %2215 = vmatprep.subr.mxu0 0.0
    %2216 = vmatpush1.msra.mxu0 0.0
    %2217 = vmatprep.subr.mxu0 0.0
    %2218 = vmatpush1.msra.mxu0 0.0
    %2219 = vmatprep.subr.mxu0 0.0
    %2220 = vmatpush1.msra.mxu0 0.0
    %2221 = vmatprep.subr.mxu0 0.0
    %2222 = vmatpush1.msra.mxu0 0.0
    %2223 = vmatprep.subr.mxu0 0.0
    %2224 = vmatpush1.msra.mxu0 0.0
    %2225 = vmatprep.subr.mxu0 0.0
    %2226 = vmatpush1.msra.mxu0 0.0
    %2227 = vmatprep.subr.mxu0 0.0
    %2228 = vmatpush1.msra.mxu0 0.0
    %2229 = vmatprep.subr.mxu0 0.0
    %2230 = vmatpush1.msra.mxu0 0.0
    %2231 = vmatprep.subr.mxu0 0.0
    %2232 = vmatpush1.msra.mxu0 0.0
    %2233 = vmatprep.subr.mxu0 0.0
    %2234 = vmatpush1.msra.mxu0 0.0
    %2235 = vmatprep.subr.mxu0 0.0
    %2236 = vmatpush1.msra.mxu0 0.0
    %2237 = vmatprep.subr.mxu0 0.0
    %2238 = vmatpush1.msra.mxu0 0.0
    %2239 = vmatprep.subr.mxu0 0.0
    %2240 = vmatpush1.msra.mxu0 0.0
    %2241 = vmatprep.subr.mxu0 0.0
    %2242 = vmatpush1.msra.mxu0 0.0
    %2243 = vmatprep.subr.mxu0 0.0
    %2244 = vmatpush1.msra.mxu0 0.0
    %2245 = vmatprep.subr.mxu0 0.0
    %2246 = vmatpush1.msra.mxu0 0.0
    %2247 = vmatprep.subr.mxu0 0.0
    %2248 = vmatpush1.msra.mxu0 0.0
    %2249 = vmatprep.subr.mxu0 0.0
    %2250 = vmatpush1.msra.mxu0 0.0
    %2251 = vmatprep.subr.mxu0 0.0
    %2252 = vmatpush1.msra.mxu0 0.0
    %2253 = vmatprep.subr.mxu0 0.0
    %2254 = vmatpush1.msra.mxu0 0.0
    %2255 = vmatprep.mubr.f32.mxu0 0.0
    %2256 = vmatmul.mubr.f32.gmra.mrb[0].mxu0 %v1942
    %v2257 = vpop.f32.mrb[0].mxu0
    %v2258 = vadd.f32 %v1903, %v2257
    %v2259 = vpop.f32.mrb[0].mxu0
    %v2260 = vadd.f32 %v1903, %v2259
    %2261 = vmatprep.mubr.f32.mxu0 0.0
    %2262 = vmatmul.mubr.f32.gmra.mrb[0].mxu0 %v1945
    %v2263 = vpop.f32.mrb[0].mxu0
    %v2264 = vadd.f32 %v1908, %v2263
    %v2265 = vpop.f32.mrb[0].mxu0
    %v2266 = vadd.f32 %v1908, %v2265
    %2267 = vmatprep.mubr.f32.mxu0 0.0
    %2268 = vmatmul.mubr.f32.gmra.mrb[0].mxu0 %v1948
    %v2269 = vpop.f32.mrb[0].mxu0
    %v2270 = vadd.f32 %v1913, %v2269
    %v2271 = vpop.f32.mrb[0].mxu0
    %v2272 = vadd.f32 %v1913, %v2271
    %2273 = vmatprep.mubr.f32.mxu0 0.0
    %2274 = vmatmul.mubr.f32.gmra.mrb[0].mxu0 %v1951
    %v2275 = vpop.f32.mrb[0].mxu0
    %v2276 = vadd.f32 %v1918, %v2275
    %v2277 = vpop.f32.mrb[0].mxu0
    %v2278 = vadd.f32 %v1918, %v2277
    %2279 = vmatprep.mubr.f32.mxu0 0.0
    %2280 = vmatmul.mubr.f32.gmra.mrb[0].mxu0 %v1954
    %v2281 = vpop.f32.mrb[0].mxu0
    %v2282 = vadd.f32 %v1923, %v2281
    %v2283 = vpop.f32.mrb[0].mxu0
    %v2284 = vadd.f32 %v1923, %v2283
    %2285 = vmatprep.mubr.f32.mxu0 0.0
    %2286 = vmatmul.mubr.f32.gmra.mrb[0].mxu0 %v1957
    %v2287 = vpop.f32.mrb[0].mxu0
    %v2288 = vadd.f32 %v1928, %v2287
    %v2289 = vpop.f32.mrb[0].mxu0
    %v2290 = vadd.f32 %v1928, %v2289
    %2291 = vmatprep.mubr.f32.mxu0 0.0
    %2292 = vmatmul.mubr.f32.gmra.mrb[0].mxu0 %v1960
    %v2293 = vpop.f32.mrb[0].mxu0
    %v2294 = vadd.f32 %v1933, %v2293
    %v2295 = vpop.f32.mrb[0].mxu0
    %v2296 = vadd.f32 %v1933, %v2295
    %2297 = vmatprep.mubr.f32.mxu0 0.0
    %2298 = vmatmul.mubr.f32.gmra.mrb[0].mxu0 %v1963
    %v2299 = vpop.f32.mrb[0].mxu0
    %v2300 = vadd.f32 %v1938, %v2299
    %v2301 = vpop.f32.mrb[0].mxu0
    %v2302 = vadd.f32 %v1938, %v2301
    %2303 = vdwg.mxu0
    %2304 = vmatprep.subr.mxu0 %v1826
    %2305 = vmatpush1.msra.mxu0 %v1825
    %2306 = vmatprep.subr.mxu0 %v1834
    %2307 = vmatpush1.msra.mxu0 %v1833
    %2308 = vmatprep.subr.mxu0 %v1842
    %2309 = vmatpush1.msra.mxu0 %v1841
    %2310 = vmatprep.subr.mxu0 %v1850
    %2311 = vmatpush1.msra.mxu0 %v1849
    %2312 = vmatprep.subr.mxu0 %v1858
    %2313 = vmatpush1.msra.mxu0 %v1857
    %2314 = vmatprep.subr.mxu0 %v1866
    %2315 = vmatpush1.msra.mxu0 %v1865
    %2316 = vmatprep.subr.mxu0 %v1874
    %2317 = vmatpush1.msra.mxu0 %v1873
    %2318 = vmatprep.subr.mxu0 %v1882
    %2319 = vmatpush1.msra.mxu0 %v1881
    %2320 = vmatprep.subr.mxu0 0.0
    %2321 = vmatpush1.msra.mxu0 0.0
    %2322 = vmatprep.subr.mxu0 0.0
    %2323 = vmatpush1.msra.mxu0 0.0
    %2324 = vmatprep.subr.mxu0 0.0
    %2325 = vmatpush1.msra.mxu0 0.0
    %2326 = vmatprep.subr.mxu0 0.0
    %2327 = vmatpush1.msra.mxu0 0.0
    %2328 = vmatprep.subr.mxu0 0.0
    %2329 = vmatpush1.msra.mxu0 0.0
    %2330 = vmatprep.subr.mxu0 0.0
    %2331 = vmatpush1.msra.mxu0 0.0
    %2332 = vmatprep.subr.mxu0 0.0
    %2333 = vmatpush1.msra.mxu0 0.0
    %2334 = vmatprep.subr.mxu0 0.0
    %2335 = vmatpush1.msra.mxu0 0.0
    %2336 = vmatprep.subr.mxu0 0.0
    %2337 = vmatpush1.msra.mxu0 0.0
    %2338 = vmatprep.subr.mxu0 0.0
    %2339 = vmatpush1.msra.mxu0 0.0
    %2340 = vmatprep.subr.mxu0 0.0
    %2341 = vmatpush1.msra.mxu0 0.0
    %2342 = vmatprep.subr.mxu0 0.0
    %2343 = vmatpush1.msra.mxu0 0.0
    %2344 = vmatprep.subr.mxu0 0.0
    %2345 = vmatpush1.msra.mxu0 0.0
    %2346 = vmatprep.subr.mxu0 0.0
    %2347 = vmatpush1.msra.mxu0 0.0
    %2348 = vmatprep.subr.mxu0 0.0
    %2349 = vmatpush1.msra.mxu0 0.0
    %2350 = vmatprep.subr.mxu0 0.0
    %2351 = vmatpush1.msra.mxu0 0.0
    %2352 = vmatprep.subr.mxu0 0.0
    %2353 = vmatpush1.msra.mxu0 0.0
    %2354 = vmatprep.subr.mxu0 0.0
    %2355 = vmatpush1.msra.mxu0 0.0
    %2356 = vmatprep.subr.mxu0 0.0
    %2357 = vmatpush1.msra.mxu0 0.0
    %2358 = vmatprep.subr.mxu0 0.0
    %2359 = vmatpush1.msra.mxu0 0.0
    %2360 = vmatprep.subr.mxu0 0.0
    %2361 = vmatpush1.msra.mxu0 0.0
    %2362 = vmatprep.subr.mxu0 0.0
    %2363 = vmatpush1.msra.mxu0 0.0
    %2364 = vmatprep.subr.mxu0 0.0
    %2365 = vmatpush1.msra.mxu0 0.0
    %2366 = vmatprep.subr.mxu0 0.0
    %2367 = vmatpush1.msra.mxu0 0.0
    %2368 = vmatprep.mubr.f32.mxu0 0.0
    %2369 = vmatmul.mubr.f32.gmra.mrb[0].mxu0 %v1942
    %v2370 = vpop.f32.mrb[0].mxu0
    %v2371 = vadd.f32 %v1903, %v2370
    %v2372 = vpop.f32.mrb[0].mxu0
    %v2373 = vadd.f32 %v1903, %v2372
    %2374 = vmatprep.mubr.f32.mxu0 0.0
    %2375 = vmatmul.mubr.f32.gmra.mrb[0].mxu0 %v1945
    %v2376 = vpop.f32.mrb[0].mxu0
    %v2377 = vadd.f32 %v1908, %v2376
    %v2378 = vpop.f32.mrb[0].mxu0
    %v2379 = vadd.f32 %v1908, %v2378
    %2380 = vmatprep.mubr.f32.mxu0 0.0
    %2381 = vmatmul.mubr.f32.gmra.mrb[0].mxu0 %v1948
    %v2382 = vpop.f32.mrb[0].mxu0
    %v2383 = vadd.f32 %v1913, %v2382
    %v2384 = vpop.f32.mrb[0].mxu0
    %v2385 = vadd.f32 %v1913, %v2384
    %2386 = vmatprep.mubr.f32.mxu0 0.0
    %2387 = vmatmul.mubr.f32.gmra.mrb[0].mxu0 %v1951
    %v2388 = vpop.f32.mrb[0].mxu0
    %v2389 = vadd.f32 %v1918, %v2388
    %v2390 = vpop.f32.mrb[0].mxu0
    %v2391 = vadd.f32 %v1918, %v2390
    %2392 = vmatprep.mubr.f32.mxu0 0.0
    %2393 = vmatmul.mubr.f32.gmra.mrb[0].mxu0 %v1954
    %v2394 = vpop.f32.mrb[0].mxu0
    %v2395 = vadd.f32 %v1923, %v2394
    %v2396 = vpop.f32.mrb[0].mxu0
    %v2397 = vadd.f32 %v1923, %v2396
    %2398 = vmatprep.mubr.f32.mxu0 0.0
    %2399 = vmatmul.mubr.f32.gmra.mrb[0].mxu0 %v1957
    %v2400 = vpop.f32.mrb[0].mxu0
    %v2401 = vadd.f32 %v1928, %v2400
    %v2402 = vpop.f32.mrb[0].mxu0
    %v2403 = vadd.f32 %v1928, %v2402
    %2404 = vmatprep.mubr.f32.mxu0 0.0
    %2405 = vmatmul.mubr.f32.gmra.mrb[0].mxu0 %v1960
    %v2406 = vpop.f32.mrb[0].mxu0
    %v2407 = vadd.f32 %v1933, %v2406
    %v2408 = vpop.f32.mrb[0].mxu0
    %v2409 = vadd.f32 %v1933, %v2408
    %2410 = vmatprep.mubr.f32.mxu0 0.0
    %2411 = vmatmul.mubr.f32.gmra.mrb[0].mxu0 %v1963
    %v2412 = vpop.f32.mrb[0].mxu0
    %v2413 = vadd.f32 %v1938, %v2412
    %v2414 = vpop.f32.mrb[0].mxu0
    %v2415 = vadd.f32 %v1938, %v2414
    %2416 = vdwg.mxu0
    %v2417 = vtanh.pop %v2032
    %v2418 = vtanh.pop %v2034
    %v2419 = vtanh.pop %v2145
    %v2420 = vtanh.pop %v2147
    %v2421 = vtanh.pop %v2258
    %v2422 = vtanh.pop %v2260
    %v2423 = vtanh.pop %v2371
    %v2424 = vtanh.pop %v2373
    %v2425 = vtanh.pop %v2038
    %v2426 = vtanh.pop %v2040
    %v2427 = vtanh.pop %v2151
    %v2428 = vtanh.pop %v2153
    %v2429 = vtanh.pop %v2264
    %v2430 = vtanh.pop %v2266
    %v2431 = vtanh.pop %v2377
    %v2432 = vtanh.pop %v2379
    %v2433 = vtanh.pop %v2044
    %v2434 = vtanh.pop %v2046
    %v2435 = vtanh.pop %v2157
    %v2436 = vtanh.pop %v2159
    %v2437 = vtanh.pop %v2270
    %v2438 = vtanh.pop %v2272
    %v2439 = vtanh.pop %v2383
    %v2440 = vtanh.pop %v2385
    %v2441 = vtanh.pop %v2050
    %v2442 = vtanh.pop %v2052
    %v2443 = vtanh.pop %v2163
    %v2444 = vtanh.pop %v2165
    %v2445 = vtanh.pop %v2276
    %v2446 = vtanh.pop %v2278
    %v2447 = vtanh.pop %v2389
    %v2448 = vtanh.pop %v2391
    %v2449 = vtanh.pop %v2056
    %v2450 = vtanh.pop %v2058
    %v2451 = vtanh.pop %v2169
    %v2452 = vtanh.pop %v2171
    %v2453 = vtanh.pop %v2282
    %v2454 = vtanh.pop %v2284
    %v2455 = vtanh.pop %v2395
    %v2456 = vtanh.pop %v2397
    %v2457 = vtanh.pop %v2062
    %v2458 = vtanh.pop %v2064
    %v2459 = vtanh.pop %v2175
    %v2460 = vtanh.pop %v2177
    %v2461 = vtanh.pop %v2288
    %v2462 = vtanh.pop %v2290
    %v2463 = vtanh.pop %v2401
    %v2464 = vtanh.pop %v2403
    %v2465 = vtanh.pop %v2068
    %v2466 = vtanh.pop %v2070
    %v2467 = vtanh.pop %v2181
    %v2468 = vtanh.pop %v2183
    %v2469 = vtanh.pop %v2294
    %v2470 = vtanh.pop %v2296
    %v2471 = vtanh.pop %v2407
    %v2472 = vtanh.pop %v2409
    %v2473 = vtanh.pop %v2074
    %v2474 = vtanh.pop %v2076
    %v2475 = vtanh.pop %v2187
    %v2476 = vtanh.pop %v2189
    %v2477 = vtanh.pop %v2300
    %v2478 = vtanh.pop %v2302
    %v2479 = vtanh.pop %v2413
    %v2480 = vtanh.pop %v2415
    %v2481 = vmul.f32 %v2417, %v1095
    %v2482 = vmul.f32 %v2418, %v1096
    %v2483 = vmul.f32 %v2419, %v1097
    %v2484 = vmul.f32 %v2420, %v1098
    %v2485 = vmul.f32 %v2421, %v1099
    %v2486 = vmul.f32 %v2422, %v1100
    %v2487 = vmul.f32 %v2423, %v1101
    %v2488 = vmul.f32 %v2424, %v1102
    %v2489 = vmul.f32 %v2425, %v1103
    %v2490 = vmul.f32 %v2426, %v1104
    %v2491 = vmul.f32 %v2427, %v1105
    %v2492 = vmul.f32 %v2428, %v1106
    %v2493 = vmul.f32 %v2429, %v1107
    %v2494 = vmul.f32 %v2430, %v1108
    %v2495 = vmul.f32 %v2431, %v1109
    %v2496 = vmul.f32 %v2432, %v1110
    %v2497 = vmul.f32 %v2433, %v1111
    %v2498 = vmul.f32 %v2434, %v1112
    %v2499 = vmul.f32 %v2435, %v1113
    %v2500 = vmul.f32 %v2436, %v1114
    %v2501 = vmul.f32 %v2437, %v1115
    %v2502 = vmul.f32 %v2438, %v1116
    %v2503 = vmul.f32 %v2439, %v1117
    %v2504 = vmul.f32 %v2440, %v1118
    %v2505 = vmul.f32 %v2441, %v1119
    %v2506 = vmul.f32 %v2442, %v1120
    %v2507 = vmul.f32 %v2443, %v1121
    %v2508 = vmul.f32 %v2444, %v1122
    %v2509 = vmul.f32 %v2445, %v1123
    %v2510 = vmul.f32 %v2446, %v1124
    %v2511 = vmul.f32 %v2447, %v1125
    %v2512 = vmul.f32 %v2448, %v1126
    %v2513 = vmul.f32 %v2449, %v1127
    %v2514 = vmul.f32 %v2450, %v1128
    %v2515 = vmul.f32 %v2451, %v1129
    %v2516 = vmul.f32 %v2452, %v1130
    %v2517 = vmul.f32 %v2453, %v1131
    %v2518 = vmul.f32 %v2454, %v1132
    %v2519 = vmul.f32 %v2455, %v1133
    %v2520 = vmul.f32 %v2456, %v1134
    %v2521 = vmul.f32 %v2457, %v1135
    %v2522 = vmul.f32 %v2458, %v1136
    %v2523 = vmul.f32 %v2459, %v1137
    %v2524 = vmul.f32 %v2460, %v1138
    %v2525 = vmul.f32 %v2461, %v1139
    %v2526 = vmul.f32 %v2462, %v1140
    %v2527 = vmul.f32 %v2463, %v1141
    %v2528 = vmul.f32 %v2464, %v1142
    %v2529 = vmul.f32 %v2465, %v1143
    %v2530 = vmul.f32 %v2466, %v1144
    %v2531 = vmul.f32 %v2467, %v1145
    %v2532 = vmul.f32 %v2468, %v1146
    %v2533 = vmul.f32 %v2469, %v1147
    %v2534 = vmul.f32 %v2470, %v1148
    %v2535 = vmul.f32 %v2471, %v1149
    %v2536 = vmul.f32 %v2472, %v1150
    %v2537 = vmul.f32 %v2473, %v1151
    %v2538 = vmul.f32 %v2474, %v1152
    %v2539 = vmul.f32 %v2475, %v1153
    %v2540 = vmul.f32 %v2476, %v1154
    %v2541 = vmul.f32 %v2477, %v1155
    %v2542 = vmul.f32 %v2478, %v1156
    %v2543 = vmul.f32 %v2479, %v1157
    %v2544 = vmul.f32 %v2480, %v1158
    %v2545 = vadd.f32 %v1031, %v2481
    %v2546 = vadd.f32 %v1032, %v2482
    %v2547 = vadd.f32 %v1033, %v2483
    %v2548 = vadd.f32 %v1034, %v2484
    %v2549 = vadd.f32 %v1035, %v2485
    %v2550 = vadd.f32 %v1036, %v2486
    %v2551 = vadd.f32 %v1037, %v2487
    %v2552 = vadd.f32 %v1038, %v2488
    %v2553 = vadd.f32 %v1039, %v2489
    %v2554 = vadd.f32 %v1040, %v2490
    %v2555 = vadd.f32 %v1041, %v2491
    %v2556 = vadd.f32 %v1042, %v2492
    %v2557 = vadd.f32 %v1043, %v2493
    %v2558 = vadd.f32 %v1044, %v2494
    %v2559 = vadd.f32 %v1045, %v2495
    %v2560 = vadd.f32 %v1046, %v2496
    %v2561 = vadd.f32 %v1047, %v2497
    %v2562 = vadd.f32 %v1048, %v2498
    %v2563 = vadd.f32 %v1049, %v2499
    %v2564 = vadd.f32 %v1050, %v2500
    %v2565 = vadd.f32 %v1051, %v2501
    %v2566 = vadd.f32 %v1052, %v2502
    %v2567 = vadd.f32 %v1053, %v2503
    %v2568 = vadd.f32 %v1054, %v2504
    %v2569 = vadd.f32 %v1055, %v2505
    %v2570 = vadd.f32 %v1056, %v2506
    %v2571 = vadd.f32 %v1057, %v2507
    %v2572 = vadd.f32 %v1058, %v2508
    %v2573 = vadd.f32 %v1059, %v2509
    %v2574 = vadd.f32 %v1060, %v2510
    %v2575 = vadd.f32 %v1061, %v2511
    %v2576 = vadd.f32 %v1062, %v2512
    %v2577 = vadd.f32 %v1063, %v2513
    %v2578 = vadd.f32 %v1064, %v2514
    %v2579 = vadd.f32 %v1065, %v2515
    %v2580 = vadd.f32 %v1066, %v2516
    %v2581 = vadd.f32 %v1067, %v2517
    %v2582 = vadd.f32 %v1068, %v2518
    %v2583 = vadd.f32 %v1069, %v2519
    %v2584 = vadd.f32 %v1070, %v2520
    %v2585 = vadd.f32 %v1071, %v2521
    %v2586 = vadd.f32 %v1072, %v2522
    %v2587 = vadd.f32 %v1073, %v2523
    %v2588 = vadd.f32 %v1074, %v2524
    %v2589 = vadd.f32 %v1075, %v2525
    %v2590 = vadd.f32 %v1076, %v2526
    %v2591 = vadd.f32 %v1077, %v2527
    %v2592 = vadd.f32 %v1078, %v2528
    %v2593 = vadd.f32 %v1079, %v2529
    %v2594 = vadd.f32 %v1080, %v2530
    %v2595 = vadd.f32 %v1081, %v2531
    %v2596 = vadd.f32 %v1082, %v2532
    %v2597 = vadd.f32 %v1083, %v2533
    %v2598 = vadd.f32 %v1084, %v2534
    %v2599 = vadd.f32 %v1085, %v2535
    %v2600 = vadd.f32 %v1086, %v2536
    %v2601 = vadd.f32 %v1087, %v2537
    %v2602 = vadd.f32 %v1088, %v2538
    %v2603 = vadd.f32 %v1089, %v2539
    %v2604 = vadd.f32 %v1090, %v2540
    %v2605 = vadd.f32 %v1091, %v2541
    %v2606 = vadd.f32 %v1092, %v2542
    %v2607 = vadd.f32 %v1093, %v2543
    %v2608 = vadd.f32 %v1094, %v2544
    %s2609 = scalar_lea.vmem [#allocation10], 64
    %v2610 = vld [vmem:[%s2609] sm:$0xff]
    %v2611 = vld [vmem:[%s2609 + $0x8] sm:$0xff]
    %v2612 = vld [vmem:[%s2609 + $0x10] sm:$0xff]
    %v2613 = vld [vmem:[%s2609 + $0x18] sm:$0xff]
    %v2614 = vld [vmem:[%s2609 + $0x20] sm:$0xff]
    %v2615 = vld [vmem:[%s2609 + $0x28] sm:$0xff]
    %v2616 = vld [vmem:[%s2609 + $0x30] sm:$0xff]
    %v2617 = vld [vmem:[%s2609 + $0x38] sm:$0xff]
    %s2618 = scalar_lea.vmem [#allocation11], 128
    %v2619 = vld [vmem:[%s2618] sm:$0xff]
    %v2620 = vld [vmem:[%s2618 + $0x8] sm:$0xff]
    %v2621 = vld [vmem:[%s2618 + $0x10] sm:$0xff]
    %v2622 = vld [vmem:[%s2618 + $0x18] sm:$0xff]
    %v2623 = vld [vmem:[%s2618 + $0x20] sm:$0xff]
    %v2624 = vld [vmem:[%s2618 + $0x28] sm:$0xff]
    %v2625 = vld [vmem:[%s2618 + $0x30] sm:$0xff]
    %v2626 = vld [vmem:[%s2618 + $0x38] sm:$0xff]
    %2628 = vset.pattern.permute.xlu0 0
    %2629 = vperm.xlu0 %2628, %v2619
    %v2630 = vpop.permute.xlu0 %2629
    %2633 = vset.pattern.permute.xlu0 0
    %2634 = vperm.xlu0 %2633, %v2620
    %v2635 = vpop.permute.xlu0 %2634
    %2638 = vset.pattern.permute.xlu0 0
    %2639 = vperm.xlu0 %2638, %v2621
    %v2640 = vpop.permute.xlu0 %2639
    %2643 = vset.pattern.permute.xlu0 0
    %2644 = vperm.xlu0 %2643, %v2622
    %v2645 = vpop.permute.xlu0 %2644
    %2648 = vset.pattern.permute.xlu0 0
    %2649 = vperm.xlu0 %2648, %v2623
    %v2650 = vpop.permute.xlu0 %2649
    %2653 = vset.pattern.permute.xlu0 0
    %2654 = vperm.xlu0 %2653, %v2624
    %v2655 = vpop.permute.xlu0 %2654
    %2658 = vset.pattern.permute.xlu0 0
    %2659 = vperm.xlu0 %2658, %v2625
    %v2660 = vpop.permute.xlu0 %2659
    %2663 = vset.pattern.permute.xlu0 0
    %2664 = vperm.xlu0 %2663, %v2626
    %v2665 = vpop.permute.xlu0 %2664
    %v2668 = vsel %vm1940, %v2610, 0
    %v2671 = vsel %vm1940, %v2611, 0
    %v2674 = vsel %vm1940, %v2612, 0
    %v2677 = vsel %vm1940, %v2613, 0
    %v2680 = vsel %vm1940, %v2614, 0
    %v2683 = vsel %vm1940, %v2615, 0
    %v2686 = vsel %vm1940, %v2616, 0
    %v2689 = vsel %vm1940, %v2617, 0
    %2691 = vmatprep.subr.mxu0 %v2546
    %2692 = vmatpush1.msra.mxu0 %v2545
    %2693 = vmatprep.subr.mxu0 %v2554
    %2694 = vmatpush1.msra.mxu0 %v2553
    %2695 = vmatprep.subr.mxu0 %v2562
    %2696 = vmatpush1.msra.mxu0 %v2561
    %2697 = vmatprep.subr.mxu0 %v2570
    %2698 = vmatpush1.msra.mxu0 %v2569
    %2699 = vmatprep.subr.mxu0 %v2578
    %2700 = vmatpush1.msra.mxu0 %v2577
    %2701 = vmatprep.subr.mxu0 %v2586
    %2702 = vmatpush1.msra.mxu0 %v2585
    %2703 = vmatprep.subr.mxu0 %v2594
    %2704 = vmatpush1.msra.mxu0 %v2593
    %2705 = vmatprep.subr.mxu0 %v2602
    %2706 = vmatpush1.msra.mxu0 %v2601
    %2707 = vmatprep.subr.mxu0 0.0
    %2708 = vmatpush1.msra.mxu0 0.0
    %2709 = vmatprep.subr.mxu0 0.0
    %2710 = vmatpush1.msra.mxu0 0.0
    %2711 = vmatprep.subr.mxu0 0.0
    %2712 = vmatpush1.msra.mxu0 0.0
    %2713 = vmatprep.subr.mxu0 0.0
    %2714 = vmatpush1.msra.mxu0 0.0
    %2715 = vmatprep.subr.mxu0 0.0
    %2716 = vmatpush1.msra.mxu0 0.0
    %2717 = vmatprep.subr.mxu0 0.0
    %2718 = vmatpush1.msra.mxu0 0.0
    %2719 = vmatprep.subr.mxu0 0.0
    %2720 = vmatpush1.msra.mxu0 0.0
    %2721 = vmatprep.subr.mxu0 0.0
    %2722 = vmatpush1.msra.mxu0 0.0
    %2723 = vmatprep.subr.mxu0 0.0
    %2724 = vmatpush1.msra.mxu0 0.0
    %2725 = vmatprep.subr.mxu0 0.0
    %2726 = vmatpush1.msra.mxu0 0.0
    %2727 = vmatprep.subr.mxu0 0.0
    %2728 = vmatpush1.msra.mxu0 0.0
    %2729 = vmatprep.subr.mxu0 0.0
    %2730 = vmatpush1.msra.mxu0 0.0
    %2731 = vmatprep.subr.mxu0 0.0
    %2732 = vmatpush1.msra.mxu0 0.0
    %2733 = vmatprep.subr.mxu0 0.0
    %2734 = vmatpush1.msra.mxu0 0.0
    %2735 = vmatprep.subr.mxu0 0.0
    %2736 = vmatpush1.msra.mxu0 0.0
    %2737 = vmatprep.subr.mxu0 0.0
    %2738 = vmatpush1.msra.mxu0 0.0
    %2739 = vmatprep.subr.mxu0 0.0
    %2740 = vmatpush1.msra.mxu0 0.0
    %2741 = vmatprep.subr.mxu0 0.0
    %2742 = vmatpush1.msra.mxu0 0.0
    %2743 = vmatprep.subr.mxu0 0.0
    %2744 = vmatpush1.msra.mxu0 0.0
    %2745 = vmatprep.subr.mxu0 0.0
    %2746 = vmatpush1.msra.mxu0 0.0
    %2747 = vmatprep.subr.mxu0 0.0
    %2748 = vmatpush1.msra.mxu0 0.0
    %2749 = vmatprep.subr.mxu0 0.0
    %2750 = vmatpush1.msra.mxu0 0.0
    %2751 = vmatprep.subr.mxu0 0.0
    %2752 = vmatpush1.msra.mxu0 0.0
    %2753 = vmatprep.subr.mxu0 0.0
    %2754 = vmatpush1.msra.mxu0 0.0
    %2755 = vmatprep.mubr.f32.mxu0 0.0
    %2756 = vmatmul.mubr.f32.gmra.mrb[0].mxu0 %v2668
    %v2757 = vpop.f32.mrb[0].mxu0
    %v2758 = vadd.f32 %v2630, %v2757
    %v2759 = vpop.f32.mrb[0].mxu0
    %v2760 = vadd.f32 %v2630, %v2759
    %2761 = vmatprep.mubr.f32.mxu0 0.0
    %2762 = vmatmul.mubr.f32.gmra.mrb[0].mxu0 %v2671
    %v2763 = vpop.f32.mrb[0].mxu0
    %v2764 = vadd.f32 %v2635, %v2763
    %v2765 = vpop.f32.mrb[0].mxu0
    %v2766 = vadd.f32 %v2635, %v2765
    %2767 = vmatprep.mubr.f32.mxu0 0.0
    %2768 = vmatmul.mubr.f32.gmra.mrb[0].mxu0 %v2674
    %v2769 = vpop.f32.mrb[0].mxu0
    %v2770 = vadd.f32 %v2640, %v2769
    %v2771 = vpop.f32.mrb[0].mxu0
    %v2772 = vadd.f32 %v2640, %v2771
    %2773 = vmatprep.mubr.f32.mxu0 0.0
    %2774 = vmatmul.mubr.f32.gmra.mrb[0].mxu0 %v2677
    %v2775 = vpop.f32.mrb[0].mxu0
    %v2776 = vadd.f32 %v2645, %v2775
    %v2777 = vpop.f32.mrb[0].mxu0
    %v2778 = vadd.f32 %v2645, %v2777
    %2779 = vmatprep.mubr.f32.mxu0 0.0
    %2780 = vmatmul.mubr.f32.gmra.mrb[0].mxu0 %v2680
    %v2781 = vpop.f32.mrb[0].mxu0
    %v2782 = vadd.f32 %v2650, %v2781
    %v2783 = vpop.f32.mrb[0].mxu0
    %v2784 = vadd.f32 %v2650, %v2783
    %2785 = vmatprep.mubr.f32.mxu0 0.0
    %2786 = vmatmul.mubr.f32.gmra.mrb[0].mxu0 %v2683
    %v2787 = vpop.f32.mrb[0].mxu0
    %v2788 = vadd.f32 %v2655, %v2787
    %v2789 = vpop.f32.mrb[0].mxu0
    %v2790 = vadd.f32 %v2655, %v2789
    %2791 = vmatprep.mubr.f32.mxu0 0.0
    %2792 = vmatmul.mubr.f32.gmra.mrb[0].mxu0 %v2686
    %v2793 = vpop.f32.mrb[0].mxu0
    %v2794 = vadd.f32 %v2660, %v2793
    %v2795 = vpop.f32.mrb[0].mxu0
    %v2796 = vadd.f32 %v2660, %v2795
    %2797 = vmatprep.mubr.f32.mxu0 0.0
    %2798 = vmatmul.mubr.f32.gmra.mrb[0].mxu0 %v2689
    %v2799 = vpop.f32.mrb[0].mxu0
    %v2800 = vadd.f32 %v2665, %v2799
    %v2801 = vpop.f32.mrb[0].mxu0
    %v2802 = vadd.f32 %v2665, %v2801
    %2803 = vdwg.mxu0
    %2804 = vmatprep.subr.mxu0 %v2548
    %2805 = vmatpush1.msra.mxu0 %v2547
    %2806 = vmatprep.subr.mxu0 %v2556
    %2807 = vmatpush1.msra.mxu0 %v2555
    %2808 = vmatprep.subr.mxu0 %v2564
    %2809 = vmatpush1.msra.mxu0 %v2563
    %2810 = vmatprep.subr.mxu0 %v2572
    %2811 = vmatpush1.msra.mxu0 %v2571
    %2812 = vmatprep.subr.mxu0 %v2580
    %2813 = vmatpush1.msra.mxu0 %v2579
    %2814 = vmatprep.subr.mxu0 %v2588
    %2815 = vmatpush1.msra.mxu0 %v2587
    %2816 = vmatprep.subr.mxu0 %v2596
    %2817 = vmatpush1.msra.mxu0 %v2595
    %2818 = vmatprep.subr.mxu0 %v2604
    %2819 = vmatpush1.msra.mxu0 %v2603
    %2820 = vmatprep.subr.mxu0 0.0
    %2821 = vmatpush1.msra.mxu0 0.0
    %2822 = vmatprep.subr.mxu0 0.0
    %2823 = vmatpush1.msra.mxu0 0.0
    %2824 = vmatprep.subr.mxu0 0.0
    %2825 = vmatpush1.msra.mxu0 0.0
    %2826 = vmatprep.subr.mxu0 0.0
    %2827 = vmatpush1.msra.mxu0 0.0
    %2828 = vmatprep.subr.mxu0 0.0
    %2829 = vmatpush1.msra.mxu0 0.0
    %2830 = vmatprep.subr.mxu0 0.0
    %2831 = vmatpush1.msra.mxu0 0.0
    %2832 = vmatprep.subr.mxu0 0.0
    %2833 = vmatpush1.msra.mxu0 0.0
    %2834 = vmatprep.subr.mxu0 0.0
    %2835 = vmatpush1.msra.mxu0 0.0
    %2836 = vmatprep.subr.mxu0 0.0
    %2837 = vmatpush1.msra.mxu0 0.0
    %2838 = vmatprep.subr.mxu0 0.0
    %2839 = vmatpush1.msra.mxu0 0.0
    %2840 = vmatprep.subr.mxu0 0.0
    %2841 = vmatpush1.msra.mxu0 0.0
    %2842 = vmatprep.subr.mxu0 0.0
    %2843 = vmatpush1.msra.mxu0 0.0
    %2844 = vmatprep.subr.mxu0 0.0
    %2845 = vmatpush1.msra.mxu0 0.0
    %2846 = vmatprep.subr.mxu0 0.0
    %2847 = vmatpush1.msra.mxu0 0.0
    %2848 = vmatprep.subr.mxu0 0.0
    %2849 = vmatpush1.msra.mxu0 0.0
    %2850 = vmatprep.subr.mxu0 0.0
    %2851 = vmatpush1.msra.mxu0 0.0
    %2852 = vmatprep.subr.mxu0 0.0
    %2853 = vmatpush1.msra.mxu0 0.0
    %2854 = vmatprep.subr.mxu0 0.0
    %2855 = vmatpush1.msra.mxu0 0.0
    %2856 = vmatprep.subr.mxu0 0.0
    %2857 = vmatpush1.msra.mxu0 0.0
    %2858 = vmatprep.subr.mxu0 0.0
    %2859 = vmatpush1.msra.mxu0 0.0
    %2860 = vmatprep.subr.mxu0 0.0
    %2861 = vmatpush1.msra.mxu0 0.0
    %2862 = vmatprep.subr.mxu0 0.0
    %2863 = vmatpush1.msra.mxu0 0.0
    %2864 = vmatprep.subr.mxu0 0.0
    %2865 = vmatpush1.msra.mxu0 0.0
    %2866 = vmatprep.subr.mxu0 0.0
    %2867 = vmatpush1.msra.mxu0 0.0
    %2868 = vmatprep.mubr.f32.mxu0 0.0
    %2869 = vmatmul.mubr.f32.gmra.mrb[0].mxu0 %v2668
    %v2870 = vpop.f32.mrb[0].mxu0
    %v2871 = vadd.f32 %v2630, %v2870
    %v2872 = vpop.f32.mrb[0].mxu0
    %v2873 = vadd.f32 %v2630, %v2872
    %2874 = vmatprep.mubr.f32.mxu0 0.0
    %2875 = vmatmul.mubr.f32.gmra.mrb[0].mxu0 %v2671
    %v2876 = vpop.f32.mrb[0].mxu0
    %v2877 = vadd.f32 %v2635, %v2876
    %v2878 = vpop.f32.mrb[0].mxu0
    %v2879 = vadd.f32 %v2635, %v2878
    %2880 = vmatprep.mubr.f32.mxu0 0.0
    %2881 = vmatmul.mubr.f32.gmra.mrb[0].mxu0 %v2674
    %v2882 = vpop.f32.mrb[0].mxu0
    %v2883 = vadd.f32 %v2640, %v2882
    %v2884 = vpop.f32.mrb[0].mxu0
    %v2885 = vadd.f32 %v2640, %v2884
    %2886 = vmatprep.mubr.f32.mxu0 0.0
    %2887 = vmatmul.mubr.f32.gmra.mrb[0].mxu0 %v2677
    %v2888 = vpop.f32.mrb[0].mxu0
    %v2889 = vadd.f32 %v2645, %v2888
    %v2890 = vpop.f32.mrb[0].mxu0
    %v2891 = vadd.f32 %v2645, %v2890
    %2892 = vmatprep.mubr.f32.mxu0 0.0
    %2893 = vmatmul.mubr.f32.gmra.mrb[0].mxu0 %v2680
    %v2894 = vpop.f32.mrb[0].mxu0
    %v2895 = vadd.f32 %v2650, %v2894
    %v2896 = vpop.f32.mrb[0].mxu0
    %v2897 = vadd.f32 %v2650, %v2896
    %2898 = vmatprep.mubr.f32.mxu0 0.0
    %2899 = vmatmul.mubr.f32.gmra.mrb[0].mxu0 %v2683
    %v2900 = vpop.f32.mrb[0].mxu0
    %v2901 = vadd.f32 %v2655, %v2900
    %v2902 = vpop.f32.mrb[0].mxu0
    %v2903 = vadd.f32 %v2655, %v2902
    %2904 = vmatprep.mubr.f32.mxu0 0.0
    %2905 = vmatmul.mubr.f32.gmra.mrb[0].mxu0 %v2686
    %v2906 = vpop.f32.mrb[0].mxu0
    %v2907 = vadd.f32 %v2660, %v2906
    %v2908 = vpop.f32.mrb[0].mxu0
    %v2909 = vadd.f32 %v2660, %v2908
    %2910 = vmatprep.mubr.f32.mxu0 0.0
    %2911 = vmatmul.mubr.f32.gmra.mrb[0].mxu0 %v2689
    %v2912 = vpop.f32.mrb[0].mxu0
    %v2913 = vadd.f32 %v2665, %v2912
    %v2914 = vpop.f32.mrb[0].mxu0
    %v2915 = vadd.f32 %v2665, %v2914
    %2916 = vdwg.mxu0
    %2917 = vmatprep.subr.mxu0 %v2550
    %2918 = vmatpush1.msra.mxu0 %v2549
    %2919 = vmatprep.subr.mxu0 %v2558
    %2920 = vmatpush1.msra.mxu0 %v2557
    %2921 = vmatprep.subr.mxu0 %v2566
    %2922 = vmatpush1.msra.mxu0 %v2565
    %2923 = vmatprep.subr.mxu0 %v2574
    %2924 = vmatpush1.msra.mxu0 %v2573
    %2925 = vmatprep.subr.mxu0 %v2582
    %2926 = vmatpush1.msra.mxu0 %v2581
    %2927 = vmatprep.subr.mxu0 %v2590
    %2928 = vmatpush1.msra.mxu0 %v2589
    %2929 = vmatprep.subr.mxu0 %v2598
    %2930 = vmatpush1.msra.mxu0 %v2597
    %2931 = vmatprep.subr.mxu0 %v2606
    %2932 = vmatpush1.msra.mxu0 %v2605
    %2933 = vmatprep.subr.mxu0 0.0
    %2934 = vmatpush1.msra.mxu0 0.0
    %2935 = vmatprep.subr.mxu0 0.0
    %2936 = vmatpush1.msra.mxu0 0.0
    %2937 = vmatprep.subr.mxu0 0.0
    %2938 = vmatpush1.msra.mxu0 0.0
    %2939 = vmatprep.subr.mxu0 0.0
    %2940 = vmatpush1.msra.mxu0 0.0
    %2941 = vmatprep.subr.mxu0 0.0
    %2942 = vmatpush1.msra.mxu0 0.0
    %2943 = vmatprep.subr.mxu0 0.0
    %2944 = vmatpush1.msra.mxu0 0.0
    %2945 = vmatprep.subr.mxu0 0.0
    %2946 = vmatpush1.msra.mxu0 0.0
    %2947 = vmatprep.subr.mxu0 0.0
    %2948 = vmatpush1.msra.mxu0 0.0
    %2949 = vmatprep.subr.mxu0 0.0
    %2950 = vmatpush1.msra.mxu0 0.0
    %2951 = vmatprep.subr.mxu0 0.0
    %2952 = vmatpush1.msra.mxu0 0.0
    %2953 = vmatprep.subr.mxu0 0.0
    %2954 = vmatpush1.msra.mxu0 0.0
    %2955 = vmatprep.subr.mxu0 0.0
    %2956 = vmatpush1.msra.mxu0 0.0
    %2957 = vmatprep.subr.mxu0 0.0
    %2958 = vmatpush1.msra.mxu0 0.0
    %2959 = vmatprep.subr.mxu0 0.0
    %2960 = vmatpush1.msra.mxu0 0.0
    %2961 = vmatprep.subr.mxu0 0.0
    %2962 = vmatpush1.msra.mxu0 0.0
    %2963 = vmatprep.subr.mxu0 0.0
    %2964 = vmatpush1.msra.mxu0 0.0
    %2965 = vmatprep.subr.mxu0 0.0
    %2966 = vmatpush1.msra.mxu0 0.0
    %2967 = vmatprep.subr.mxu0 0.0
    %2968 = vmatpush1.msra.mxu0 0.0
    %2969 = vmatprep.subr.mxu0 0.0
    %2970 = vmatpush1.msra.mxu0 0.0
    %2971 = vmatprep.subr.mxu0 0.0
    %2972 = vmatpush1.msra.mxu0 0.0
    %2973 = vmatprep.subr.mxu0 0.0
    %2974 = vmatpush1.msra.mxu0 0.0
    %2975 = vmatprep.subr.mxu0 0.0
    %2976 = vmatpush1.msra.mxu0 0.0
    %2977 = vmatprep.subr.mxu0 0.0
    %2978 = vmatpush1.msra.mxu0 0.0
    %2979 = vmatprep.subr.mxu0 0.0
    %2980 = vmatpush1.msra.mxu0 0.0
    %2981 = vmatprep.mubr.f32.mxu0 0.0
    %2982 = vmatmul.mubr.f32.gmra.mrb[0].mxu0 %v2668
    %v2983 = vpop.f32.mrb[0].mxu0
    %v2984 = vadd.f32 %v2630, %v2983
    %v2985 = vpop.f32.mrb[0].mxu0
    %v2986 = vadd.f32 %v2630, %v2985
    %2987 = vmatprep.mubr.f32.mxu0 0.0
    %2988 = vmatmul.mubr.f32.gmra.mrb[0].mxu0 %v2671
    %v2989 = vpop.f32.mrb[0].mxu0
    %v2990 = vadd.f32 %v2635, %v2989
    %v2991 = vpop.f32.mrb[0].mxu0
    %v2992 = vadd.f32 %v2635, %v2991
    %2993 = vmatprep.mubr.f32.mxu0 0.0
    %2994 = vmatmul.mubr.f32.gmra.mrb[0].mxu0 %v2674
    %v2995 = vpop.f32.mrb[0].mxu0
    %v2996 = vadd.f32 %v2640, %v2995
    %v2997 = vpop.f32.mrb[0].mxu0
    %v2998 = vadd.f32 %v2640, %v2997
    %2999 = vmatprep.mubr.f32.mxu0 0.0
    %3000 = vmatmul.mubr.f32.gmra.mrb[0].mxu0 %v2677
    %v3001 = vpop.f32.mrb[0].mxu0
    %v3002 = vadd.f32 %v2645, %v3001
    %v3003 = vpop.f32.mrb[0].mxu0
    %v3004 = vadd.f32 %v2645, %v3003
    %3005 = vmatprep.mubr.f32.mxu0 0.0
    %3006 = vmatmul.mubr.f32.gmra.mrb[0].mxu0 %v2680
    %v3007 = vpop.f32.mrb[0].mxu0
    %v3008 = vadd.f32 %v2650, %v3007
    %v3009 = vpop.f32.mrb[0].mxu0
    %v3010 = vadd.f32 %v2650, %v3009
    %3011 = vmatprep.mubr.f32.mxu0 0.0
    %3012 = vmatmul.mubr.f32.gmra.mrb[0].mxu0 %v2683
    %v3013 = vpop.f32.mrb[0].mxu0
    %v3014 = vadd.f32 %v2655, %v3013
    %v3015 = vpop.f32.mrb[0].mxu0
    %v3016 = vadd.f32 %v2655, %v3015
    %3017 = vmatprep.mubr.f32.mxu0 0.0
    %3018 = vmatmul.mubr.f32.gmra.mrb[0].mxu0 %v2686
    %v3019 = vpop.f32.mrb[0].mxu0
    %v3020 = vadd.f32 %v2660, %v3019
    %v3021 = vpop.f32.mrb[0].mxu0
    %v3022 = vadd.f32 %v2660, %v3021
    %3023 = vmatprep.mubr.f32.mxu0 0.0
    %3024 = vmatmul.mubr.f32.gmra.mrb[0].mxu0 %v2689
    %v3025 = vpop.f32.mrb[0].mxu0
    %v3026 = vadd.f32 %v2665, %v3025
    %v3027 = vpop.f32.mrb[0].mxu0
    %v3028 = vadd.f32 %v2665, %v3027
    %3029 = vdwg.mxu0
    %3030 = vmatprep.subr.mxu0 %v2552
    %3031 = vmatpush1.msra.mxu0 %v2551
    %3032 = vmatprep.subr.mxu0 %v2560
    %3033 = vmatpush1.msra.mxu0 %v2559
    %3034 = vmatprep.subr.mxu0 %v2568
    %3035 = vmatpush1.msra.mxu0 %v2567
    %3036 = vmatprep.subr.mxu0 %v2576
    %3037 = vmatpush1.msra.mxu0 %v2575
    %3038 = vmatprep.subr.mxu0 %v2584
    %3039 = vmatpush1.msra.mxu0 %v2583
    %3040 = vmatprep.subr.mxu0 %v2592
    %3041 = vmatpush1.msra.mxu0 %v2591
    %3042 = vmatprep.subr.mxu0 %v2600
    %3043 = vmatpush1.msra.mxu0 %v2599
    %3044 = vmatprep.subr.mxu0 %v2608
    %3045 = vmatpush1.msra.mxu0 %v2607
    %3046 = vmatprep.subr.mxu0 0.0
    %3047 = vmatpush1.msra.mxu0 0.0
    %3048 = vmatprep.subr.mxu0 0.0
    %3049 = vmatpush1.msra.mxu0 0.0
    %3050 = vmatprep.subr.mxu0 0.0
    %3051 = vmatpush1.msra.mxu0 0.0
    %3052 = vmatprep.subr.mxu0 0.0
    %3053 = vmatpush1.msra.mxu0 0.0
    %3054 = vmatprep.subr.mxu0 0.0
    %3055 = vmatpush1.msra.mxu0 0.0
    %3056 = vmatprep.subr.mxu0 0.0
    %3057 = vmatpush1.msra.mxu0 0.0
    %3058 = vmatprep.subr.mxu0 0.0
    %3059 = vmatpush1.msra.mxu0 0.0
    %3060 = vmatprep.subr.mxu0 0.0
    %3061 = vmatpush1.msra.mxu0 0.0
    %3062 = vmatprep.subr.mxu0 0.0
    %3063 = vmatpush1.msra.mxu0 0.0
    %3064 = vmatprep.subr.mxu0 0.0
    %3065 = vmatpush1.msra.mxu0 0.0
    %3066 = vmatprep.subr.mxu0 0.0
    %3067 = vmatpush1.msra.mxu0 0.0
    %3068 = vmatprep.subr.mxu0 0.0
    %3069 = vmatpush1.msra.mxu0 0.0
    %3070 = vmatprep.subr.mxu0 0.0
    %3071 = vmatpush1.msra.mxu0 0.0
    %3072 = vmatprep.subr.mxu0 0.0
    %3073 = vmatpush1.msra.mxu0 0.0
    %3074 = vmatprep.subr.mxu0 0.0
    %3075 = vmatpush1.msra.mxu0 0.0
    %3076 = vmatprep.subr.mxu0 0.0
    %3077 = vmatpush1.msra.mxu0 0.0
    %3078 = vmatprep.subr.mxu0 0.0
    %3079 = vmatpush1.msra.mxu0 0.0
    %3080 = vmatprep.subr.mxu0 0.0
    %3081 = vmatpush1.msra.mxu0 0.0
    %3082 = vmatprep.subr.mxu0 0.0
    %3083 = vmatpush1.msra.mxu0 0.0
    %3084 = vmatprep.subr.mxu0 0.0
    %3085 = vmatpush1.msra.mxu0 0.0
    %3086 = vmatprep.subr.mxu0 0.0
    %3087 = vmatpush1.msra.mxu0 0.0
    %3088 = vmatprep.subr.mxu0 0.0
    %3089 = vmatpush1.msra.mxu0 0.0
    %3090 = vmatprep.subr.mxu0 0.0
    %3091 = vmatpush1.msra.mxu0 0.0
    %3092 = vmatprep.subr.mxu0 0.0
    %3093 = vmatpush1.msra.mxu0 0.0
    %3094 = vmatprep.mubr.f32.mxu0 0.0
    %3095 = vmatmul.mubr.f32.gmra.mrb[0].mxu0 %v2668
    %v3096 = vpop.f32.mrb[0].mxu0
    %v3097 = vadd.f32 %v2630, %v3096
    %v3098 = vpop.f32.mrb[0].mxu0
    %v3099 = vadd.f32 %v2630, %v3098
    %3100 = vmatprep.mubr.f32.mxu0 0.0
    %3101 = vmatmul.mubr.f32.gmra.mrb[0].mxu0 %v2671
    %v3102 = vpop.f32.mrb[0].mxu0
    %v3103 = vadd.f32 %v2635, %v3102
    %v3104 = vpop.f32.mrb[0].mxu0
    %v3105 = vadd.f32 %v2635, %v3104
    %3106 = vmatprep.mubr.f32.mxu0 0.0
    %3107 = vmatmul.mubr.f32.gmra.mrb[0].mxu0 %v2674
    %v3108 = vpop.f32.mrb[0].mxu0
    %v3109 = vadd.f32 %v2640, %v3108
    %v3110 = vpop.f32.mrb[0].mxu0
    %v3111 = vadd.f32 %v2640, %v3110
    %3112 = vmatprep.mubr.f32.mxu0 0.0
    %3113 = vmatmul.mubr.f32.gmra.mrb[0].mxu0 %v2677
    %v3114 = vpop.f32.mrb[0].mxu0
    %v3115 = vadd.f32 %v2645, %v3114
    %v3116 = vpop.f32.mrb[0].mxu0
    %v3117 = vadd.f32 %v2645, %v3116
    %3118 = vmatprep.mubr.f32.mxu0 0.0
    %3119 = vmatmul.mubr.f32.gmra.mrb[0].mxu0 %v2680
    %v3120 = vpop.f32.mrb[0].mxu0
    %v3121 = vadd.f32 %v2650, %v3120
    %v3122 = vpop.f32.mrb[0].mxu0
    %v3123 = vadd.f32 %v2650, %v3122
    %3124 = vmatprep.mubr.f32.mxu0 0.0
    %3125 = vmatmul.mubr.f32.gmra.mrb[0].mxu0 %v2683
    %v3126 = vpop.f32.mrb[0].mxu0
    %v3127 = vadd.f32 %v2655, %v3126
    %v3128 = vpop.f32.mrb[0].mxu0
    %v3129 = vadd.f32 %v2655, %v3128
    %3130 = vmatprep.mubr.f32.mxu0 0.0
    %3131 = vmatmul.mubr.f32.gmra.mrb[0].mxu0 %v2686
    %v3132 = vpop.f32.mrb[0].mxu0
    %v3133 = vadd.f32 %v2660, %v3132
    %v3134 = vpop.f32.mrb[0].mxu0
    %v3135 = vadd.f32 %v2660, %v3134
    %3136 = vmatprep.mubr.f32.mxu0 0.0
    %3137 = vmatmul.mubr.f32.gmra.mrb[0].mxu0 %v2689
    %v3138 = vpop.f32.mrb[0].mxu0
    %v3139 = vadd.f32 %v2665, %v3138
    %v3140 = vpop.f32.mrb[0].mxu0
    %v3141 = vadd.f32 %v2665, %v3140
    %3142 = vdwg.mxu0
    %v3143 = vtanh.pop %v2758
    %v3144 = vtanh.pop %v2760
    %v3145 = vtanh.pop %v2871
    %v3146 = vtanh.pop %v2873
    %v3147 = vtanh.pop %v2984
    %v3148 = vtanh.pop %v2986
    %v3149 = vtanh.pop %v3097
    %v3150 = vtanh.pop %v3099
    %v3151 = vtanh.pop %v2764
    %v3152 = vtanh.pop %v2766
    %v3153 = vtanh.pop %v2877
    %v3154 = vtanh.pop %v2879
    %v3155 = vtanh.pop %v2990
    %v3156 = vtanh.pop %v2992
    %v3157 = vtanh.pop %v3103
    %v3158 = vtanh.pop %v3105
    %v3159 = vtanh.pop %v2770
    %v3160 = vtanh.pop %v2772
    %v3161 = vtanh.pop %v2883
    %v3162 = vtanh.pop %v2885
    %v3163 = vtanh.pop %v2996
    %v3164 = vtanh.pop %v2998
    %v3165 = vtanh.pop %v3109
    %v3166 = vtanh.pop %v3111
    %v3167 = vtanh.pop %v2776
    %v3168 = vtanh.pop %v2778
    %v3169 = vtanh.pop %v2889
    %v3170 = vtanh.pop %v2891
    %v3171 = vtanh.pop %v3002
    %v3172 = vtanh.pop %v3004
    %v3173 = vtanh.pop %v3115
    %v3174 = vtanh.pop %v3117
    %v3175 = vtanh.pop %v2782
    %v3176 = vtanh.pop %v2784
    %v3177 = vtanh.pop %v2895
    %v3178 = vtanh.pop %v2897
    %v3179 = vtanh.pop %v3008
    %v3180 = vtanh.pop %v3010
    %v3181 = vtanh.pop %v3121
    %v3182 = vtanh.pop %v3123
    %v3183 = vtanh.pop %v2788
    %v3184 = vtanh.pop %v2790
    %v3185 = vtanh.pop %v2901
    %v3186 = vtanh.pop %v2903
    %v3187 = vtanh.pop %v3014
    %v3188 = vtanh.pop %v3016
    %v3189 = vtanh.pop %v3127
    %v3190 = vtanh.pop %v3129
    %v3191 = vtanh.pop %v2794
    %v3192 = vtanh.pop %v2796
    %v3193 = vtanh.pop %v2907
    %v3194 = vtanh.pop %v2909
    %v3195 = vtanh.pop %v3020
    %v3196 = vtanh.pop %v3022
    %v3197 = vtanh.pop %v3133
    %v3198 = vtanh.pop %v3135
    %v3199 = vtanh.pop %v2800
    %v3200 = vtanh.pop %v2802
    %v3201 = vtanh.pop %v2913
    %v3202 = vtanh.pop %v2915
    %v3203 = vtanh.pop %v3026
    %v3204 = vtanh.pop %v3028
    %v3205 = vtanh.pop %v3139
    %v3206 = vtanh.pop %v3141
    %v3207 = vmul.f32 %v3143, %v1095
    %v3208 = vmul.f32 %v3144, %v1096
    %v3209 = vmul.f32 %v3145, %v1097
    %v3210 = vmul.f32 %v3146, %v1098
    %v3211 = vmul.f32 %v3147, %v1099
    %v3212 = vmul.f32 %v3148, %v1100
    %v3213 = vmul.f32 %v3149, %v1101
    %v3214 = vmul.f32 %v3150, %v1102
    %v3215 = vmul.f32 %v3151, %v1103
    %v3216 = vmul.f32 %v3152, %v1104
    %v3217 = vmul.f32 %v3153, %v1105
    %v3218 = vmul.f32 %v3154, %v1106
    %v3219 = vmul.f32 %v3155, %v1107
    %v3220 = vmul.f32 %v3156, %v1108
    %v3221 = vmul.f32 %v3157, %v1109
    %v3222 = vmul.f32 %v3158, %v1110
    %v3223 = vmul.f32 %v3159, %v1111
    %v3224 = vmul.f32 %v3160, %v1112
    %v3225 = vmul.f32 %v3161, %v1113
    %v3226 = vmul.f32 %v3162, %v1114
    %v3227 = vmul.f32 %v3163, %v1115
    %v3228 = vmul.f32 %v3164, %v1116
    %v3229 = vmul.f32 %v3165, %v1117
    %v3230 = vmul.f32 %v3166, %v1118
    %v3231 = vmul.f32 %v3167, %v1119
    %v3232 = vmul.f32 %v3168, %v1120
    %v3233 = vmul.f32 %v3169, %v1121
    %v3234 = vmul.f32 %v3170, %v1122
    %v3235 = vmul.f32 %v3171, %v1123
    %v3236 = vmul.f32 %v3172, %v1124
    %v3237 = vmul.f32 %v3173, %v1125
    %v3238 = vmul.f32 %v3174, %v1126
    %v3239 = vmul.f32 %v3175, %v1127
    %v3240 = vmul.f32 %v3176, %v1128
    %v3241 = vmul.f32 %v3177, %v1129
    %v3242 = vmul.f32 %v3178, %v1130
    %v3243 = vmul.f32 %v3179, %v1131
    %v3244 = vmul.f32 %v3180, %v1132
    %v3245 = vmul.f32 %v3181, %v1133
    %v3246 = vmul.f32 %v3182, %v1134
    %v3247 = vmul.f32 %v3183, %v1135
    %v3248 = vmul.f32 %v3184, %v1136
    %v3249 = vmul.f32 %v3185, %v1137
    %v3250 = vmul.f32 %v3186, %v1138
    %v3251 = vmul.f32 %v3187, %v1139
    %v3252 = vmul.f32 %v3188, %v1140
    %v3253 = vmul.f32 %v3189, %v1141
    %v3254 = vmul.f32 %v3190, %v1142
    %v3255 = vmul.f32 %v3191, %v1143
    %v3256 = vmul.f32 %v3192, %v1144
    %v3257 = vmul.f32 %v3193, %v1145
    %v3258 = vmul.f32 %v3194, %v1146
    %v3259 = vmul.f32 %v3195, %v1147
    %v3260 = vmul.f32 %v3196, %v1148
    %v3261 = vmul.f32 %v3197, %v1149
    %v3262 = vmul.f32 %v3198, %v1150
    %v3263 = vmul.f32 %v3199, %v1151
    %v3264 = vmul.f32 %v3200, %v1152
    %v3265 = vmul.f32 %v3201, %v1153
    %v3266 = vmul.f32 %v3202, %v1154
    %v3267 = vmul.f32 %v3203, %v1155
    %v3268 = vmul.f32 %v3204, %v1156
    %v3269 = vmul.f32 %v3205, %v1157
    %v3270 = vmul.f32 %v3206, %v1158
    %v3271 = vadd.f32 %v1031, %v3207
    %v3272 = vadd.f32 %v1032, %v3208
    %v3273 = vadd.f32 %v1033, %v3209
    %v3274 = vadd.f32 %v1034, %v3210
    %v3275 = vadd.f32 %v1035, %v3211
    %v3276 = vadd.f32 %v1036, %v3212
    %v3277 = vadd.f32 %v1037, %v3213
    %v3278 = vadd.f32 %v1038, %v3214
    %v3279 = vadd.f32 %v1039, %v3215
    %v3280 = vadd.f32 %v1040, %v3216
    %v3281 = vadd.f32 %v1041, %v3217
    %v3282 = vadd.f32 %v1042, %v3218
    %v3283 = vadd.f32 %v1043, %v3219
    %v3284 = vadd.f32 %v1044, %v3220
    %v3285 = vadd.f32 %v1045, %v3221
    %v3286 = vadd.f32 %v1046, %v3222
    %v3287 = vadd.f32 %v1047, %v3223
    %v3288 = vadd.f32 %v1048, %v3224
    %v3289 = vadd.f32 %v1049, %v3225
    %v3290 = vadd.f32 %v1050, %v3226
    %v3291 = vadd.f32 %v1051, %v3227
    %v3292 = vadd.f32 %v1052, %v3228
    %v3293 = vadd.f32 %v1053, %v3229
    %v3294 = vadd.f32 %v1054, %v3230
    %v3295 = vadd.f32 %v1055, %v3231
    %v3296 = vadd.f32 %v1056, %v3232
    %v3297 = vadd.f32 %v1057, %v3233
    %v3298 = vadd.f32 %v1058, %v3234
    %v3299 = vadd.f32 %v1059, %v3235
    %v3300 = vadd.f32 %v1060, %v3236
    %v3301 = vadd.f32 %v1061, %v3237
    %v3302 = vadd.f32 %v1062, %v3238
    %v3303 = vadd.f32 %v1063, %v3239
    %v3304 = vadd.f32 %v1064, %v3240
    %v3305 = vadd.f32 %v1065, %v3241
    %v3306 = vadd.f32 %v1066, %v3242
    %v3307 = vadd.f32 %v1067, %v3243
    %v3308 = vadd.f32 %v1068, %v3244
    %v3309 = vadd.f32 %v1069, %v3245
    %v3310 = vadd.f32 %v1070, %v3246
    %v3311 = vadd.f32 %v1071, %v3247
    %v3312 = vadd.f32 %v1072, %v3248
    %v3313 = vadd.f32 %v1073, %v3249
    %v3314 = vadd.f32 %v1074, %v3250
    %v3315 = vadd.f32 %v1075, %v3251
    %v3316 = vadd.f32 %v1076, %v3252
    %v3317 = vadd.f32 %v1077, %v3253
    %v3318 = vadd.f32 %v1078, %v3254
    %v3319 = vadd.f32 %v1079, %v3255
    %v3320 = vadd.f32 %v1080, %v3256
    %v3321 = vadd.f32 %v1081, %v3257
    %v3322 = vadd.f32 %v1082, %v3258
    %v3323 = vadd.f32 %v1083, %v3259
    %v3324 = vadd.f32 %v1084, %v3260
    %v3325 = vadd.f32 %v1085, %v3261
    %v3326 = vadd.f32 %v1086, %v3262
    %v3327 = vadd.f32 %v1087, %v3263
    %v3328 = vadd.f32 %v1088, %v3264
    %v3329 = vadd.f32 %v1089, %v3265
    %v3330 = vadd.f32 %v1090, %v3266
    %v3331 = vadd.f32 %v1091, %v3267
    %v3332 = vadd.f32 %v1092, %v3268
    %v3333 = vadd.f32 %v1093, %v3269
    %v3334 = vadd.f32 %v1094, %v3270
    %v3335 = vld [vmem:[#allocation13] sm:$0x3]
    %v3336 = vld [vmem:[#allocation14] sm:$0x3]
    %3338 = vset.pattern.permute.xlu0 0
    %3339 = vperm.xlu0 %3338, %v3336
    %v3340 = vpop.permute.xlu0 %3339
    %v3343 = vsel %vm1940, %v3335, 0
    %3345 = vmatprep.subr.mxu0 %v3272
    %3346 = vmatpush1.msra.mxu0 %v3271
    %3347 = vmatprep.subr.mxu0 %v3280
    %3348 = vmatpush1.msra.mxu0 %v3279
    %3349 = vmatprep.subr.mxu0 %v3288
    %3350 = vmatpush1.msra.mxu0 %v3287
    %3351 = vmatprep.subr.mxu0 %v3296
    %3352 = vmatpush1.msra.mxu0 %v3295
    %3353 = vmatprep.subr.mxu0 %v3304
    %3354 = vmatpush1.msra.mxu0 %v3303
    %3355 = vmatprep.subr.mxu0 %v3312
    %3356 = vmatpush1.msra.mxu0 %v3311
    %3357 = vmatprep.subr.mxu0 %v3320
    %3358 = vmatpush1.msra.mxu0 %v3319
    %3359 = vmatprep.subr.mxu0 %v3328
    %3360 = vmatpush1.msra.mxu0 %v3327
    %3361 = vmatprep.subr.mxu0 0.0
    %3362 = vmatpush1.msra.mxu0 0.0
    %3363 = vmatprep.subr.mxu0 0.0
    %3364 = vmatpush1.msra.mxu0 0.0
    %3365 = vmatprep.subr.mxu0 0.0
    %3366 = vmatpush1.msra.mxu0 0.0
    %3367 = vmatprep.subr.mxu0 0.0
    %3368 = vmatpush1.msra.mxu0 0.0
    %3369 = vmatprep.subr.mxu0 0.0
    %3370 = vmatpush1.msra.mxu0 0.0
    %3371 = vmatprep.subr.mxu0 0.0
    %3372 = vmatpush1.msra.mxu0 0.0
    %3373 = vmatprep.subr.mxu0 0.0
    %3374 = vmatpush1.msra.mxu0 0.0
    %3375 = vmatprep.subr.mxu0 0.0
    %3376 = vmatpush1.msra.mxu0 0.0
    %3377 = vmatprep.subr.mxu0 0.0
    %3378 = vmatpush1.msra.mxu0 0.0
    %3379 = vmatprep.subr.mxu0 0.0
    %3380 = vmatpush1.msra.mxu0 0.0
    %3381 = vmatprep.subr.mxu0 0.0
    %3382 = vmatpush1.msra.mxu0 0.0
    %3383 = vmatprep.subr.mxu0 0.0
    %3384 = vmatpush1.msra.mxu0 0.0
    %3385 = vmatprep.subr.mxu0 0.0
    %3386 = vmatpush1.msra.mxu0 0.0
    %3387 = vmatprep.subr.mxu0 0.0
    %3388 = vmatpush1.msra.mxu0 0.0
    %3389 = vmatprep.subr.mxu0 0.0
    %3390 = vmatpush1.msra.mxu0 0.0
    %3391 = vmatprep.subr.mxu0 0.0
    %3392 = vmatpush1.msra.mxu0 0.0
    %3393 = vmatprep.subr.mxu0 0.0
    %3394 = vmatpush1.msra.mxu0 0.0
    %3395 = vmatprep.subr.mxu0 0.0
    %3396 = vmatpush1.msra.mxu0 0.0
    %3397 = vmatprep.subr.mxu0 0.0
    %3398 = vmatpush1.msra.mxu0 0.0
    %3399 = vmatprep.subr.mxu0 0.0
    %3400 = vmatpush1.msra.mxu0 0.0
    %3401 = vmatprep.subr.mxu0 0.0
    %3402 = vmatpush1.msra.mxu0 0.0
    %3403 = vmatprep.subr.mxu0 0.0
    %3404 = vmatpush1.msra.mxu0 0.0
    %3405 = vmatprep.subr.mxu0 0.0
    %3406 = vmatpush1.msra.mxu0 0.0
    %3407 = vmatprep.subr.mxu0 0.0
    %3408 = vmatpush1.msra.mxu0 0.0
    %3409 = vmatprep.mubr.f32.mxu0 0.0
    %3410 = vmatmul.mubr.f32.gmra.mrb[0].mxu0 %v3343
    %v3411 = vpop.f32.mrb[0].mxu0
    %v3412 = vadd.f32 %v3340, %v3411
    %v3413 = vpop.f32.mrb[0].mxu0
    %v3414 = vadd.f32 %v3340, %v3413
    %3415 = vdwg.mxu0
    %3416 = vmatprep.subr.mxu0 %v3274
    %3417 = vmatpush1.msra.mxu0 %v3273
    %3418 = vmatprep.subr.mxu0 %v3282
    %3419 = vmatpush1.msra.mxu0 %v3281
    %3420 = vmatprep.subr.mxu0 %v3290
    %3421 = vmatpush1.msra.mxu0 %v3289
    %3422 = vmatprep.subr.mxu0 %v3298
    %3423 = vmatpush1.msra.mxu0 %v3297
    %3424 = vmatprep.subr.mxu0 %v3306
    %3425 = vmatpush1.msra.mxu0 %v3305
    %3426 = vmatprep.subr.mxu0 %v3314
    %3427 = vmatpush1.msra.mxu0 %v3313
    %3428 = vmatprep.subr.mxu0 %v3322
    %3429 = vmatpush1.msra.mxu0 %v3321
    %3430 = vmatprep.subr.mxu0 %v3330
    %3431 = vmatpush1.msra.mxu0 %v3329
    %3432 = vmatprep.subr.mxu0 0.0
    %3433 = vmatpush1.msra.mxu0 0.0
    %3434 = vmatprep.subr.mxu0 0.0
    %3435 = vmatpush1.msra.mxu0 0.0
    %3436 = vmatprep.subr.mxu0 0.0
    %3437 = vmatpush1.msra.mxu0 0.0
    %3438 = vmatprep.subr.mxu0 0.0
    %3439 = vmatpush1.msra.mxu0 0.0
    %3440 = vmatprep.subr.mxu0 0.0
    %3441 = vmatpush1.msra.mxu0 0.0
    %3442 = vmatprep.subr.mxu0 0.0
    %3443 = vmatpush1.msra.mxu0 0.0
    %3444 = vmatprep.subr.mxu0 0.0
    %3445 = vmatpush1.msra.mxu0 0.0
    %3446 = vmatprep.subr.mxu0 0.0
    %3447 = vmatpush1.msra.mxu0 0.0
    %3448 = vmatprep.subr.mxu0 0.0
    %3449 = vmatpush1.msra.mxu0 0.0
    %3450 = vmatprep.subr.mxu0 0.0
    %3451 = vmatpush1.msra.mxu0 0.0
    %3452 = vmatprep.subr.mxu0 0.0
    %3453 = vmatpush1.msra.mxu0 0.0
    %3454 = vmatprep.subr.mxu0 0.0
    %3455 = vmatpush1.msra.mxu0 0.0
    %3456 = vmatprep.subr.mxu0 0.0
    %3457 = vmatpush1.msra.mxu0 0.0
    %3458 = vmatprep.subr.mxu0 0.0
    %3459 = vmatpush1.msra.mxu0 0.0
    %3460 = vmatprep.subr.mxu0 0.0
    %3461 = vmatpush1.msra.mxu0 0.0
    %3462 = vmatprep.subr.mxu0 0.0
    %3463 = vmatpush1.msra.mxu0 0.0
    %3464 = vmatprep.subr.mxu0 0.0
    %3465 = vmatpush1.msra.mxu0 0.0
    %3466 = vmatprep.subr.mxu0 0.0
    %3467 = vmatpush1.msra.mxu0 0.0
    %3468 = vmatprep.subr.mxu0 0.0
    %3469 = vmatpush1.msra.mxu0 0.0
    %3470 = vmatprep.subr.mxu0 0.0
    %3471 = vmatpush1.msra.mxu0 0.0
    %3472 = vmatprep.subr.mxu0 0.0
    %3473 = vmatpush1.msra.mxu0 0.0
    %3474 = vmatprep.subr.mxu0 0.0
    %3475 = vmatpush1.msra.mxu0 0.0
    %3476 = vmatprep.subr.mxu0 0.0
    %3477 = vmatpush1.msra.mxu0 0.0
    %3478 = vmatprep.subr.mxu0 0.0
    %3479 = vmatpush1.msra.mxu0 0.0
    %3480 = vmatprep.mubr.f32.mxu0 0.0
    %3481 = vmatmul.mubr.f32.gmra.mrb[0].mxu0 %v3343
    %v3482 = vpop.f32.mrb[0].mxu0
    %v3483 = vadd.f32 %v3340, %v3482
    %v3484 = vpop.f32.mrb[0].mxu0
    %v3485 = vadd.f32 %v3340, %v3484
    %3486 = vdwg.mxu0
    %3487 = vmatprep.subr.mxu0 %v3276
    %3488 = vmatpush1.msra.mxu0 %v3275
    %3489 = vmatprep.subr.mxu0 %v3284
    %3490 = vmatpush1.msra.mxu0 %v3283
    %3491 = vmatprep.subr.mxu0 %v3292
    %3492 = vmatpush1.msra.mxu0 %v3291
    %3493 = vmatprep.subr.mxu0 %v3300
    %3494 = vmatpush1.msra.mxu0 %v3299
    %3495 = vmatprep.subr.mxu0 %v3308
    %3496 = vmatpush1.msra.mxu0 %v3307
    %3497 = vmatprep.subr.mxu0 %v3316
    %3498 = vmatpush1.msra.mxu0 %v3315
    %3499 = vmatprep.subr.mxu0 %v3324
    %3500 = vmatpush1.msra.mxu0 %v3323
    %3501 = vmatprep.subr.mxu0 %v3332
    %3502 = vmatpush1.msra.mxu0 %v3331
    %3503 = vmatprep.subr.mxu0 0.0
    %3504 = vmatpush1.msra.mxu0 0.0
    %3505 = vmatprep.subr.mxu0 0.0
    %3506 = vmatpush1.msra.mxu0 0.0
    %3507 = vmatprep.subr.mxu0 0.0
    %3508 = vmatpush1.msra.mxu0 0.0
    %3509 = vmatprep.subr.mxu0 0.0
    %3510 = vmatpush1.msra.mxu0 0.0
    %3511 = vmatprep.subr.mxu0 0.0
    %3512 = vmatpush1.msra.mxu0 0.0
    %3513 = vmatprep.subr.mxu0 0.0
    %3514 = vmatpush1.msra.mxu0 0.0
    %3515 = vmatprep.subr.mxu0 0.0
    %3516 = vmatpush1.msra.mxu0 0.0
    %3517 = vmatprep.subr.mxu0 0.0
    %3518 = vmatpush1.msra.mxu0 0.0
    %3519 = vmatprep.subr.mxu0 0.0
    %3520 = vmatpush1.msra.mxu0 0.0
    %3521 = vmatprep.subr.mxu0 0.0
    %3522 = vmatpush1.msra.mxu0 0.0
    %3523 = vmatprep.subr.mxu0 0.0
    %3524 = vmatpush1.msra.mxu0 0.0
    %3525 = vmatprep.subr.mxu0 0.0
    %3526 = vmatpush1.msra.mxu0 0.0
    %3527 = vmatprep.subr.mxu0 0.0
    %3528 = vmatpush1.msra.mxu0 0.0
    %3529 = vmatprep.subr.mxu0 0.0
    %3530 = vmatpush1.msra.mxu0 0.0
    %3531 = vmatprep.subr.mxu0 0.0
    %3532 = vmatpush1.msra.mxu0 0.0
    %3533 = vmatprep.subr.mxu0 0.0
    %3534 = vmatpush1.msra.mxu0 0.0
    %3535 = vmatprep.subr.mxu0 0.0
    %3536 = vmatpush1.msra.mxu0 0.0
    %3537 = vmatprep.subr.mxu0 0.0
    %3538 = vmatpush1.msra.mxu0 0.0
    %3539 = vmatprep.subr.mxu0 0.0
    %3540 = vmatpush1.msra.mxu0 0.0
    %3541 = vmatprep.subr.mxu0 0.0
    %3542 = vmatpush1.msra.mxu0 0.0
    %3543 = vmatprep.subr.mxu0 0.0
    %3544 = vmatpush1.msra.mxu0 0.0
    %3545 = vmatprep.subr.mxu0 0.0
    %3546 = vmatpush1.msra.mxu0 0.0
    %3547 = vmatprep.subr.mxu0 0.0
    %3548 = vmatpush1.msra.mxu0 0.0
    %3549 = vmatprep.subr.mxu0 0.0
    %3550 = vmatpush1.msra.mxu0 0.0
    %3551 = vmatprep.mubr.f32.mxu0 0.0
    %3552 = vmatmul.mubr.f32.gmra.mrb[0].mxu0 %v3343
    %v3553 = vpop.f32.mrb[0].mxu0
    %v3554 = vadd.f32 %v3340, %v3553
    %v3555 = vpop.f32.mrb[0].mxu0
    %v3556 = vadd.f32 %v3340, %v3555
    %3557 = vdwg.mxu0
    %3558 = vmatprep.subr.mxu0 %v3278
    %3559 = vmatpush1.msra.mxu0 %v3277
    %3560 = vmatprep.subr.mxu0 %v3286
    %3561 = vmatpush1.msra.mxu0 %v3285
    %3562 = vmatprep.subr.mxu0 %v3294
    %3563 = vmatpush1.msra.mxu0 %v3293
    %3564 = vmatprep.subr.mxu0 %v3302
    %3565 = vmatpush1.msra.mxu0 %v3301
    %3566 = vmatprep.subr.mxu0 %v3310
    %3567 = vmatpush1.msra.mxu0 %v3309
    %3568 = vmatprep.subr.mxu0 %v3318
    %3569 = vmatpush1.msra.mxu0 %v3317
    %3570 = vmatprep.subr.mxu0 %v3326
    %3571 = vmatpush1.msra.mxu0 %v3325
    %3572 = vmatprep.subr.mxu0 %v3334
    %3573 = vmatpush1.msra.mxu0 %v3333
    %3574 = vmatprep.subr.mxu0 0.0
    %3575 = vmatpush1.msra.mxu0 0.0
    %3576 = vmatprep.subr.mxu0 0.0
    %3577 = vmatpush1.msra.mxu0 0.0
    %3578 = vmatprep.subr.mxu0 0.0
    %3579 = vmatpush1.msra.mxu0 0.0
    %3580 = vmatprep.subr.mxu0 0.0
    %3581 = vmatpush1.msra.mxu0 0.0
    %3582 = vmatprep.subr.mxu0 0.0
    %3583 = vmatpush1.msra.mxu0 0.0
    %3584 = vmatprep.subr.mxu0 0.0
    %3585 = vmatpush1.msra.mxu0 0.0
    %3586 = vmatprep.subr.mxu0 0.0
    %3587 = vmatpush1.msra.mxu0 0.0
    %3588 = vmatprep.subr.mxu0 0.0
    %3589 = vmatpush1.msra.mxu0 0.0
    %3590 = vmatprep.subr.mxu0 0.0
    %3591 = vmatpush1.msra.mxu0 0.0
    %3592 = vmatprep.subr.mxu0 0.0
    %3593 = vmatpush1.msra.mxu0 0.0
    %3594 = vmatprep.subr.mxu0 0.0
    %3595 = vmatpush1.msra.mxu0 0.0
    %3596 = vmatprep.subr.mxu0 0.0
    %3597 = vmatpush1.msra.mxu0 0.0
    %3598 = vmatprep.subr.mxu0 0.0
    %3599 = vmatpush1.msra.mxu0 0.0
    %3600 = vmatprep.subr.mxu0 0.0
    %3601 = vmatpush1.msra.mxu0 0.0
    %3602 = vmatprep.subr.mxu0 0.0
    %3603 = vmatpush1.msra.mxu0 0.0
    %3604 = vmatprep.subr.mxu0 0.0
    %3605 = vmatpush1.msra.mxu0 0.0
    %3606 = vmatprep.subr.mxu0 0.0
    %3607 = vmatpush1.msra.mxu0 0.0
    %3608 = vmatprep.subr.mxu0 0.0
    %3609 = vmatpush1.msra.mxu0 0.0
    %3610 = vmatprep.subr.mxu0 0.0
    %3611 = vmatpush1.msra.mxu0 0.0
    %3612 = vmatprep.subr.mxu0 0.0
    %3613 = vmatpush1.msra.mxu0 0.0
    %3614 = vmatprep.subr.mxu0 0.0
    %3615 = vmatpush1.msra.mxu0 0.0
    %3616 = vmatprep.subr.mxu0 0.0
    %3617 = vmatpush1.msra.mxu0 0.0
    %3618 = vmatprep.subr.mxu0 0.0
    %3619 = vmatpush1.msra.mxu0 0.0
    %3620 = vmatprep.subr.mxu0 0.0
    %3621 = vmatpush1.msra.mxu0 0.0
    %3622 = vmatprep.mubr.f32.mxu0 0.0
    %3623 = vmatmul.mubr.f32.gmra.mrb[0].mxu0 %v3343
    %v3624 = vpop.f32.mrb[0].mxu0
    %v3625 = vadd.f32 %v3340, %v3624
    %v3626 = vpop.f32.mrb[0].mxu0
    %v3627 = vadd.f32 %v3340, %v3626
    %3628 = vdwg.mxu0
    %v3637 = vcombine.low %v3412, %v3414
    %v3638 = vcombine.low %v3483, %v3485
    %v3640 = vunpack.c.l.s4 1983009808
    %v3641 = vunpack.c.0.s8 %v3640
    %v3642 = vlaneseq
    %v3643 = vshrl.u32 %v3642, 7
    %v3644 = vsub.s32 %v3641, %v3643
    %v3645 = vrot.slane %v3637, %v3644
    %v3647 = vunpack.c.l.s4 1983009808
    %v3648 = vunpack.c.0.s8 %v3647
    %v3649 = vlaneseq
    %v3650 = vshrl.u32 %v3649, 7
    %v3651 = vsub.s32 %v3648, %v3650
    %v3652 = vrot.slane %v3638, %v3651
    %v3653 = vcombine.low %v3645, %v3652
    %v3654 = vcombine.low %v3554, %v3556
    %v3655 = vcombine.low %v3625, %v3627
    %v3657 = vunpack.c.l.s4 1983009808
    %v3658 = vunpack.c.0.s8 %v3657
    %v3659 = vlaneseq
    %v3660 = vshrl.u32 %v3659, 7
    %v3661 = vsub.s32 %v3658, %v3660
    %v3662 = vrot.slane %v3654, %v3661
    %v3664 = vunpack.c.l.s4 1983009808
    %v3665 = vunpack.c.0.s8 %v3664
    %v3666 = vlaneseq
    %v3667 = vshrl.u32 %v3666, 7
    %v3668 = vsub.s32 %v3665, %v3667
    %v3669 = vrot.slane %v3655, %v3668
    %v3670 = vcombine.low %v3662, %v3669
    %3673 = vst [vmem:[#allocation16] sm:$0xff] %v3653
    %3674 = vst [vmem:[#allocation16 + $0x8] sm:$0xff] %v3670
    // Predicated region
    $region66: #{modified_mlp_forward.1} parent=1 // pred_check
      _
    $region67: #{modified_mlp_forward.1} parent=1 // pred_check_branch
      %3676 = sbr.rel (0) target = $region69
    $region68: #{modified_mlp_forward.1} parent=1 // pred_region
      %s3678 = ssub.s32 256, 256
      %3679 = vsyncadd [#allocation4], %s3678
      %s3681 = sshll.u32 [#allocation16], 4
      %s3682 = int_to_ptr.vmem [resolvable:$true] %s3681
      %3684 = dma.vmem_to_hbm [thread:$0]  %s3682, 256, %s8, [#allocation4]
    $region69: #{modified_mlp_forward.1} parent=1 // pred_fallthru
      _
    // Predicated region
    $region70: #{modified_mlp_forward.1} parent=1 // pred_check
      _
    $region71: #{modified_mlp_forward.1} parent=1 // pred_check_branch
      %3686 = sbr.rel (0) target = $region73
    $region72: #{modified_mlp_forward.1} parent=1 // pred_region
      %3687 = dma.done [#allocation4], 256
    $region73: #{modified_mlp_forward.1} parent=1 // pred_fallthru
      _
    %3688 = vsyncpa [#allocation3], 1
    %3689 = vsyncpa [#allocation6], 1
    %3690 = vsyncpa [#allocation9], 1
    %3691 = vsyncpa [#allocation12], 1
    %3692 = vsyncpa [#allocation15], 1
    %3693 = vsyncpa [#allocation4], 1

</llo_original>
